<compile_context>
chip_gen: v7x
topology: tpu7x:2x2x1
jax: 0.10.0
libtpu: 0.0.40
codegen_flags: <defaults>
</compile_context>

<pallas_src>
import jax
import jax.numpy as jnp
from jax.experimental import pallas as pl
from jax.experimental.pallas import tpu as pltpu

EPS = 1e-5  # PyTorch BatchNorm2d default eps


# --------------------------------------------------------------------------------------
# Small host-side helpers
# --------------------------------------------------------------------------------------
def _vmem_limit_bytes():
    """~3/4 of physical VMEM, capped at 96 MiB (v5e/v6e: 96 MiB, v7x: 48 MiB)."""
    try:
        cap = pltpu.get_tpu_info().vmem_capacity_bytes
    except Exception:
        cap = 64 * 1024 * 1024
    return int(min(96 * 1024 * 1024, max(32 * 1024 * 1024, (cap * 3) // 4)))


def _pick_batch_block(n, per_image_bytes, target_bytes=2 * 1024 * 1024):
    """Largest divisor of n whose per-step block footprint is ~target_bytes."""
    b = int(max(1, min(n, target_bytes // max(per_image_bytes, 1))))
    while n % b:
        b -= 1
    return b


# --------------------------------------------------------------------------------------
# In-kernel helpers
# --------------------------------------------------------------------------------------
def _zero_halo_border(pad_ref):
    """Zero only the four 1-px border strips; the interior is fully overwritten each step."""
    b, hp, wp, c = pad_ref.shape
    zrow = jnp.zeros((b, 1, wp, c), pad_ref.dtype)
    zcol = jnp.zeros((b, hp, 1, c), pad_ref.dtype)
    pad_ref[:, 0:1, :, :] = zrow
    pad_ref[:, hp - 1:hp, :, :] = zrow
    pad_ref[:, :, 0:1, :] = zcol
    pad_ref[:, :, wp - 1:wp, :] = zcol


def _conv3x3_taps(pad_ref, w_ref):
    """3x3 / pad=1 conv of a block of B images as 9 accumulated MXU matmuls.

    pad_ref: (B, Ho+2, Wo+2, C) bf16 halo scratch (interior already written).
    w_ref:   (9, C, Cout) bf16 weights (tap-major, HWIO flattened).
    Returns  (B*Ho*Wo, Cout) f32 pre-BN accumulator.
    """
    b, hp, wp, c = pad_ref.shape
    ho, wo = hp - 2, wp - 2
    m = b * ho * wo
    cout = w_ref.shape[2]
    acc = jnp.zeros((m, cout), jnp.float32)
    for t in range(9):                                  # static, unrolled at trace time
        ky, kx = t // 3, t % 3
        tap = pad_ref[:, ky:ky + ho, kx:kx + wo, :].reshape(m, c)
        acc = acc + jnp.dot(tap, w_ref[t], preferred_element_type=jnp.float32)
    return acc


def _write_stats(acc, stats_ref):
    """Partial BatchNorm statistics for this block: row 0 = sum, row 1 = sum of squares."""
    stats_ref[:, 0:1, :] = jnp.sum(acc, axis=0, keepdims=True)[None]
    stats_ref[:, 1:2, :] = jnp.sum(acc * acc, axis=0, keepdims=True)[None]


# --------------------------------------------------------------------------------------
# Kernels (grid = (N // B,), B images per grid step, batch axis "parallel")
# --------------------------------------------------------------------------------------
def pool_conv1_kernel(x_ref, w_ref, y_ref, stats_ref, pad_ref):
    # x_ref: (B, Ho, 2, Wo, 2*Cin) bf16 -- 2x2 pool window exposed via metadata-only reshape,
    # so the last two dims stay (W, C)-dense during the pooling adds.
    cin = pad_ref.shape[3]
    _, hp, wp, _ = pad_ref.shape
    ho, wo = hp - 2, wp - 2
    a = x_ref[:, :, 0, :, :].astype(jnp.float32) + x_ref[:, :, 1, :, :].astype(jnp.float32)
    pooled = (a[..., :cin] + a[..., cin:]) * 0.25            # (B, Ho, Wo, Cin) f32
    _zero_halo_border(pad_ref)
    pad_ref[:, 1:ho + 1, 1:wo + 1, :] = pooled.astype(pad_ref.dtype)
    acc = _conv3x3_taps(pad_ref, w_ref)                      # (B*Ho*Wo, Cmid) f32, pre-BN
    y_ref[...] = acc
    _write_stats(acc, stats_ref)


def bn_relu_conv2_kernel(y1_ref, s1_ref, t1_ref, w_ref, y2_ref, stats_ref, pad_ref):
    b, hp, wp, cmid = pad_ref.shape
    ho, wo = hp - 2, wp - 2
    # BN1 (batch stats folded into scale/shift in glue) + ReLU, in f32.
    h = jnp.maximum(y1_ref[...] * s1_ref[...] + t1_ref[...], 0.0)   # (B*Ho*Wo, Cmid)
    _zero_halo_border(pad_ref)
    pad_ref[:, 1:ho + 1, 1:wo + 1, :] = h.reshape(b, ho, wo, cmid).astype(pad_ref.dtype)
    acc = _conv3x3_taps(pad_ref, w_ref)                      # (B*Ho*Wo, Cout) f32, pre-BN
    y2_ref[...] = acc
    _write_stats(acc, stats_ref)


# --------------------------------------------------------------------------------------
# Glue
# --------------------------------------------------------------------------------------
def _bn_scale_shift(stats, gamma, beta, count):
    """Reduce per-block partial stats and fold BN into y*scale + shift (f32)."""
    total = jnp.sum(stats[:, 0, :], axis=0)
    total_sq = jnp.sum(stats[:, 1, :], axis=0)
    mean = total / count
    var = total_sq / count - mean * mean        # biased variance (training-mode BN)
    scale = gamma * jax.lax.rsqrt(var + EPS)
    shift = beta - mean * scale
    return scale, shift


def down_pallas(x_nchw, params):
    """Down.forward. x_nchw: (N, Cin, H, W) f32 -> (N, Cout, H/2, W/2) f32."""
    w1, b1, g1, be1, w2, b2, g2, be2 = params
    # b1 / b2 are intentionally unused: under training-mode BatchNorm the conv bias only
    # shifts the batch mean and cancels exactly in (y - mean); variance is unchanged.
    del b1, b2
    N, Cin, H, W = x_nchw.shape
    Ho, Wo = H // 2, W // 2
    Cmid = w1.shape[3]
    Cout = w2.shape[3]
    count = float(N * Ho * Wo)

    # ---- layout plumbing (XLA side; reshapes below are contiguity-preserving) ----
    x6 = jnp.transpose(x_nchw, (0, 2, 3, 1)).astype(jnp.bfloat16).reshape(N, Ho, 2, Wo, 2 * Cin)
    w1t = w1.reshape(9, Cin, Cmid).astype(jnp.bfloat16)      # tap-major (ky*3+kx, Cin, Cmid)
    w2t = w2.reshape(9, Cmid, Cout).astype(jnp.bfloat16)

    # ---- pick how many images per grid step (~1-2 MiB per block footprint) ----
    per_img = max(
        H * W * Cin * 2 + Ho * Wo * Cmid * 4 + (Ho + 2) * (Wo + 2) * Cin * 2,
        Ho * Wo * (Cmid + Cout) * 4 + (Ho + 2) * (Wo + 2) * Cmid * 2)
    B = _pick_batch_block(N, per_img)
    G = N // B
    M = B * Ho * Wo

    cparams = pltpu.CompilerParams(
        dimension_semantics=("parallel",),       # batch-block axis -> both TCs on megacore parts
        vmem_limit_bytes=_vmem_limit_bytes(),
    )

    # TODO(synk): for large images on v7x (64 MiB VMEM) also tile rows with a 1-px halo
    # (second grid axis marked "arbitrary"); batch-only tiling keeps halo handling trivial here.

    # ---- kernel 1: AvgPool2d(2) + Conv1 (pre-BN) + partial BN1 stats ----
    y1, st1 = pl.pallas_call(
        pool_conv1_kernel,
        grid=(G,),
        in_specs=[
            pl.BlockSpec((B, Ho, 2, Wo, 2 * Cin), lambda i: (i, 0, 0, 0, 0)),
            pl.BlockSpec((9, Cin, Cmid), lambda i: (0, 0, 0)),
        ],
        out_specs=[
            pl.BlockSpec((M, Cmid), lambda i: (i, 0)),
            pl.BlockSpec((1, 2, Cmid), lambda i: (i, 0, 0)),
        ],
        out_shape=(
            jax.ShapeDtypeStruct((N * Ho * Wo, Cmid), jnp.float32),
            jax.ShapeDtypeStruct((G, 2, Cmid), jnp.float32),
        ),
        scratch_shapes=[pltpu.VMEM((B, Ho + 2, Wo + 2, Cin), jnp.bfloat16)],
        compiler_params=cparams,
    )(x6, w1t)

    scale1, shift1 = _bn_scale_shift(st1, g1, be1, count)

    # ---- kernel 2: BN1 + ReLU + Conv2 (pre-BN) + partial BN2 stats ----
    y2, st2 = pl.pallas_call(
        bn_relu_conv2_kernel,
        grid=(G,),
        in_specs=[
            pl.BlockSpec((M, Cmid), lambda i: (i, 0)),
            pl.BlockSpec((1, Cmid), lambda i: (0, 0)),
            pl.BlockSpec((1, Cmid), lambda i: (0, 0)),
            pl.BlockSpec((9, Cmid, Cout), lambda i: (0, 0, 0)),
        ],
        out_specs=[
            pl.BlockSpec((M, Cout), lambda i: (i, 0)),
            pl.BlockSpec((1, 2, Cout), lambda i: (i, 0, 0)),
        ],
        out_shape=(
            jax.ShapeDtypeStruct((N * Ho * Wo, Cout), jnp.float32),
            jax.ShapeDtypeStruct((G, 2, Cout), jnp.float32),
        ),
        scratch_shapes=[pltpu.VMEM((B, Ho + 2, Wo + 2, Cmid), jnp.bfloat16)],
        compiler_params=cparams,
    )(y1, scale1.reshape(1, Cmid), shift1.reshape(1, Cmid), w2t)

    scale2, shift2 = _bn_scale_shift(st2, g2, be2, count)

    # ---- BN2 + ReLU: one XLA elementwise, fused into the NCHW transpose ----
    out = jnp.maximum(y2 * scale2[None, :] + shift2[None, :], 0.0)
    out = out.reshape(N, Ho, Wo, Cout)                       # metadata-only
    return jnp.transpose(out, (0, 3, 1, 2))                  # NCHW


# --------------------------------------------------------------------------------------
# Pure-JAX reference (f32, HIGHEST precision; same training-mode BN semantics)
# --------------------------------------------------------------------------------------
def down_ref(x_nchw, params):
    w1, b1, g1, be1, w2, b2, g2, be2 = params
    x = jnp.transpose(x_nchw, (0, 2, 3, 1))
    N, H, W, C = x.shape
    p = x.reshape(N, H // 2, 2, W // 2, 2, C).mean(axis=(2, 4))

    def conv_bn_relu(h, w, b, g, be):
        y = jax.lax.conv_general_dilated(
            h, w, (1, 1), 'SAME',
            dimension_numbers=('NHWC', 'HWIO', 'NHWC'),
            precision=jax.lax.Precision.HIGHEST) + b
        mu = y.mean(axis=(0, 1, 2), keepdims=True)
        var = ((y - mu) ** 2).mean(axis=(0, 1, 2), keepdims=True)
        y = (y - mu) * g / jnp.sqrt(var + EPS) + be
        return jnp.maximum(y, 0.0)

    h = conv_bn_relu(p, w1, b1, g1, be1)
    h = conv_bn_relu(h, w2, b2, g2, be2)
    return jnp.transpose(h, (0, 3, 1, 2))


if __name__ == "__main__":
    N, Cin, H, W = 2, 4, 16, 16
    Cout = 8
    Cmid = Cout  # DoubleConv default: mid_channels = out_channels

    key = jax.random.PRNGKey(0)
    ks = jax.random.split(key, 9)
    x = jax.random.normal(ks[0], (N, Cin, H, W), jnp.float32)

    # Deterministic synthetic parameters (HWIO conv weights; BN affine params).
    w1 = 0.2 * jax.random.normal(ks[1], (3, 3, Cin, Cmid), jnp.float32)
    b1 = 0.1 * jax.random.normal(ks[2], (Cmid,), jnp.float32)
    g1 = 1.0 + 0.1 * jax.random.normal(ks[3], (Cmid,), jnp.float32)
    be1 = 0.1 * jax.random.normal(ks[4], (Cmid,), jnp.float32)
    w2 = 0.2 * jax.random.normal(ks[5], (3, 3, Cmid, Cout), jnp.float32)
    b2 = 0.1 * jax.random.normal(ks[6], (Cout,), jnp.float32)
    g2 = 1.0 + 0.1 * jax.random.normal(ks[7], (Cout,), jnp.float32)
    be2 = 0.1 * jax.random.normal(ks[8], (Cout,), jnp.float32)
    params = (w1, b1, g1, be1, w2, b2, g2, be2)

    out = jax.block_until_ready(jax.jit(down_pallas)(x, params))
    ref = jax.block_until_ready(down_ref(x, params))

    assert out.shape == (N, Cout, H // 2, W // 2), out.shape
    # Tolerance is loosened vs. the f32 HIGHEST-precision reference because the input DMA and
    # both conv matmuls use bf16 (per the perf review); BN statistics stay f32.
    if not jnp.allclose(out, ref, atol=5e-2, rtol=5e-2):
        raise AssertionError(
            f"mismatch vs reference, max abs err = {float(jnp.abs(out - ref).max())}")
    print("KERNEL_OK")
</pallas_src>

<mosaic_0001>
module attributes {stable_mosaic.version = 11 : i64} {
  func.func @bn_relu_conv2_kernel(%arg0: i32, %arg1: memref<128x8xf32, #tpu.memory_space<vmem>>, %arg2: memref<1x8xf32, #tpu.memory_space<vmem>>, %arg3: memref<1x8xf32, #tpu.memory_space<vmem>>, %arg4: memref<9x8x8xbf16, #tpu.memory_space<vmem>>, %arg5: memref<128x8xf32, #tpu.memory_space<vmem>>, %arg6: memref<1x2x8xf32, #tpu.memory_space<vmem>>, %arg7: memref<2x10x10x8xbf16, #tpu.memory_space<vmem>>) attributes {dimension_semantics = [#tpu.dimension_semantics<parallel>], iteration_bounds = array<i64: 1>, scalar_prefetch = 0 : i64, scratch_operands = 1 : i64, tpu.core_type = #tpu.core_type<tc>, window_params = [{transform_indices = @transform_0, window_bounds = array<i64: 128, 8>}, {pipeline_mode = #tpu.pipeline_mode<synchronous>, transform_indices = @transform_1, window_bounds = array<i64: 1, 8>}, {pipeline_mode = #tpu.pipeline_mode<synchronous>, transform_indices = @transform_2, window_bounds = array<i64: 1, 8>}, {pipeline_mode = #tpu.pipeline_mode<synchronous>, transform_indices = @transform_3, window_bounds = array<i64: 9, 8, 8>}, {transform_indices = @transform_4, window_bounds = array<i64: 128, 8>}, {transform_indices = @transform_5, window_bounds = array<i64: 1, 2, 8>}]} {
    %c0 = arith.constant 0 : index
    %c0_0 = arith.constant 0 : index
    %0 = vector.load %arg1[%c0, %c0_0] : memref<128x8xf32, #tpu.memory_space<vmem>>, vector<128x8xf32>
    %c0_1 = arith.constant 0 : index
    %c0_2 = arith.constant 0 : index
    %1 = vector.load %arg2[%c0_1, %c0_2] : memref<1x8xf32, #tpu.memory_space<vmem>>, vector<1x8xf32>
    %2 = vector.broadcast %1 : vector<1x8xf32> to vector<128x8xf32>
    %3 = arith.mulf %0, %2 : vector<128x8xf32>
    %c0_3 = arith.constant 0 : index
    %c0_4 = arith.constant 0 : index
    %4 = vector.load %arg3[%c0_3, %c0_4] : memref<1x8xf32, #tpu.memory_space<vmem>>, vector<1x8xf32>
    %5 = vector.broadcast %4 : vector<1x8xf32> to vector<128x8xf32>
    %6 = arith.addf %3, %5 : vector<128x8xf32>
    %cst = arith.constant 0.000000e+00 : f32
    %7 = vector.broadcast %cst : f32 to vector<128x8xf32>
    %8 = arith.maximumf %6, %7 : vector<128x8xf32>
    %cst_5 = arith.constant 0.000000e+00 : bf16
    %9 = vector.broadcast %cst_5 : bf16 to vector<2x1x10x8xbf16>
    %cst_6 = arith.constant 0.000000e+00 : bf16
    %10 = vector.broadcast %cst_6 : bf16 to vector<2x10x1x8xbf16>
    %c0_7 = arith.constant 0 : index
    %c0_8 = arith.constant 0 : index
    %c0_9 = arith.constant 0 : index
    %c0_10 = arith.constant 0 : index
    %11 = vector.load %arg7[%c0_7, %c0_8, %c0_9, %c0_10] : memref<2x10x10x8xbf16, #tpu.memory_space<vmem>>, vector<2x1x10x8xbf16>
    tpu.vector_store %arg7[%c0_7, %c0_8, %c0_9, %c0_10], %9 {strides = array<i32>} : memref<2x10x10x8xbf16, #tpu.memory_space<vmem>>, vector<2x1x10x8xbf16>,
    %c0_11 = arith.constant 0 : index
    %c9 = arith.constant 9 : index
    %c0_12 = arith.constant 0 : index
    %c0_13 = arith.constant 0 : index
    %12 = vector.load %arg7[%c0_11, %c9, %c0_12, %c0_13] : memref<2x10x10x8xbf16, #tpu.memory_space<vmem>>, vector<2x1x10x8xbf16>
    tpu.vector_store %arg7[%c0_11, %c9, %c0_12, %c0_13], %9 {strides = array<i32>} : memref<2x10x10x8xbf16, #tpu.memory_space<vmem>>, vector<2x1x10x8xbf16>,
    %c0_14 = arith.constant 0 : index
    %c0_15 = arith.constant 0 : index
    %c0_16 = arith.constant 0 : index
    %c0_17 = arith.constant 0 : index
    %13 = vector.load %arg7[%c0_14, %c0_15, %c0_16, %c0_17] : memref<2x10x10x8xbf16, #tpu.memory_space<vmem>>, vector<2x10x1x8xbf16>
    tpu.vector_store %arg7[%c0_14, %c0_15, %c0_16, %c0_17], %10 {strides = array<i32>} : memref<2x10x10x8xbf16, #tpu.memory_space<vmem>>, vector<2x10x1x8xbf16>,
    %c0_18 = arith.constant 0 : index
    %c0_19 = arith.constant 0 : index
    %c9_20 = arith.constant 9 : index
    %c0_21 = arith.constant 0 : index
    %14 = vector.load %arg7[%c0_18, %c0_19, %c9_20, %c0_21] : memref<2x10x10x8xbf16, #tpu.memory_space<vmem>>, vector<2x10x1x8xbf16>
    tpu.vector_store %arg7[%c0_18, %c0_19, %c9_20, %c0_21], %10 {strides = array<i32>} : memref<2x10x10x8xbf16, #tpu.memory_space<vmem>>, vector<2x10x1x8xbf16>,
    %15 = vector.shape_cast %8 : vector<128x8xf32> to vector<2x8x8x8xf32>
    %16 = arith.truncf %15 : vector<2x8x8x8xf32> to vector<2x8x8x8xbf16>
    %c0_22 = arith.constant 0 : index
    %c1 = arith.constant 1 : index
    %c1_23 = arith.constant 1 : index
    %c0_24 = arith.constant 0 : index
    %17 = vector.load %arg7[%c0_22, %c1, %c1_23, %c0_24] : memref<2x10x10x8xbf16, #tpu.memory_space<vmem>>, vector<2x8x8x8xbf16>
    tpu.vector_store %arg7[%c0_22, %c1, %c1_23, %c0_24], %16 {strides = array<i32>} : memref<2x10x10x8xbf16, #tpu.memory_space<vmem>>, vector<2x8x8x8xbf16>,
    %cst_25 = arith.constant 0.000000e+00 : f32
    %18 = vector.broadcast %cst_25 : f32 to vector<128x8xf32>
    %c0_26 = arith.constant 0 : index
    %c0_27 = arith.constant 0 : index
    %c0_28 = arith.constant 0 : index
    %c0_29 = arith.constant 0 : index
    %19 = vector.load %arg7[%c0_26, %c0_27, %c0_28, %c0_29] : memref<2x10x10x8xbf16, #tpu.memory_space<vmem>>, vector<2x8x8x8xbf16>
    %20 = vector.shape_cast %19 : vector<2x8x8x8xbf16> to vector<128x8xbf16>
    %c0_30 = arith.constant 0 : index
    %c0_31 = arith.constant 0 : index
    %c0_32 = arith.constant 0 : index
    %21 = vector.load %arg4[%c0_30, %c0_31, %c0_32] : memref<9x8x8xbf16, #tpu.memory_space<vmem>>, vector<1x8x8xbf16>
    %22 = vector.shape_cast %21 : vector<1x8x8xbf16> to vector<8x8xbf16>
    %cst_33 = arith.constant dense<0.000000e+00> : vector<128x8xf32>
    %23 = tpu.matmul %20, %22, %cst_33 {dimension_numbers = #tpu.dot_dimension_numbers<[1], [0], [0], [1], [0, 0, 1, 1], [], []>} : vector<128x8xbf16>, vector<8x8xbf16>, vector<128x8xf32> -> vector<128x8xf32>
    %24 = arith.addf %18, %23 : vector<128x8xf32>
    %c0_34 = arith.constant 0 : index
    %c0_35 = arith.constant 0 : index
    %c1_36 = arith.constant 1 : index
    %c0_37 = arith.constant 0 : index
    %25 = vector.load %arg7[%c0_34, %c0_35, %c1_36, %c0_37] : memref<2x10x10x8xbf16, #tpu.memory_space<vmem>>, vector<2x8x8x8xbf16>
    %26 = vector.shape_cast %25 : vector<2x8x8x8xbf16> to vector<128x8xbf16>
    %c1_38 = arith.constant 1 : index
    %c0_39 = arith.constant 0 : index
    %c0_40 = arith.constant 0 : index
    %27 = vector.load %arg4[%c1_38, %c0_39, %c0_40] : memref<9x8x8xbf16, #tpu.memory_space<vmem>>, vector<1x8x8xbf16>
    %28 = vector.shape_cast %27 : vector<1x8x8xbf16> to vector<8x8xbf16>
    %cst_41 = arith.constant dense<0.000000e+00> : vector<128x8xf32>
    %29 = tpu.matmul %26, %28, %cst_41 {dimension_numbers = #tpu.dot_dimension_numbers<[1], [0], [0], [1], [0, 0, 1, 1], [], []>} : vector<128x8xbf16>, vector<8x8xbf16>, vector<128x8xf32> -> vector<128x8xf32>
    %30 = arith.addf %24, %29 : vector<128x8xf32>
    %c0_42 = arith.constant 0 : index
    %c0_43 = arith.constant 0 : index
    %c2 = arith.constant 2 : index
    %c0_44 = arith.constant 0 : index
    %31 = vector.load %arg7[%c0_42, %c0_43, %c2, %c0_44] : memref<2x10x10x8xbf16, #tpu.memory_space<vmem>>, vector<2x8x8x8xbf16>
    %32 = vector.shape_cast %31 : vector<2x8x8x8xbf16> to vector<128x8xbf16>
    %c2_45 = arith.constant 2 : index
    %c0_46 = arith.constant 0 : index
    %c0_47 = arith.constant 0 : index
    %33 = vector.load %arg4[%c2_45, %c0_46, %c0_47] : memref<9x8x8xbf16, #tpu.memory_space<vmem>>, vector<1x8x8xbf16>
    %34 = vector.shape_cast %33 : vector<1x8x8xbf16> to vector<8x8xbf16>
    %cst_48 = arith.constant dense<0.000000e+00> : vector<128x8xf32>
    %35 = tpu.matmul %32, %34, %cst_48 {dimension_numbers = #tpu.dot_dimension_numbers<[1], [0], [0], [1], [0, 0, 1, 1], [], []>} : vector<128x8xbf16>, vector<8x8xbf16>, vector<128x8xf32> -> vector<128x8xf32>
    %36 = arith.addf %30, %35 : vector<128x8xf32>
    %c0_49 = arith.constant 0 : index
    %c1_50 = arith.constant 1 : index
    %c0_51 = arith.constant 0 : index
    %c0_52 = arith.constant 0 : index
    %37 = vector.load %arg7[%c0_49, %c1_50, %c0_51, %c0_52] : memref<2x10x10x8xbf16, #tpu.memory_space<vmem>>, vector<2x8x8x8xbf16>
    %38 = vector.shape_cast %37 : vector<2x8x8x8xbf16> to vector<128x8xbf16>
    %c3 = arith.constant 3 : index
    %c0_53 = arith.constant 0 : index
    %c0_54 = arith.constant 0 : index
    %39 = vector.load %arg4[%c3, %c0_53, %c0_54] : memref<9x8x8xbf16, #tpu.memory_space<vmem>>, vector<1x8x8xbf16>
    %40 = vector.shape_cast %39 : vector<1x8x8xbf16> to vector<8x8xbf16>
    %cst_55 = arith.constant dense<0.000000e+00> : vector<128x8xf32>
    %41 = tpu.matmul %38, %40, %cst_55 {dimension_numbers = #tpu.dot_dimension_numbers<[1], [0], [0], [1], [0, 0, 1, 1], [], []>} : vector<128x8xbf16>, vector<8x8xbf16>, vector<128x8xf32> -> vector<128x8xf32>
    %42 = arith.addf %36, %41 : vector<128x8xf32>
    %c0_56 = arith.constant 0 : index
    %c1_57 = arith.constant 1 : index
    %c1_58 = arith.constant 1 : index
    %c0_59 = arith.constant 0 : index
    %43 = vector.load %arg7[%c0_56, %c1_57, %c1_58, %c0_59] : memref<2x10x10x8xbf16, #tpu.memory_space<vmem>>, vector<2x8x8x8xbf16>
    %44 = vector.shape_cast %43 : vector<2x8x8x8xbf16> to vector<128x8xbf16>
    %c4 = arith.constant 4 : index
    %c0_60 = arith.constant 0 : index
    %c0_61 = arith.constant 0 : index
    %45 = vector.load %arg4[%c4, %c0_60, %c0_61] : memref<9x8x8xbf16, #tpu.memory_space<vmem>>, vector<1x8x8xbf16>
    %46 = vector.shape_cast %45 : vector<1x8x8xbf16> to vector<8x8xbf16>
    %cst_62 = arith.constant dense<0.000000e+00> : vector<128x8xf32>
    %47 = tpu.matmul %44, %46, %cst_62 {dimension_numbers = #tpu.dot_dimension_numbers<[1], [0], [0], [1], [0, 0, 1, 1], [], []>} : vector<128x8xbf16>, vector<8x8xbf16>, vector<128x8xf32> -> vector<128x8xf32>
    %48 = arith.addf %42, %47 : vector<128x8xf32>
    %c0_63 = arith.constant 0 : index
    %c1_64 = arith.constant 1 : index
    %c2_65 = arith.constant 2 : index
    %c0_66 = arith.constant 0 : index
    %49 = vector.load %arg7[%c0_63, %c1_64, %c2_65, %c0_66] : memref<2x10x10x8xbf16, #tpu.memory_space<vmem>>, vector<2x8x8x8xbf16>
    %50 = vector.shape_cast %49 : vector<2x8x8x8xbf16> to vector<128x8xbf16>
    %c5 = arith.constant 5 : index
    %c0_67 = arith.constant 0 : index
    %c0_68 = arith.constant 0 : index
    %51 = vector.load %arg4[%c5, %c0_67, %c0_68] : memref<9x8x8xbf16, #tpu.memory_space<vmem>>, vector<1x8x8xbf16>
    %52 = vector.shape_cast %51 : vector<1x8x8xbf16> to vector<8x8xbf16>
    %cst_69 = arith.constant dense<0.000000e+00> : vector<128x8xf32>
    %53 = tpu.matmul %50, %52, %cst_69 {dimension_numbers = #tpu.dot_dimension_numbers<[1], [0], [0], [1], [0, 0, 1, 1], [], []>} : vector<128x8xbf16>, vector<8x8xbf16>, vector<128x8xf32> -> vector<128x8xf32>
    %54 = arith.addf %48, %53 : vector<128x8xf32>
    %c0_70 = arith.constant 0 : index
    %c2_71 = arith.constant 2 : index
    %c0_72 = arith.constant 0 : index
    %c0_73 = arith.constant 0 : index
    %55 = vector.load %arg7[%c0_70, %c2_71, %c0_72, %c0_73] : memref<2x10x10x8xbf16, #tpu.memory_space<vmem>>, vector<2x8x8x8xbf16>
    %56 = vector.shape_cast %55 : vector<2x8x8x8xbf16> to vector<128x8xbf16>
    %c6 = arith.constant 6 : index
    %c0_74 = arith.constant 0 : index
    %c0_75 = arith.constant 0 : index
    %57 = vector.load %arg4[%c6, %c0_74, %c0_75] : memref<9x8x8xbf16, #tpu.memory_space<vmem>>, vector<1x8x8xbf16>
    %58 = vector.shape_cast %57 : vector<1x8x8xbf16> to vector<8x8xbf16>
    %cst_76 = arith.constant dense<0.000000e+00> : vector<128x8xf32>
    %59 = tpu.matmul %56, %58, %cst_76 {dimension_numbers = #tpu.dot_dimension_numbers<[1], [0], [0], [1], [0, 0, 1, 1], [], []>} : vector<128x8xbf16>, vector<8x8xbf16>, vector<128x8xf32> -> vector<128x8xf32>
    %60 = arith.addf %54, %59 : vector<128x8xf32>
    %c0_77 = arith.constant 0 : index
    %c2_78 = arith.constant 2 : index
    %c1_79 = arith.constant 1 : index
    %c0_80 = arith.constant 0 : index
    %61 = vector.load %arg7[%c0_77, %c2_78, %c1_79, %c0_80] : memref<2x10x10x8xbf16, #tpu.memory_space<vmem>>, vector<2x8x8x8xbf16>
    %62 = vector.shape_cast %61 : vector<2x8x8x8xbf16> to vector<128x8xbf16>
    %c7 = arith.constant 7 : index
    %c0_81 = arith.constant 0 : index
    %c0_82 = arith.constant 0 : index
    %63 = vector.load %arg4[%c7, %c0_81, %c0_82] : memref<9x8x8xbf16, #tpu.memory_space<vmem>>, vector<1x8x8xbf16>
    %64 = vector.shape_cast %63 : vector<1x8x8xbf16> to vector<8x8xbf16>
    %cst_83 = arith.constant dense<0.000000e+00> : vector<128x8xf32>
    %65 = tpu.matmul %62, %64, %cst_83 {dimension_numbers = #tpu.dot_dimension_numbers<[1], [0], [0], [1], [0, 0, 1, 1], [], []>} : vector<128x8xbf16>, vector<8x8xbf16>, vector<128x8xf32> -> vector<128x8xf32>
    %66 = arith.addf %60, %65 : vector<128x8xf32>
    %c0_84 = arith.constant 0 : index
    %c2_85 = arith.constant 2 : index
    %c2_86 = arith.constant 2 : index
    %c0_87 = arith.constant 0 : index
    %67 = vector.load %arg7[%c0_84, %c2_85, %c2_86, %c0_87] : memref<2x10x10x8xbf16, #tpu.memory_space<vmem>>, vector<2x8x8x8xbf16>
    %68 = vector.shape_cast %67 : vector<2x8x8x8xbf16> to vector<128x8xbf16>
    %c8 = arith.constant 8 : index
    %c0_88 = arith.constant 0 : index
    %c0_89 = arith.constant 0 : index
    %69 = vector.load %arg4[%c8, %c0_88, %c0_89] : memref<9x8x8xbf16, #tpu.memory_space<vmem>>, vector<1x8x8xbf16>
    %70 = vector.shape_cast %69 : vector<1x8x8xbf16> to vector<8x8xbf16>
    %cst_90 = arith.constant dense<0.000000e+00> : vector<128x8xf32>
    %71 = tpu.matmul %68, %70, %cst_90 {dimension_numbers = #tpu.dot_dimension_numbers<[1], [0], [0], [1], [0, 0, 1, 1], [], []>} : vector<128x8xbf16>, vector<8x8xbf16>, vector<128x8xf32> -> vector<128x8xf32>
    %72 = arith.addf %66, %71 : vector<128x8xf32>
    %c0_91 = arith.constant 0 : index
    %c0_92 = arith.constant 0 : index
    %73 = vector.load %arg5[%c0_91, %c0_92] : memref<128x8xf32, #tpu.memory_space<vmem>>, vector<128x8xf32>
    tpu.vector_store %arg5[%c0_91, %c0_92], %72 {strides = array<i32>} : memref<128x8xf32, #tpu.memory_space<vmem>>, vector<128x8xf32>,
    %cst_93 = arith.constant dense<0.000000e+00> : vector<8xf32>
    %74 = vector.multi_reduction <add>, %72, %cst_93 [0] : vector<128x8xf32> to vector<8xf32>
    %75 = vector.shape_cast %74 : vector<8xf32> to vector<1x8xf32>
    %76 = vector.shape_cast %75 : vector<1x8xf32> to vector<1x1x8xf32>
    %c0_94 = arith.constant 0 : index
    %c0_95 = arith.constant 0 : index
    %c0_96 = arith.constant 0 : index
    %77 = vector.load %arg6[%c0_94, %c0_95, %c0_96] : memref<1x2x8xf32, #tpu.memory_space<vmem>>, vector<1x1x8xf32>
    tpu.vector_store %arg6[%c0_94, %c0_95, %c0_96], %76 {strides = array<i32>} : memref<1x2x8xf32, #tpu.memory_space<vmem>>, vector<1x1x8xf32>,
    %78 = arith.mulf %72, %72 : vector<128x8xf32>
    %cst_97 = arith.constant dense<0.000000e+00> : vector<8xf32>
    %79 = vector.multi_reduction <add>, %78, %cst_97 [0] : vector<128x8xf32> to vector<8xf32>
    %80 = vector.shape_cast %79 : vector<8xf32> to vector<1x8xf32>
    %81 = vector.shape_cast %80 : vector<1x8xf32> to vector<1x1x8xf32>
    %c0_98 = arith.constant 0 : index
    %c1_99 = arith.constant 1 : index
    %c0_100 = arith.constant 0 : index
    %82 = vector.load %arg6[%c0_98, %c1_99, %c0_100] : memref<1x2x8xf32, #tpu.memory_space<vmem>>, vector<1x1x8xf32>
    tpu.vector_store %arg6[%c0_98, %c1_99, %c0_100], %81 {strides = array<i32>} : memref<1x2x8xf32, #tpu.memory_space<vmem>>, vector<1x1x8xf32>,
    return
  }
  func.func @transform_0(%arg0: i32) -> (i32, i32) {
    %c0_i32 = arith.constant 0 : i32
    %c0_i32_0 = arith.constant 0 : i32
    return %arg0, %c0_i32 : i32, i32
  }
  func.func @transform_1(%arg0: i32) -> (i32, i32) {
    %c0_i32 = arith.constant 0 : i32
    %c0_i32_0 = arith.constant 0 : i32
    %c0_i32_1 = arith.constant 0 : i32
    return %c0_i32, %c0_i32_0 : i32, i32
  }
  func.func @transform_2(%arg0: i32) -> (i32, i32) {
    %c0_i32 = arith.constant 0 : i32
    %c0_i32_0 = arith.constant 0 : i32
    %c0_i32_1 = arith.constant 0 : i32
    return %c0_i32, %c0_i32_0 : i32, i32
  }
  func.func @transform_3(%arg0: i32) -> (i32, i32, i32) {
    %c0_i32 = arith.constant 0 : i32
    %c0_i32_0 = arith.constant 0 : i32
    %c0_i32_1 = arith.constant 0 : i32
    %c0_i32_2 = arith.constant 0 : i32
    return %c0_i32, %c0_i32_0, %c0_i32_1 : i32, i32, i32
  }
  func.func @transform_4(%arg0: i32) -> (i32, i32) {
    %c0_i32 = arith.constant 0 : i32
    %c0_i32_0 = arith.constant 0 : i32
    return %arg0, %c0_i32 : i32, i32
  }
  func.func @transform_5(%arg0: i32) -> (i32, i32, i32) {
    %c0_i32 = arith.constant 0 : i32
    %c0_i32_0 = arith.constant 0 : i32
    %c0_i32_1 = arith.constant 0 : i32
    return %arg0, %c0_i32, %c0_i32_0 : i32, i32, i32
  }
}

module attributes {stable_mosaic.version = 11 : i64} {
  func.func @pool_conv1_kernel(%arg0: i32, %arg1: memref<2x8x2x8x8xbf16, #tpu.memory_space<vmem>>, %arg2: memref<9x4x8xbf16, #tpu.memory_space<vmem>>, %arg3: memref<128x8xf32, #tpu.memory_space<vmem>>, %arg4: memref<1x2x8xf32, #tpu.memory_space<vmem>>, %arg5: memref<2x10x10x4xbf16, #tpu.memory_space<vmem>>) attributes {dimension_semantics = [#tpu.dimension_semantics<parallel>], iteration_bounds = array<i64: 1>, scalar_prefetch = 0 : i64, scratch_operands = 1 : i64, tpu.core_type = #tpu.core_type<tc>, window_params = [{transform_indices = @transform_0, window_bounds = array<i64: 2, 8, 2, 8, 8>}, {pipeline_mode = #tpu.pipeline_mode<synchronous>, transform_indices = @transform_1, window_bounds = array<i64: 9, 4, 8>}, {transform_indices = @transform_2, window_bounds = array<i64: 128, 8>}, {transform_indices = @transform_3, window_bounds = array<i64: 1, 2, 8>}]} {
    %c0 = arith.constant 0 : index
    %c0_0 = arith.constant 0 : index
    %c0_1 = arith.constant 0 : index
    %c0_2 = arith.constant 0 : index
    %c0_3 = arith.constant 0 : index
    %0 = vector.load %arg1[%c0, %c0_0, %c0_1, %c0_2, %c0_3] : memref<2x8x2x8x8xbf16, #tpu.memory_space<vmem>>, vector<2x8x1x8x8xbf16>
    %1 = vector.shape_cast %0 : vector<2x8x1x8x8xbf16> to vector<2x8x8x8xbf16>
    %2 = arith.extf %1 : vector<2x8x8x8xbf16> to vector<2x8x8x8xf32>
    %c0_4 = arith.constant 0 : index
    %c0_5 = arith.constant 0 : index
    %c1 = arith.constant 1 : index
    %c0_6 = arith.constant 0 : index
    %c0_7 = arith.constant 0 : index
    %3 = vector.load %arg1[%c0_4, %c0_5, %c1, %c0_6, %c0_7] : memref<2x8x2x8x8xbf16, #tpu.memory_space<vmem>>, vector<2x8x1x8x8xbf16>
    %4 = vector.shape_cast %3 : vector<2x8x1x8x8xbf16> to vector<2x8x8x8xbf16>
    %5 = arith.extf %4 : vector<2x8x8x8xbf16> to vector<2x8x8x8xf32>
    %6 = arith.addf %2, %5 : vector<2x8x8x8xf32>
    %7 = vector.extract_strided_slice %6 {offsets = [0, 0, 0, 0], sizes = [2, 8, 8, 4], strides = [1, 1, 1, 1]} : vector<2x8x8x8xf32> to vector<2x8x8x4xf32>
    %8 = vector.extract_strided_slice %6 {offsets = [0, 0, 0, 4], sizes = [2, 8, 8, 4], strides = [1, 1, 1, 1]} : vector<2x8x8x8xf32> to vector<2x8x8x4xf32>
    %9 = arith.addf %7, %8 : vector<2x8x8x4xf32>
    %cst = arith.constant 2.500000e-01 : f32
    %10 = vector.broadcast %cst : f32 to vector<2x8x8x4xf32>
    %11 = arith.mulf %9, %10 : vector<2x8x8x4xf32>
    %cst_8 = arith.constant 0.000000e+00 : bf16
    %12 = vector.broadcast %cst_8 : bf16 to vector<2x1x10x4xbf16>
    %cst_9 = arith.constant 0.000000e+00 : bf16
    %13 = vector.broadcast %cst_9 : bf16 to vector<2x10x1x4xbf16>
    %c0_10 = arith.constant 0 : index
    %c0_11 = arith.constant 0 : index
    %c0_12 = arith.constant 0 : index
    %c0_13 = arith.constant 0 : index
    %14 = vector.load %arg5[%c0_10, %c0_11, %c0_12, %c0_13] : memref<2x10x10x4xbf16, #tpu.memory_space<vmem>>, vector<2x1x10x4xbf16>
    tpu.vector_store %arg5[%c0_10, %c0_11, %c0_12, %c0_13], %12 {strides = array<i32>} : memref<2x10x10x4xbf16, #tpu.memory_space<vmem>>, vector<2x1x10x4xbf16>,
    %c0_14 = arith.constant 0 : index
    %c9 = arith.constant 9 : index
    %c0_15 = arith.constant 0 : index
    %c0_16 = arith.constant 0 : index
    %15 = vector.load %arg5[%c0_14, %c9, %c0_15, %c0_16] : memref<2x10x10x4xbf16, #tpu.memory_space<vmem>>, vector<2x1x10x4xbf16>
    tpu.vector_store %arg5[%c0_14, %c9, %c0_15, %c0_16], %12 {strides = array<i32>} : memref<2x10x10x4xbf16, #tpu.memory_space<vmem>>, vector<2x1x10x4xbf16>,
    %c0_17 = arith.constant 0 : index
    %c0_18 = arith.constant 0 : index
    %c0_19 = arith.constant 0 : index
    %c0_20 = arith.constant 0 : index
    %16 = vector.load %arg5[%c0_17, %c0_18, %c0_19, %c0_20] : memref<2x10x10x4xbf16, #tpu.memory_space<vmem>>, vector<2x10x1x4xbf16>
    tpu.vector_store %arg5[%c0_17, %c0_18, %c0_19, %c0_20], %13 {strides = array<i32>} : memref<2x10x10x4xbf16, #tpu.memory_space<vmem>>, vector<2x10x1x4xbf16>,
    %c0_21 = arith.constant 0 : index
    %c0_22 = arith.constant 0 : index
    %c9_23 = arith.constant 9 : index
    %c0_24 = arith.constant 0 : index
    %17 = vector.load %arg5[%c0_21, %c0_22, %c9_23, %c0_24] : memref<2x10x10x4xbf16, #tpu.memory_space<vmem>>, vector<2x10x1x4xbf16>
    tpu.vector_store %arg5[%c0_21, %c0_22, %c9_23, %c0_24], %13 {strides = array<i32>} : memref<2x10x10x4xbf16, #tpu.memory_space<vmem>>, vector<2x10x1x4xbf16>,
    %18 = arith.truncf %11 : vector<2x8x8x4xf32> to vector<2x8x8x4xbf16>
    %c0_25 = arith.constant 0 : index
    %c1_26 = arith.constant 1 : index
    %c1_27 = arith.constant 1 : index
    %c0_28 = arith.constant 0 : index
    %19 = vector.load %arg5[%c0_25, %c1_26, %c1_27, %c0_28] : memref<2x10x10x4xbf16, #tpu.memory_space<vmem>>, vector<2x8x8x4xbf16>
    tpu.vector_store %arg5[%c0_25, %c1_26, %c1_27, %c0_28], %18 {strides = array<i32>} : memref<2x10x10x4xbf16, #tpu.memory_space<vmem>>, vector<2x8x8x4xbf16>,
    %cst_29 = arith.constant 0.000000e+00 : f32
    %20 = vector.broadcast %cst_29 : f32 to vector<128x8xf32>
    %c0_30 = arith.constant 0 : index
    %c0_31 = arith.constant 0 : index
    %c0_32 = arith.constant 0 : index
    %c0_33 = arith.constant 0 : index
    %21 = vector.load %arg5[%c0_30, %c0_31, %c0_32, %c0_33] : memref<2x10x10x4xbf16, #tpu.memory_space<vmem>>, vector<2x8x8x4xbf16>
    %22 = vector.shape_cast %21 : vector<2x8x8x4xbf16> to vector<128x4xbf16>
    %c0_34 = arith.constant 0 : index
    %c0_35 = arith.constant 0 : index
    %c0_36 = arith.constant 0 : index
    %23 = vector.load %arg2[%c0_34, %c0_35, %c0_36] : memref<9x4x8xbf16, #tpu.memory_space<vmem>>, vector<1x4x8xbf16>
    %24 = vector.shape_cast %23 : vector<1x4x8xbf16> to vector<4x8xbf16>
    %cst_37 = arith.constant dense<0.000000e+00> : vector<128x8xf32>
    %25 = tpu.matmul %22, %24, %cst_37 {dimension_numbers = #tpu.dot_dimension_numbers<[1], [0], [0], [1], [0, 0, 1, 1], [], []>} : vector<128x4xbf16>, vector<4x8xbf16>, vector<128x8xf32> -> vector<128x8xf32>
    %26 = arith.addf %20, %25 : vector<128x8xf32>
    %c0_38 = arith.constant 0 : index
    %c0_39 = arith.constant 0 : index
    %c1_40 = arith.constant 1 : index
    %c0_41 = arith.constant 0 : index
    %27 = vector.load %arg5[%c0_38, %c0_39, %c1_40, %c0_41] : memref<2x10x10x4xbf16, #tpu.memory_space<vmem>>, vector<2x8x8x4xbf16>
    %28 = vector.shape_cast %27 : vector<2x8x8x4xbf16> to vector<128x4xbf16>
    %c1_42 = arith.constant 1 : index
    %c0_43 = arith.constant 0 : index
    %c0_44 = arith.constant 0 : index
    %29 = vector.load %arg2[%c1_42, %c0_43, %c0_44] : memref<9x4x8xbf16, #tpu.memory_space<vmem>>, vector<1x4x8xbf16>
    %30 = vector.shape_cast %29 : vector<1x4x8xbf16> to vector<4x8xbf16>
    %cst_45 = arith.constant dense<0.000000e+00> : vector<128x8xf32>
    %31 = tpu.matmul %28, %30, %cst_45 {dimension_numbers = #tpu.dot_dimension_numbers<[1], [0], [0], [1], [0, 0, 1, 1], [], []>} : vector<128x4xbf16>, vector<4x8xbf16>, vector<128x8xf32> -> vector<128x8xf32>
    %32 = arith.addf %26, %31 : vector<128x8xf32>
    %c0_46 = arith.constant 0 : index
    %c0_47 = arith.constant 0 : index
    %c2 = arith.constant 2 : index
    %c0_48 = arith.constant 0 : index
    %33 = vector.load %arg5[%c0_46, %c0_47, %c2, %c0_48] : memref<2x10x10x4xbf16, #tpu.memory_space<vmem>>, vector<2x8x8x4xbf16>
    %34 = vector.shape_cast %33 : vector<2x8x8x4xbf16> to vector<128x4xbf16>
    %c2_49 = arith.constant 2 : index
    %c0_50 = arith.constant 0 : index
    %c0_51 = arith.constant 0 : index
    %35 = vector.load %arg2[%c2_49, %c0_50, %c0_51] : memref<9x4x8xbf16, #tpu.memory_space<vmem>>, vector<1x4x8xbf16>
    %36 = vector.shape_cast %35 : vector<1x4x8xbf16> to vector<4x8xbf16>
    %cst_52 = arith.constant dense<0.000000e+00> : vector<128x8xf32>
    %37 = tpu.matmul %34, %36, %cst_52 {dimension_numbers = #tpu.dot_dimension_numbers<[1], [0], [0], [1], [0, 0, 1, 1], [], []>} : vector<128x4xbf16>, vector<4x8xbf16>, vector<128x8xf32> -> vector<128x8xf32>
    %38 = arith.addf %32, %37 : vector<128x8xf32>
    %c0_53 = arith.constant 0 : index
    %c1_54 = arith.constant 1 : index
    %c0_55 = arith.constant 0 : index
    %c0_56 = arith.constant 0 : index
    %39 = vector.load %arg5[%c0_53, %c1_54, %c0_55, %c0_56] : memref<2x10x10x4xbf16, #tpu.memory_space<vmem>>, vector<2x8x8x4xbf16>
    %40 = vector.shape_cast %39 : vector<2x8x8x4xbf16> to vector<128x4xbf16>
    %c3 = arith.constant 3 : index
    %c0_57 = arith.constant 0 : index
    %c0_58 = arith.constant 0 : index
    %41 = vector.load %arg2[%c3, %c0_57, %c0_58] : memref<9x4x8xbf16, #tpu.memory_space<vmem>>, vector<1x4x8xbf16>
    %42 = vector.shape_cast %41 : vector<1x4x8xbf16> to vector<4x8xbf16>
    %cst_59 = arith.constant dense<0.000000e+00> : vector<128x8xf32>
    %43 = tpu.matmul %40, %42, %cst_59 {dimension_numbers = #tpu.dot_dimension_numbers<[1], [0], [0], [1], [0, 0, 1, 1], [], []>} : vector<128x4xbf16>, vector<4x8xbf16>, vector<128x8xf32> -> vector<128x8xf32>
    %44 = arith.addf %38, %43 : vector<128x8xf32>
    %c0_60 = arith.constant 0 : index
    %c1_61 = arith.constant 1 : index
    %c1_62 = arith.constant 1 : index
    %c0_63 = arith.constant 0 : index
    %45 = vector.load %arg5[%c0_60, %c1_61, %c1_62, %c0_63] : memref<2x10x10x4xbf16, #tpu.memory_space<vmem>>, vector<2x8x8x4xbf16>
    %46 = vector.shape_cast %45 : vector<2x8x8x4xbf16> to vector<128x4xbf16>
    %c4 = arith.constant 4 : index
    %c0_64 = arith.constant 0 : index
    %c0_65 = arith.constant 0 : index
    %47 = vector.load %arg2[%c4, %c0_64, %c0_65] : memref<9x4x8xbf16, #tpu.memory_space<vmem>>, vector<1x4x8xbf16>
    %48 = vector.shape_cast %47 : vector<1x4x8xbf16> to vector<4x8xbf16>
    %cst_66 = arith.constant dense<0.000000e+00> : vector<128x8xf32>
    %49 = tpu.matmul %46, %48, %cst_66 {dimension_numbers = #tpu.dot_dimension_numbers<[1], [0], [0], [1], [0, 0, 1, 1], [], []>} : vector<128x4xbf16>, vector<4x8xbf16>, vector<128x8xf32> -> vector<128x8xf32>
    %50 = arith.addf %44, %49 : vector<128x8xf32>
    %c0_67 = arith.constant 0 : index
    %c1_68 = arith.constant 1 : index
    %c2_69 = arith.constant 2 : index
    %c0_70 = arith.constant 0 : index
    %51 = vector.load %arg5[%c0_67, %c1_68, %c2_69, %c0_70] : memref<2x10x10x4xbf16, #tpu.memory_space<vmem>>, vector<2x8x8x4xbf16>
    %52 = vector.shape_cast %51 : vector<2x8x8x4xbf16> to vector<128x4xbf16>
    %c5 = arith.constant 5 : index
    %c0_71 = arith.constant 0 : index
    %c0_72 = arith.constant 0 : index
    %53 = vector.load %arg2[%c5, %c0_71, %c0_72] : memref<9x4x8xbf16, #tpu.memory_space<vmem>>, vector<1x4x8xbf16>
    %54 = vector.shape_cast %53 : vector<1x4x8xbf16> to vector<4x8xbf16>
    %cst_73 = arith.constant dense<0.000000e+00> : vector<128x8xf32>
    %55 = tpu.matmul %52, %54, %cst_73 {dimension_numbers = #tpu.dot_dimension_numbers<[1], [0], [0], [1], [0, 0, 1, 1], [], []>} : vector<128x4xbf16>, vector<4x8xbf16>, vector<128x8xf32> -> vector<128x8xf32>
    %56 = arith.addf %50, %55 : vector<128x8xf32>
    %c0_74 = arith.constant 0 : index
    %c2_75 = arith.constant 2 : index
    %c0_76 = arith.constant 0 : index
    %c0_77 = arith.constant 0 : index
    %57 = vector.load %arg5[%c0_74, %c2_75, %c0_76, %c0_77] : memref<2x10x10x4xbf16, #tpu.memory_space<vmem>>, vector<2x8x8x4xbf16>
    %58 = vector.shape_cast %57 : vector<2x8x8x4xbf16> to vector<128x4xbf16>
    %c6 = arith.constant 6 : index
    %c0_78 = arith.constant 0 : index
    %c0_79 = arith.constant 0 : index
    %59 = vector.load %arg2[%c6, %c0_78, %c0_79] : memref<9x4x8xbf16, #tpu.memory_space<vmem>>, vector<1x4x8xbf16>
    %60 = vector.shape_cast %59 : vector<1x4x8xbf16> to vector<4x8xbf16>
    %cst_80 = arith.constant dense<0.000000e+00> : vector<128x8xf32>
    %61 = tpu.matmul %58, %60, %cst_80 {dimension_numbers = #tpu.dot_dimension_numbers<[1], [0], [0], [1], [0, 0, 1, 1], [], []>} : vector<128x4xbf16>, vector<4x8xbf16>, vector<128x8xf32> -> vector<128x8xf32>
    %62 = arith.addf %56, %61 : vector<128x8xf32>
    %c0_81 = arith.constant 0 : index
    %c2_82 = arith.constant 2 : index
    %c1_83 = arith.constant 1 : index
    %c0_84 = arith.constant 0 : index
    %63 = vector.load %arg5[%c0_81, %c2_82, %c1_83, %c0_84] : memref<2x10x10x4xbf16, #tpu.memory_space<vmem>>, vector<2x8x8x4xbf16>
    %64 = vector.shape_cast %63 : vector<2x8x8x4xbf16> to vector<128x4xbf16>
    %c7 = arith.constant 7 : index
    %c0_85 = arith.constant 0 : index
    %c0_86 = arith.constant 0 : index
    %65 = vector.load %arg2[%c7, %c0_85, %c0_86] : memref<9x4x8xbf16, #tpu.memory_space<vmem>>, vector<1x4x8xbf16>
    %66 = vector.shape_cast %65 : vector<1x4x8xbf16> to vector<4x8xbf16>
    %cst_87 = arith.constant dense<0.000000e+00> : vector<128x8xf32>
    %67 = tpu.matmul %64, %66, %cst_87 {dimension_numbers = #tpu.dot_dimension_numbers<[1], [0], [0], [1], [0, 0, 1, 1], [], []>} : vector<128x4xbf16>, vector<4x8xbf16>, vector<128x8xf32> -> vector<128x8xf32>
    %68 = arith.addf %62, %67 : vector<128x8xf32>
    %c0_88 = arith.constant 0 : index
    %c2_89 = arith.constant 2 : index
    %c2_90 = arith.constant 2 : index
    %c0_91 = arith.constant 0 : index
    %69 = vector.load %arg5[%c0_88, %c2_89, %c2_90, %c0_91] : memref<2x10x10x4xbf16, #tpu.memory_space<vmem>>, vector<2x8x8x4xbf16>
    %70 = vector.shape_cast %69 : vector<2x8x8x4xbf16> to vector<128x4xbf16>
    %c8 = arith.constant 8 : index
    %c0_92 = arith.constant 0 : index
    %c0_93 = arith.constant 0 : index
    %71 = vector.load %arg2[%c8, %c0_92, %c0_93] : memref<9x4x8xbf16, #tpu.memory_space<vmem>>, vector<1x4x8xbf16>
    %72 = vector.shape_cast %71 : vector<1x4x8xbf16> to vector<4x8xbf16>
    %cst_94 = arith.constant dense<0.000000e+00> : vector<128x8xf32>
    %73 = tpu.matmul %70, %72, %cst_94 {dimension_numbers = #tpu.dot_dimension_numbers<[1], [0], [0], [1], [0, 0, 1, 1], [], []>} : vector<128x4xbf16>, vector<4x8xbf16>, vector<128x8xf32> -> vector<128x8xf32>
    %74 = arith.addf %68, %73 : vector<128x8xf32>
    %c0_95 = arith.constant 0 : index
    %c0_96 = arith.constant 0 : index
    %75 = vector.load %arg3[%c0_95, %c0_96] : memref<128x8xf32, #tpu.memory_space<vmem>>, vector<128x8xf32>
    tpu.vector_store %arg3[%c0_95, %c0_96], %74 {strides = array<i32>} : memref<128x8xf32, #tpu.memory_space<vmem>>, vector<128x8xf32>,
    %cst_97 = arith.constant dense<0.000000e+00> : vector<8xf32>
    %76 = vector.multi_reduction <add>, %74, %cst_97 [0] : vector<128x8xf32> to vector<8xf32>
    %77 = vector.shape_cast %76 : vector<8xf32> to vector<1x8xf32>
    %78 = vector.shape_cast %77 : vector<1x8xf32> to vector<1x1x8xf32>
    %c0_98 = arith.constant 0 : index
    %c0_99 = arith.constant 0 : index
    %c0_100 = arith.constant 0 : index
    %79 = vector.load %arg4[%c0_98, %c0_99, %c0_100] : memref<1x2x8xf32, #tpu.memory_space<vmem>>, vector<1x1x8xf32>
    tpu.vector_store %arg4[%c0_98, %c0_99, %c0_100], %78 {strides = array<i32>} : memref<1x2x8xf32, #tpu.memory_space<vmem>>, vector<1x1x8xf32>,
    %80 = arith.mulf %74, %74 : vector<128x8xf32>
    %cst_101 = arith.constant dense<0.000000e+00> : vector<8xf32>
    %81 = vector.multi_reduction <add>, %80, %cst_101 [0] : vector<128x8xf32> to vector<8xf32>
    %82 = vector.shape_cast %81 : vector<8xf32> to vector<1x8xf32>
    %83 = vector.shape_cast %82 : vector<1x8xf32> to vector<1x1x8xf32>
    %c0_102 = arith.constant 0 : index
    %c1_103 = arith.constant 1 : index
    %c0_104 = arith.constant 0 : index
    %84 = vector.load %arg4[%c0_102, %c1_103, %c0_104] : memref<1x2x8xf32, #tpu.memory_space<vmem>>, vector<1x1x8xf32>
    tpu.vector_store %arg4[%c0_102, %c1_103, %c0_104], %83 {strides = array<i32>} : memref<1x2x8xf32, #tpu.memory_space<vmem>>, vector<1x1x8xf32>,
    return
  }
  func.func @transform_0(%arg0: i32) -> (i32, i32, i32, i32, i32) {
    %c0_i32 = arith.constant 0 : i32
    %c0_i32_0 = arith.constant 0 : i32
    %c0_i32_1 = arith.constant 0 : i32
    %c0_i32_2 = arith.constant 0 : i32
    %c0_i32_3 = arith.constant 0 : i32
    return %arg0, %c0_i32, %c0_i32_0, %c0_i32_1, %c0_i32_2 : i32, i32, i32, i32, i32
  }
  func.func @transform_1(%arg0: i32) -> (i32, i32, i32) {
    %c0_i32 = arith.constant 0 : i32
    %c0_i32_0 = arith.constant 0 : i32
    %c0_i32_1 = arith.constant 0 : i32
    %c0_i32_2 = arith.constant 0 : i32
    return %c0_i32, %c0_i32_0, %c0_i32_1 : i32, i32, i32
  }
  func.func @transform_2(%arg0: i32) -> (i32, i32) {
    %c0_i32 = arith.constant 0 : i32
    %c0_i32_0 = arith.constant 0 : i32
    return %arg0, %c0_i32 : i32, i32
  }
  func.func @transform_3(%arg0: i32) -> (i32, i32, i32) {
    %c0_i32 = arith.constant 0 : i32
    %c0_i32_0 = arith.constant 0 : i32
    %c0_i32_1 = arith.constant 0 : i32
    return %arg0, %c0_i32, %c0_i32_0 : i32, i32, i32
  }
}

</mosaic_0001>

<llo_original>
// kernel: down_pallas.3
$region0: #{down_pallas.3}
  #allocation0 [shape = 'u32[]', space=smem, size = 0x4, offset = 0x4, fixed_abs, tag = 'smem constant byte address 0x4 - core index']
  #allocation1 [shape = 'u32[144,128]{1,0:T(1,128)}', space=vmem, size = 0x12000, scoped, tag = 'internal scratch']
  #allocation2 [shape = 'bf16[2,10,10,8]{3,2,1,0:T(8,128)(2,1)}', space=vmem, size = 0x14000, scoped, tag = 'scratch operand']
  %s0 = inlined_call_operand.vmem [shape: f32[128,8], index: 0, kind: input, shape index: {}]
  %s1 = inlined_call_operand.vmem [shape: f32[1,8], index: 1, kind: input, shape index: {}]
  %s2 = inlined_call_operand.vmem [shape: f32[1,8], index: 2, kind: input, shape index: {}]
  %s3 = inlined_call_operand.vmem [shape: bf16[9,8,8], index: 3, kind: input, shape index: {}]
  %s4 = inlined_call_operand.vmem [shape: f32[128,8], index: 4, kind: output, shape index: {0}]
  %s5 = inlined_call_operand.vmem [shape: f32[1,2,8], index: 5, kind: output, shape index: {1}]
  %6 = xla_tuple %s4, %s5
  %s7 = sld [smem:[#allocation0]]
  $region34: #{down_pallas.3} parent=0
    _
  %s9 = ssub.s32 1, %s7
  %s10 = scalar_select 0, %s9, %s7
  // Predicated region
  $region2: #{down_pallas.3} parent=0 // pred_check
    _
  $region3: #{down_pallas.3} parent=0 // pred_check_branch
    %12 = sbr.rel (0) target = $region5
  $region4: #{down_pallas.3} parent=0 // pred_region
    _
  $region5: #{down_pallas.3} parent=0 // pred_fallthru
    _
  // Predicated region
  $region6: #{down_pallas.3} parent=0 // pred_check
    _
  $region7: #{down_pallas.3} parent=0 // pred_check_branch
    %14 = sbr.rel (0) target = $region9
  $region8: #{down_pallas.3} parent=0 // pred_region
    _
  $region9: #{down_pallas.3} parent=0 // pred_fallthru
    _
  // Predicated region
  $region10: #{down_pallas.3} parent=0 // pred_check
    _
  $region11: #{down_pallas.3} parent=0 // pred_check_branch
    %16 = sbr.rel (0) target = $region13
  $region12: #{down_pallas.3} parent=0 // pred_region
    _
  $region13: #{down_pallas.3} parent=0 // pred_fallthru
    _
  // Predicated region
  $region14: #{down_pallas.3} parent=0 // pred_check
    _
  $region15: #{down_pallas.3} parent=0 // pred_check_branch
    %18 = sbr.rel (0) target = $region17
  $region16: #{down_pallas.3} parent=0 // pred_region
    _
  $region17: #{down_pallas.3} parent=0 // pred_fallthru
    _
  %v20 = vld [vmem:[%s0] sm:$0xff]
  %v21 = vld [vmem:[%s0 + $0x8] sm:$0xff]
  %v22 = vld [vmem:[%s0 + $0x10] sm:$0xff]
  %v23 = vld [vmem:[%s0 + $0x18] sm:$0xff]
  %v24 = vld [vmem:[%s0 + $0x20] sm:$0xff]
  %v25 = vld [vmem:[%s0 + $0x28] sm:$0xff]
  %v26 = vld [vmem:[%s0 + $0x30] sm:$0xff]
  %v27 = vld [vmem:[%s0 + $0x38] sm:$0xff]
  %v28 = vld [vmem:[%s0 + $0x40] sm:$0xff]
  %v29 = vld [vmem:[%s0 + $0x48] sm:$0xff]
  %v30 = vld [vmem:[%s0 + $0x50] sm:$0xff]
  %v31 = vld [vmem:[%s0 + $0x58] sm:$0xff]
  %v32 = vld [vmem:[%s0 + $0x60] sm:$0xff]
  %v33 = vld [vmem:[%s0 + $0x68] sm:$0xff]
  %v34 = vld [vmem:[%s0 + $0x70] sm:$0xff]
  %v35 = vld [vmem:[%s0 + $0x78] sm:$0xff]
  %v36 = vld [vmem:[%s1] sm:$0x1]
  %v38 = vlaneseq
  %v39 = vshrl.u32 %v38, 7
  %v40 = vsub.s32 0, %v39
  %v41 = vrot.slane %v36, %v40
  %v43 = vmul.f32 %v20, %v41
  %v44 = vmul.f32 %v21, %v41
  %v45 = vmul.f32 %v22, %v41
  %v46 = vmul.f32 %v23, %v41
  %v47 = vmul.f32 %v24, %v41
  %v48 = vmul.f32 %v25, %v41
  %v49 = vmul.f32 %v26, %v41
  %v50 = vmul.f32 %v27, %v41
  %v51 = vmul.f32 %v28, %v41
  %v52 = vmul.f32 %v29, %v41
  %v53 = vmul.f32 %v30, %v41
  %v54 = vmul.f32 %v31, %v41
  %v55 = vmul.f32 %v32, %v41
  %v56 = vmul.f32 %v33, %v41
  %v57 = vmul.f32 %v34, %v41
  %v58 = vmul.f32 %v35, %v41
  %v59 = vld [vmem:[%s2] sm:$0x1]
  %v61 = vlaneseq
  %v62 = vshrl.u32 %v61, 7
  %v63 = vsub.s32 0, %v62
  %v64 = vrot.slane %v59, %v63
  %v66 = vadd.f32 %v43, %v64
  %v67 = vadd.f32 %v44, %v64
  %v68 = vadd.f32 %v45, %v64
  %v69 = vadd.f32 %v46, %v64
  %v70 = vadd.f32 %v47, %v64
  %v71 = vadd.f32 %v48, %v64
  %v72 = vadd.f32 %v49, %v64
  %v73 = vadd.f32 %v50, %v64
  %v74 = vadd.f32 %v51, %v64
  %v75 = vadd.f32 %v52, %v64
  %v76 = vadd.f32 %v53, %v64
  %v77 = vadd.f32 %v54, %v64
  %v78 = vadd.f32 %v55, %v64
  %v79 = vadd.f32 %v56, %v64
  %v80 = vadd.f32 %v57, %v64
  %v81 = vadd.f32 %v58, %v64
  %v82 = vmax.f32 %v66, 0.0
  %v83 = vmax.f32 %v67, 0.0
  %v84 = vmax.f32 %v68, 0.0
  %v85 = vmax.f32 %v69, 0.0
  %v86 = vmax.f32 %v70, 0.0
  %v87 = vmax.f32 %v71, 0.0
  %v88 = vmax.f32 %v72, 0.0
  %v89 = vmax.f32 %v73, 0.0
  %v90 = vmax.f32 %v74, 0.0
  %v91 = vmax.f32 %v75, 0.0
  %v92 = vmax.f32 %v76, 0.0
  %v93 = vmax.f32 %v77, 0.0
  %v94 = vmax.f32 %v78, 0.0
  %v95 = vmax.f32 %v79, 0.0
  %v96 = vmax.f32 %v80, 0.0
  %v97 = vmax.f32 %v81, 0.0
  %vm98 = vcmask 60416
  %99 = vst.msk [vmem:[#allocation2] sm:$0xf] %vm98, 0
  %vm100 = vcmask 57344
  %101 = vst.msk [vmem:[#allocation2 + $0x4] sm:$0x1] %vm100, 0
  %102 = vst.msk [vmem:[#allocation2 + $0x50] sm:$0xf] %vm98, 0
  %103 = vst.msk [vmem:[#allocation2 + $0x54] sm:$0x1] %vm100, 0
  %s104 = scalar_lea.vmem [#allocation2], 72
  %105 = vst.msk [vmem:[%s104] sm:$0xf] %vm98, 0
  %106 = vst.msk [vmem:[%s104 + $0x4] sm:$0x1] %vm100, 0
  %107 = vst.msk [vmem:[%s104 + $0x50] sm:$0xf] %vm98, 0
  %108 = vst.msk [vmem:[%s104 + $0x54] sm:$0x1] %vm100, 0
  %vm109 = vcmask 57344
  %vm110 = vsmask.f32 256
  %vm111 = vmand %vm109, %vm110
  %v112 = vld [vmem:[#allocation2] sm:$0x1]
  %v113 = vsel %vm111, 0, %v112
  %114 = vst [vmem:[#allocation2] sm:$0x1] %v113
  %v115 = vld [vmem:[#allocation2 + $0x8] sm:$0x1]
  %v116 = vsel %vm111, 0, %v115
  %117 = vst [vmem:[#allocation2 + $0x8] sm:$0x1] %v116
  %v118 = vld [vmem:[#allocation2 + $0x10] sm:$0x1]
  %v119 = vsel %vm111, 0, %v118
  %120 = vst [vmem:[#allocation2 + $0x10] sm:$0x1] %v119
  %v121 = vld [vmem:[#allocation2 + $0x18] sm:$0x1]
  %v122 = vsel %vm111, 0, %v121
  %123 = vst [vmem:[#allocation2 + $0x18] sm:$0x1] %v122
  %v124 = vld [vmem:[#allocation2 + $0x20] sm:$0x1]
  %v125 = vsel %vm111, 0, %v124
  %126 = vst [vmem:[#allocation2 + $0x20] sm:$0x1] %v125
  %v127 = vld [vmem:[#allocation2 + $0x28] sm:$0x1]
  %v128 = vsel %vm111, 0, %v127
  %129 = vst [vmem:[#allocation2 + $0x28] sm:$0x1] %v128
  %v130 = vld [vmem:[#allocation2 + $0x30] sm:$0x1]
  %v131 = vsel %vm111, 0, %v130
  %132 = vst [vmem:[#allocation2 + $0x30] sm:$0x1] %v131
  %v133 = vld [vmem:[#allocation2 + $0x38] sm:$0x1]
  %v134 = vsel %vm111, 0, %v133
  %135 = vst [vmem:[#allocation2 + $0x38] sm:$0x1] %v134
  %v136 = vld [vmem:[#allocation2 + $0x40] sm:$0x1]
  %v137 = vsel %vm111, 0, %v136
  %138 = vst [vmem:[#allocation2 + $0x40] sm:$0x1] %v137
  %v139 = vld [vmem:[#allocation2 + $0x48] sm:$0x1]
  %v140 = vsel %vm111, 0, %v139
  %141 = vst [vmem:[#allocation2 + $0x48] sm:$0x1] %v140
  %v142 = vld [vmem:[#allocation2 + $0x50] sm:$0x1]
  %v143 = vsel %vm111, 0, %v142
  %144 = vst [vmem:[#allocation2 + $0x50] sm:$0x1] %v143
  %v145 = vld [vmem:[#allocation2 + $0x58] sm:$0x1]
  %v146 = vsel %vm111, 0, %v145
  %147 = vst [vmem:[#allocation2 + $0x58] sm:$0x1] %v146
  %v148 = vld [vmem:[#allocation2 + $0x60] sm:$0x1]
  %v149 = vsel %vm111, 0, %v148
  %150 = vst [vmem:[#allocation2 + $0x60] sm:$0x1] %v149
  %v151 = vld [vmem:[#allocation2 + $0x68] sm:$0x1]
  %v152 = vsel %vm111, 0, %v151
  %153 = vst [vmem:[#allocation2 + $0x68] sm:$0x1] %v152
  %v154 = vld [vmem:[#allocation2 + $0x70] sm:$0x1]
  %v155 = vsel %vm111, 0, %v154
  %156 = vst [vmem:[#allocation2 + $0x70] sm:$0x1] %v155
  %v157 = vld [vmem:[#allocation2 + $0x78] sm:$0x1]
  %v158 = vsel %vm111, 0, %v157
  %159 = vst [vmem:[#allocation2 + $0x78] sm:$0x1] %v158
  %v160 = vld [vmem:[#allocation2 + $0x80] sm:$0x1]
  %v161 = vsel %vm111, 0, %v160
  %162 = vst [vmem:[#allocation2 + $0x80] sm:$0x1] %v161
  %v163 = vld [vmem:[#allocation2 + $0x88] sm:$0x1]
  %v164 = vsel %vm111, 0, %v163
  %165 = vst [vmem:[#allocation2 + $0x88] sm:$0x1] %v164
  %v166 = vld [vmem:[#allocation2 + $0x90] sm:$0x1]
  %v167 = vsel %vm111, 0, %v166
  %168 = vst [vmem:[#allocation2 + $0x90] sm:$0x1] %v167
  %v169 = vld [vmem:[#allocation2 + $0x98] sm:$0x1]
  %v170 = vsel %vm111, 0, %v169
  %171 = vst [vmem:[#allocation2 + $0x98] sm:$0x1] %v170
  %vm172 = vsmask.f32 7938
  %vm173 = vmand %vm109, %vm172
  %v174 = vld [vmem:[#allocation2 + $0x4] sm:$0x1]
  %v175 = vsel %vm173, 0, %v174
  %176 = vst [vmem:[#allocation2 + $0x4] sm:$0x1] %v175
  %v177 = vld [vmem:[#allocation2 + $0xc] sm:$0x1]
  %v178 = vsel %vm173, 0, %v177
  %179 = vst [vmem:[#allocation2 + $0xc] sm:$0x1] %v178
  %v180 = vld [vmem:[#allocation2 + $0x14] sm:$0x1]
  %v181 = vsel %vm173, 0, %v180
  %182 = vst [vmem:[#allocation2 + $0x14] sm:$0x1] %v181
  %v183 = vld [vmem:[#allocation2 + $0x1c] sm:$0x1]
  %v184 = vsel %vm173, 0, %v183
  %185 = vst [vmem:[#allocation2 + $0x1c] sm:$0x1] %v184
  %v186 = vld [vmem:[#allocation2 + $0x24] sm:$0x1]
  %v187 = vsel %vm173, 0, %v186
  %188 = vst [vmem:[#allocation2 + $0x24] sm:$0x1] %v187
  %v189 = vld [vmem:[#allocation2 + $0x2c] sm:$0x1]
  %v190 = vsel %vm173, 0, %v189
  %191 = vst [vmem:[#allocation2 + $0x2c] sm:$0x1] %v190
  %v192 = vld [vmem:[#allocation2 + $0x34] sm:$0x1]
  %v193 = vsel %vm173, 0, %v192
  %194 = vst [vmem:[#allocation2 + $0x34] sm:$0x1] %v193
  %v195 = vld [vmem:[#allocation2 + $0x3c] sm:$0x1]
  %v196 = vsel %vm173, 0, %v195
  %197 = vst [vmem:[#allocation2 + $0x3c] sm:$0x1] %v196
  %v198 = vld [vmem:[#allocation2 + $0x44] sm:$0x1]
  %v199 = vsel %vm173, 0, %v198
  %200 = vst [vmem:[#allocation2 + $0x44] sm:$0x1] %v199
  %v201 = vld [vmem:[#allocation2 + $0x4c] sm:$0x1]
  %v202 = vsel %vm173, 0, %v201
  %203 = vst [vmem:[#allocation2 + $0x4c] sm:$0x1] %v202
  %v204 = vld [vmem:[#allocation2 + $0x54] sm:$0x1]
  %v205 = vsel %vm173, 0, %v204
  %206 = vst [vmem:[#allocation2 + $0x54] sm:$0x1] %v205
  %v207 = vld [vmem:[#allocation2 + $0x5c] sm:$0x1]
  %v208 = vsel %vm173, 0, %v207
  %209 = vst [vmem:[#allocation2 + $0x5c] sm:$0x1] %v208
  %v210 = vld [vmem:[#allocation2 + $0x64] sm:$0x1]
  %v211 = vsel %vm173, 0, %v210
  %212 = vst [vmem:[#allocation2 + $0x64] sm:$0x1] %v211
  %v213 = vld [vmem:[#allocation2 + $0x6c] sm:$0x1]
  %v214 = vsel %vm173, 0, %v213
  %215 = vst [vmem:[#allocation2 + $0x6c] sm:$0x1] %v214
  %v216 = vld [vmem:[#allocation2 + $0x74] sm:$0x1]
  %v217 = vsel %vm173, 0, %v216
  %218 = vst [vmem:[#allocation2 + $0x74] sm:$0x1] %v217
  %v219 = vld [vmem:[#allocation2 + $0x7c] sm:$0x1]
  %v220 = vsel %vm173, 0, %v219
  %221 = vst [vmem:[#allocation2 + $0x7c] sm:$0x1] %v220
  %v222 = vld [vmem:[#allocation2 + $0x84] sm:$0x1]
  %v223 = vsel %vm173, 0, %v222
  %224 = vst [vmem:[#allocation2 + $0x84] sm:$0x1] %v223
  %v225 = vld [vmem:[#allocation2 + $0x8c] sm:$0x1]
  %v226 = vsel %vm173, 0, %v225
  %227 = vst [vmem:[#allocation2 + $0x8c] sm:$0x1] %v226
  %v228 = vld [vmem:[#allocation2 + $0x94] sm:$0x1]
  %v229 = vsel %vm173, 0, %v228
  %230 = vst [vmem:[#allocation2 + $0x94] sm:$0x1] %v229
  %v231 = vld [vmem:[#allocation2 + $0x9c] sm:$0x1]
  %v232 = vsel %vm173, 0, %v231
  %233 = vst [vmem:[#allocation2 + $0x9c] sm:$0x1] %v232
  %v234 = vpack.c.bf16 %v82, %v82
  %v235 = vpack.c.bf16 %v83, %v83
  %v236 = vpack.c.bf16 %v84, %v84
  %v237 = vpack.c.bf16 %v85, %v85
  %v238 = vpack.c.bf16 %v86, %v86
  %v239 = vpack.c.bf16 %v87, %v87
  %v240 = vpack.c.bf16 %v88, %v88
  %v241 = vpack.c.bf16 %v89, %v89
  %v242 = vpack.c.bf16 %v90, %v90
  %v243 = vpack.c.bf16 %v91, %v91
  %v244 = vpack.c.bf16 %v92, %v92
  %v245 = vpack.c.bf16 %v93, %v93
  %v246 = vpack.c.bf16 %v94, %v94
  %v247 = vpack.c.bf16 %v95, %v95
  %v248 = vpack.c.bf16 %v96, %v96
  %v249 = vpack.c.bf16 %v97, %v97
  %v266 = vunpack.c.l.b16 %v234
  %v267 = vunpack.c.l.b16 %v235
  %v268 = vunpack.c.l.b16 %v236
  %v269 = vunpack.c.l.b16 %v237
  %v270 = vunpack.c.l.b16 %v238
  %v271 = vunpack.c.l.b16 %v239
  %v272 = vunpack.c.l.b16 %v240
  %v273 = vunpack.c.l.b16 %v241
  %v274 = vunpack.c.l.b16 %v242
  %v275 = vunpack.c.l.b16 %v243
  %v276 = vunpack.c.l.b16 %v244
  %v277 = vunpack.c.l.b16 %v245
  %v278 = vunpack.c.l.b16 %v246
  %v279 = vunpack.c.l.b16 %v247
  %v280 = vunpack.c.l.b16 %v248
  %v281 = vunpack.c.l.b16 %v249
  %v282 = vpack.c.b16 %v266, %v266
  %v283 = vpack.c.b16 %v267, %v267
  %v284 = vpack.c.b16 %v268, %v268
  %v285 = vpack.c.b16 %v269, %v269
  %v286 = vpack.c.b16 %v270, %v270
  %v287 = vpack.c.b16 %v271, %v271
  %v288 = vpack.c.b16 %v272, %v272
  %v289 = vpack.c.b16 %v273, %v273
  %v290 = vpack.c.b16 %v274, %v274
  %v291 = vpack.c.b16 %v275, %v275
  %v292 = vpack.c.b16 %v276, %v276
  %v293 = vpack.c.b16 %v277, %v277
  %v294 = vpack.c.b16 %v278, %v278
  %v295 = vpack.c.b16 %v279, %v279
  %v296 = vpack.c.b16 %v280, %v280
  %v297 = vpack.c.b16 %v281, %v281
  %v299 = vshrl.u32 %v282, 16
  %v301 = vrot.slane %v299, 7
  %v302 = vshll.u32 %v282, 16
  %v304 = vor.u32 %v301, %v302
  %v305 = vrot.slane %v301, 4
  %v307 = vshrl.u32 %v283, 16
  %v309 = vrot.slane %v307, 7
  %v310 = vshll.u32 %v283, 16
  %v312 = vor.u32 %v309, %v310
  %v313 = vrot.slane %v309, 4
  %v315 = vshrl.u32 %v284, 16
  %v317 = vrot.slane %v315, 7
  %v318 = vshll.u32 %v284, 16
  %v320 = vor.u32 %v317, %v318
  %v321 = vrot.slane %v317, 4
  %v323 = vshrl.u32 %v285, 16
  %v325 = vrot.slane %v323, 7
  %v326 = vshll.u32 %v285, 16
  %v328 = vor.u32 %v325, %v326
  %v329 = vrot.slane %v325, 4
  %v331 = vshrl.u32 %v286, 16
  %v333 = vrot.slane %v331, 7
  %v334 = vshll.u32 %v286, 16
  %v336 = vor.u32 %v333, %v334
  %v337 = vrot.slane %v333, 4
  %v339 = vshrl.u32 %v287, 16
  %v341 = vrot.slane %v339, 7
  %v342 = vshll.u32 %v287, 16
  %v344 = vor.u32 %v341, %v342
  %v345 = vrot.slane %v341, 4
  %v347 = vshrl.u32 %v288, 16
  %v349 = vrot.slane %v347, 7
  %v350 = vshll.u32 %v288, 16
  %v352 = vor.u32 %v349, %v350
  %v353 = vrot.slane %v349, 4
  %v355 = vshrl.u32 %v289, 16
  %v357 = vrot.slane %v355, 7
  %v358 = vshll.u32 %v289, 16
  %v360 = vor.u32 %v357, %v358
  %v361 = vrot.slane %v357, 4
  %v363 = vshrl.u32 %v290, 16
  %v365 = vrot.slane %v363, 7
  %v366 = vshll.u32 %v290, 16
  %v368 = vor.u32 %v365, %v366
  %v369 = vrot.slane %v365, 4
  %v371 = vshrl.u32 %v291, 16
  %v373 = vrot.slane %v371, 7
  %v374 = vshll.u32 %v291, 16
  %v376 = vor.u32 %v373, %v374
  %v377 = vrot.slane %v373, 4
  %v379 = vshrl.u32 %v292, 16
  %v381 = vrot.slane %v379, 7
  %v382 = vshll.u32 %v292, 16
  %v384 = vor.u32 %v381, %v382
  %v385 = vrot.slane %v381, 4
  %v387 = vshrl.u32 %v293, 16
  %v389 = vrot.slane %v387, 7
  %v390 = vshll.u32 %v293, 16
  %v392 = vor.u32 %v389, %v390
  %v393 = vrot.slane %v389, 4
  %v395 = vshrl.u32 %v294, 16
  %v397 = vrot.slane %v395, 7
  %v398 = vshll.u32 %v294, 16
  %v400 = vor.u32 %v397, %v398
  %v401 = vrot.slane %v397, 4
  %v403 = vshrl.u32 %v295, 16
  %v405 = vrot.slane %v403, 7
  %v406 = vshll.u32 %v295, 16
  %v408 = vor.u32 %v405, %v406
  %v409 = vrot.slane %v405, 4
  %v411 = vshrl.u32 %v296, 16
  %v413 = vrot.slane %v411, 7
  %v414 = vshll.u32 %v296, 16
  %v416 = vor.u32 %v413, %v414
  %v417 = vrot.slane %v413, 4
  %v419 = vshrl.u32 %v297, 16
  %v421 = vrot.slane %v419, 7
  %v422 = vshll.u32 %v297, 16
  %v424 = vor.u32 %v421, %v422
  %v425 = vrot.slane %v421, 4
  %s458 = scalar_lea.vmem [#allocation2], 8
  %vm459 = vcmask 60416
  %vm460 = vmand %vm459, %vm172
  %v461 = vld [vmem:[%s458] sm:$0xf]
  %v462 = vsel %vm460, %v304, %v461
  %463 = vst [vmem:[%s458] sm:$0xf] %v462
  %v464 = vld [vmem:[%s458 + $0x4] sm:$0x1]
  %v465 = vsel %vm111, %v305, %v464
  %466 = vst [vmem:[%s458 + $0x4] sm:$0x1] %v465
  %v467 = vld [vmem:[%s458 + $0x8] sm:$0xf]
  %v468 = vsel %vm460, %v312, %v467
  %469 = vst [vmem:[%s458 + $0x8] sm:$0xf] %v468
  %v470 = vld [vmem:[%s458 + $0xc] sm:$0x1]
  %v471 = vsel %vm111, %v313, %v470
  %472 = vst [vmem:[%s458 + $0xc] sm:$0x1] %v471
  %v473 = vld [vmem:[%s458 + $0x10] sm:$0xf]
  %v474 = vsel %vm460, %v320, %v473
  %475 = vst [vmem:[%s458 + $0x10] sm:$0xf] %v474
  %v476 = vld [vmem:[%s458 + $0x14] sm:$0x1]
  %v477 = vsel %vm111, %v321, %v476
  %478 = vst [vmem:[%s458 + $0x14] sm:$0x1] %v477
  %v479 = vld [vmem:[%s458 + $0x18] sm:$0xf]
  %v480 = vsel %vm460, %v328, %v479
  %481 = vst [vmem:[%s458 + $0x18] sm:$0xf] %v480
  %v482 = vld [vmem:[%s458 + $0x1c] sm:$0x1]
  %v483 = vsel %vm111, %v329, %v482
  %484 = vst [vmem:[%s458 + $0x1c] sm:$0x1] %v483
  %v485 = vld [vmem:[%s458 + $0x20] sm:$0xf]
  %v486 = vsel %vm460, %v336, %v485
  %487 = vst [vmem:[%s458 + $0x20] sm:$0xf] %v486
  %v488 = vld [vmem:[%s458 + $0x24] sm:$0x1]
  %v489 = vsel %vm111, %v337, %v488
  %490 = vst [vmem:[%s458 + $0x24] sm:$0x1] %v489
  %v491 = vld [vmem:[%s458 + $0x28] sm:$0xf]
  %v492 = vsel %vm460, %v344, %v491
  %493 = vst [vmem:[%s458 + $0x28] sm:$0xf] %v492
  %v494 = vld [vmem:[%s458 + $0x2c] sm:$0x1]
  %v495 = vsel %vm111, %v345, %v494
  %496 = vst [vmem:[%s458 + $0x2c] sm:$0x1] %v495
  %v497 = vld [vmem:[%s458 + $0x30] sm:$0xf]
  %v498 = vsel %vm460, %v352, %v497
  %499 = vst [vmem:[%s458 + $0x30] sm:$0xf] %v498
  %v500 = vld [vmem:[%s458 + $0x34] sm:$0x1]
  %v501 = vsel %vm111, %v353, %v500
  %502 = vst [vmem:[%s458 + $0x34] sm:$0x1] %v501
  %v503 = vld [vmem:[%s458 + $0x38] sm:$0xf]
  %v504 = vsel %vm460, %v360, %v503
  %505 = vst [vmem:[%s458 + $0x38] sm:$0xf] %v504
  %v506 = vld [vmem:[%s458 + $0x3c] sm:$0x1]
  %v507 = vsel %vm111, %v361, %v506
  %508 = vst [vmem:[%s458 + $0x3c] sm:$0x1] %v507
  %v509 = vld [vmem:[%s458 + $0x50] sm:$0xf]
  %v510 = vsel %vm460, %v368, %v509
  %511 = vst [vmem:[%s458 + $0x50] sm:$0xf] %v510
  %v512 = vld [vmem:[%s458 + $0x54] sm:$0x1]
  %v513 = vsel %vm111, %v369, %v512
  %514 = vst [vmem:[%s458 + $0x54] sm:$0x1] %v513
  %v515 = vld [vmem:[%s458 + $0x58] sm:$0xf]
  %v516 = vsel %vm460, %v376, %v515
  %517 = vst [vmem:[%s458 + $0x58] sm:$0xf] %v516
  %v518 = vld [vmem:[%s458 + $0x5c] sm:$0x1]
  %v519 = vsel %vm111, %v377, %v518
  %520 = vst [vmem:[%s458 + $0x5c] sm:$0x1] %v519
  %v521 = vld [vmem:[%s458 + $0x60] sm:$0xf]
  %v522 = vsel %vm460, %v384, %v521
  %523 = vst [vmem:[%s458 + $0x60] sm:$0xf] %v522
  %v524 = vld [vmem:[%s458 + $0x64] sm:$0x1]
  %v525 = vsel %vm111, %v385, %v524
  %526 = vst [vmem:[%s458 + $0x64] sm:$0x1] %v525
  %v527 = vld [vmem:[%s458 + $0x68] sm:$0xf]
  %v528 = vsel %vm460, %v392, %v527
  %529 = vst [vmem:[%s458 + $0x68] sm:$0xf] %v528
  %v530 = vld [vmem:[%s458 + $0x6c] sm:$0x1]
  %v531 = vsel %vm111, %v393, %v530
  %532 = vst [vmem:[%s458 + $0x6c] sm:$0x1] %v531
  %v533 = vld [vmem:[%s458 + $0x70] sm:$0xf]
  %v534 = vsel %vm460, %v400, %v533
  %535 = vst [vmem:[%s458 + $0x70] sm:$0xf] %v534
  %v536 = vld [vmem:[%s458 + $0x74] sm:$0x1]
  %v537 = vsel %vm111, %v401, %v536
  %538 = vst [vmem:[%s458 + $0x74] sm:$0x1] %v537
  %v539 = vld [vmem:[%s458 + $0x78] sm:$0xf]
  %v540 = vsel %vm460, %v408, %v539
  %541 = vst [vmem:[%s458 + $0x78] sm:$0xf] %v540
  %v542 = vld [vmem:[%s458 + $0x7c] sm:$0x1]
  %v543 = vsel %vm111, %v409, %v542
  %544 = vst [vmem:[%s458 + $0x7c] sm:$0x1] %v543
  %v545 = vld [vmem:[%s458 + $0x80] sm:$0xf]
  %v546 = vsel %vm460, %v416, %v545
  %547 = vst [vmem:[%s458 + $0x80] sm:$0xf] %v546
  %v548 = vld [vmem:[%s458 + $0x84] sm:$0x1]
  %v549 = vsel %vm111, %v417, %v548
  %550 = vst [vmem:[%s458 + $0x84] sm:$0x1] %v549
  %v551 = vld [vmem:[%s458 + $0x88] sm:$0xf]
  %v552 = vsel %vm460, %v424, %v551
  %553 = vst [vmem:[%s458 + $0x88] sm:$0xf] %v552
  %v554 = vld [vmem:[%s458 + $0x8c] sm:$0x1]
  %v555 = vsel %vm111, %v425, %v554
  %556 = vst [vmem:[%s458 + $0x8c] sm:$0x1] %v555
  %v557 = vld [vmem:[#allocation2] sm:$0xf]
  %v558 = vld [vmem:[#allocation2 + $0x8] sm:$0xf]
  %v559 = vld [vmem:[#allocation2 + $0x10] sm:$0xf]
  %v560 = vld [vmem:[#allocation2 + $0x18] sm:$0xf]
  %v561 = vld [vmem:[#allocation2 + $0x20] sm:$0xf]
  %v562 = vld [vmem:[#allocation2 + $0x28] sm:$0xf]
  %v563 = vld [vmem:[#allocation2 + $0x30] sm:$0xf]
  %v564 = vld [vmem:[#allocation2 + $0x38] sm:$0xf]
  %v565 = vld [vmem:[#allocation2 + $0x50] sm:$0xf]
  %v566 = vld [vmem:[#allocation2 + $0x58] sm:$0xf]
  %v567 = vld [vmem:[#allocation2 + $0x60] sm:$0xf]
  %v568 = vld [vmem:[#allocation2 + $0x68] sm:$0xf]
  %v569 = vld [vmem:[#allocation2 + $0x70] sm:$0xf]
  %v570 = vld [vmem:[#allocation2 + $0x78] sm:$0xf]
  %v571 = vld [vmem:[#allocation2 + $0x80] sm:$0xf]
  %v572 = vld [vmem:[#allocation2 + $0x88] sm:$0xf]
  %v573 = vld [vmem:[%s3] sm:$0xf]
  %v574 = vld [vmem:[#allocation2 + $0x4] sm:$0x1]
  %v575 = vld [vmem:[#allocation2 + $0xc] sm:$0x1]
  %v576 = vld [vmem:[#allocation2 + $0x14] sm:$0x1]
  %v577 = vld [vmem:[#allocation2 + $0x1c] sm:$0x1]
  %v578 = vld [vmem:[#allocation2 + $0x24] sm:$0x1]
  %v579 = vld [vmem:[#allocation2 + $0x2c] sm:$0x1]
  %v580 = vld [vmem:[#allocation2 + $0x34] sm:$0x1]
  %v581 = vld [vmem:[#allocation2 + $0x3c] sm:$0x1]
  %v582 = vld [vmem:[#allocation2 + $0x54] sm:$0x1]
  %v583 = vld [vmem:[#allocation2 + $0x5c] sm:$0x1]
  %v584 = vld [vmem:[#allocation2 + $0x64] sm:$0x1]
  %v585 = vld [vmem:[#allocation2 + $0x6c] sm:$0x1]
  %v586 = vld [vmem:[#allocation2 + $0x74] sm:$0x1]
  %v587 = vld [vmem:[#allocation2 + $0x7c] sm:$0x1]
  %v588 = vld [vmem:[#allocation2 + $0x84] sm:$0x1]
  %v589 = vld [vmem:[#allocation2 + $0x8c] sm:$0x1]
  %vm590 = vsmask.f32 3328
  %vm591 = vsmask.f32 7440
  %vm592 = vmor %vm590, %vm591
  %v594 = vshrl.u32 %v557, 16
  %v596 = vrot.slane %v594, 4
  %v597 = vshll.u32 %v557, 16
  %v599 = vrot.slane %v597, 5
  %v600 = vor.u32 %v596, %v599
  %v601 = vrot.slane %v600, 4
  %v603 = vshll.u32 %v574, 16
  %v605 = vrot.slane %v603, 5
  %v606 = vsel %vm592, %v601, %v605
  %v608 = vshrl.u32 %v558, 16
  %v610 = vrot.slane %v608, 4
  %v611 = vshll.u32 %v558, 16
  %v613 = vrot.slane %v611, 5
  %v614 = vor.u32 %v610, %v613
  %v615 = vrot.slane %v614, 4
  %v617 = vshll.u32 %v575, 16
  %v619 = vrot.slane %v617, 5
  %v620 = vsel %vm592, %v615, %v619
  %v622 = vshrl.u32 %v559, 16
  %v624 = vrot.slane %v622, 4
  %v625 = vshll.u32 %v559, 16
  %v627 = vrot.slane %v625, 5
  %v628 = vor.u32 %v624, %v627
  %v629 = vrot.slane %v628, 4
  %v631 = vshll.u32 %v576, 16
  %v633 = vrot.slane %v631, 5
  %v634 = vsel %vm592, %v629, %v633
  %v636 = vshrl.u32 %v560, 16
  %v638 = vrot.slane %v636, 4
  %v639 = vshll.u32 %v560, 16
  %v641 = vrot.slane %v639, 5
  %v642 = vor.u32 %v638, %v641
  %v643 = vrot.slane %v642, 4
  %v645 = vshll.u32 %v577, 16
  %v647 = vrot.slane %v645, 5
  %v648 = vsel %vm592, %v643, %v647
  %v650 = vshrl.u32 %v561, 16
  %v652 = vrot.slane %v650, 4
  %v653 = vshll.u32 %v561, 16
  %v655 = vrot.slane %v653, 5
  %v656 = vor.u32 %v652, %v655
  %v657 = vrot.slane %v656, 4
  %v659 = vshll.u32 %v578, 16
  %v661 = vrot.slane %v659, 5
  %v662 = vsel %vm592, %v657, %v661
  %v664 = vshrl.u32 %v562, 16
  %v666 = vrot.slane %v664, 4
  %v667 = vshll.u32 %v562, 16
  %v669 = vrot.slane %v667, 5
  %v670 = vor.u32 %v666, %v669
  %v671 = vrot.slane %v670, 4
  %v673 = vshll.u32 %v579, 16
  %v675 = vrot.slane %v673, 5
  %v676 = vsel %vm592, %v671, %v675
  %v678 = vshrl.u32 %v563, 16
  %v680 = vrot.slane %v678, 4
  %v681 = vshll.u32 %v563, 16
  %v683 = vrot.slane %v681, 5
  %v684 = vor.u32 %v680, %v683
  %v685 = vrot.slane %v684, 4
  %v687 = vshll.u32 %v580, 16
  %v689 = vrot.slane %v687, 5
  %v690 = vsel %vm592, %v685, %v689
  %v692 = vshrl.u32 %v564, 16
  %v694 = vrot.slane %v692, 4
  %v695 = vshll.u32 %v564, 16
  %v697 = vrot.slane %v695, 5
  %v698 = vor.u32 %v694, %v697
  %v699 = vrot.slane %v698, 4
  %v701 = vshll.u32 %v581, 16
  %v703 = vrot.slane %v701, 5
  %v704 = vsel %vm592, %v699, %v703
  %v706 = vshrl.u32 %v565, 16
  %v708 = vrot.slane %v706, 4
  %v709 = vshll.u32 %v565, 16
  %v711 = vrot.slane %v709, 5
  %v712 = vor.u32 %v708, %v711
  %v713 = vrot.slane %v712, 4
  %v715 = vshll.u32 %v582, 16
  %v717 = vrot.slane %v715, 5
  %v718 = vsel %vm592, %v713, %v717
  %v720 = vshrl.u32 %v566, 16
  %v722 = vrot.slane %v720, 4
  %v723 = vshll.u32 %v566, 16
  %v725 = vrot.slane %v723, 5
  %v726 = vor.u32 %v722, %v725
  %v727 = vrot.slane %v726, 4
  %v729 = vshll.u32 %v583, 16
  %v731 = vrot.slane %v729, 5
  %v732 = vsel %vm592, %v727, %v731
  %v734 = vshrl.u32 %v567, 16
  %v736 = vrot.slane %v734, 4
  %v737 = vshll.u32 %v567, 16
  %v739 = vrot.slane %v737, 5
  %v740 = vor.u32 %v736, %v739
  %v741 = vrot.slane %v740, 4
  %v743 = vshll.u32 %v584, 16
  %v745 = vrot.slane %v743, 5
  %v746 = vsel %vm592, %v741, %v745
  %v748 = vshrl.u32 %v568, 16
  %v750 = vrot.slane %v748, 4
  %v751 = vshll.u32 %v568, 16
  %v753 = vrot.slane %v751, 5
  %v754 = vor.u32 %v750, %v753
  %v755 = vrot.slane %v754, 4
  %v757 = vshll.u32 %v585, 16
  %v759 = vrot.slane %v757, 5
  %v760 = vsel %vm592, %v755, %v759
  %v762 = vshrl.u32 %v569, 16
  %v764 = vrot.slane %v762, 4
  %v765 = vshll.u32 %v569, 16
  %v767 = vrot.slane %v765, 5
  %v768 = vor.u32 %v764, %v767
  %v769 = vrot.slane %v768, 4
  %v771 = vshll.u32 %v586, 16
  %v773 = vrot.slane %v771, 5
  %v774 = vsel %vm592, %v769, %v773
  %v776 = vshrl.u32 %v570, 16
  %v778 = vrot.slane %v776, 4
  %v779 = vshll.u32 %v570, 16
  %v781 = vrot.slane %v779, 5
  %v782 = vor.u32 %v778, %v781
  %v783 = vrot.slane %v782, 4
  %v785 = vshll.u32 %v587, 16
  %v787 = vrot.slane %v785, 5
  %v788 = vsel %vm592, %v783, %v787
  %v790 = vshrl.u32 %v571, 16
  %v792 = vrot.slane %v790, 4
  %v793 = vshll.u32 %v571, 16
  %v795 = vrot.slane %v793, 5
  %v796 = vor.u32 %v792, %v795
  %v797 = vrot.slane %v796, 4
  %v799 = vshll.u32 %v588, 16
  %v801 = vrot.slane %v799, 5
  %v802 = vsel %vm592, %v797, %v801
  %v804 = vshrl.u32 %v572, 16
  %v806 = vrot.slane %v804, 4
  %v807 = vshll.u32 %v572, 16
  %v809 = vrot.slane %v807, 5
  %v810 = vor.u32 %v806, %v809
  %v811 = vrot.slane %v810, 4
  %v813 = vshll.u32 %v589, 16
  %v815 = vrot.slane %v813, 5
  %v816 = vsel %vm592, %v811, %v815
  %s817 = scalar_lea.vmem %s3, 4
  %v818 = vld [vmem:[%s817] sm:$0xf]
  %v819 = vunpack.c.l.b16 %v606
  %v820 = vunpack.c.l.b16 %v620
  %v821 = vunpack.c.l.b16 %v634
  %v822 = vunpack.c.l.b16 %v648
  %v823 = vunpack.c.l.b16 %v662
  %v824 = vunpack.c.l.b16 %v676
  %v825 = vunpack.c.l.b16 %v690
  %v826 = vunpack.c.l.b16 %v704
  %v827 = vunpack.c.l.b16 %v718
  %v828 = vunpack.c.l.b16 %v732
  %v829 = vunpack.c.l.b16 %v746
  %v830 = vunpack.c.l.b16 %v760
  %v831 = vunpack.c.l.b16 %v774
  %v832 = vunpack.c.l.b16 %v788
  %v833 = vunpack.c.l.b16 %v802
  %v834 = vunpack.c.l.b16 %v816
  %v835 = vpack.c.b16 %v820, %v819
  %v836 = vpack.c.b16 %v822, %v821
  %v837 = vpack.c.b16 %v824, %v823
  %v838 = vpack.c.b16 %v826, %v825
  %v839 = vpack.c.b16 %v828, %v827
  %v840 = vpack.c.b16 %v830, %v829
  %v841 = vpack.c.b16 %v832, %v831
  %v842 = vpack.c.b16 %v834, %v833
  %vm843 = vcmask 64512
  %v845 = vsel %vm843, %v835, 0
  %v848 = vsel %vm843, %v836, 0
  %v851 = vsel %vm843, %v837, 0
  %v854 = vsel %vm843, %v838, 0
  %v857 = vsel %vm843, %v839, 0
  %v860 = vsel %vm843, %v840, 0
  %v863 = vsel %vm843, %v841, 0
  %v866 = vsel %vm843, %v842, 0
  %vm868 = vcmask 1043456
  %v870 = vsel %vm868, %v818, 0
  %872 = vmatprep.subr.bf16.mxu0 0
  %873 = vmatpush1.bf16.msra.mxu0 %v870
  %874 = vmatprep.subr.bf16.mxu0 0
  %875 = vmatpush1.bf16.msra.mxu0 0
  %876 = vmatprep.subr.bf16.mxu0 0
  %877 = vmatpush1.bf16.msra.mxu0 0
  %878 = vmatprep.subr.bf16.mxu0 0
  %879 = vmatpush1.bf16.msra.mxu0 0
  %880 = vmatprep.subr.bf16.mxu0 0
  %881 = vmatpush1.bf16.msra.mxu0 0
  %882 = vmatprep.subr.bf16.mxu0 0
  %883 = vmatpush1.bf16.msra.mxu0 0
  %884 = vmatprep.subr.bf16.mxu0 0
  %885 = vmatpush1.bf16.msra.mxu0 0
  %886 = vmatprep.subr.bf16.mxu0 0
  %887 = vmatpush1.bf16.msra.mxu0 0
  %888 = vmatprep.subr.bf16.mxu0 0
  %889 = vmatpush1.bf16.msra.mxu0 0
  %890 = vmatprep.subr.bf16.mxu0 0
  %891 = vmatpush1.bf16.msra.mxu0 0
  %892 = vmatprep.subr.bf16.mxu0 0
  %893 = vmatpush1.bf16.msra.mxu0 0
  %894 = vmatprep.subr.bf16.mxu0 0
  %895 = vmatpush1.bf16.msra.mxu0 0
  %896 = vmatprep.subr.bf16.mxu0 0
  %897 = vmatpush1.bf16.msra.mxu0 0
  %898 = vmatprep.subr.bf16.mxu0 0
  %899 = vmatpush1.bf16.msra.mxu0 0
  %900 = vmatprep.subr.bf16.mxu0 0
  %901 = vmatpush1.bf16.msra.mxu0 0
  %902 = vmatprep.subr.bf16.mxu0 0
  %903 = vmatpush1.bf16.msra.mxu0 0
  %904 = vmatprep.mubr.bf16.mxu0 0
  %905 = vmatmul.mubr.bf16.gmra.mrb[0].mxu0 %v845
  %v906 = vpop.f32.mrb[0].mxu0
  %v907 = vadd.f32 0.0, %v906
  %v908 = vpop.f32.mrb[0].mxu0
  %v909 = vpop.f32.mrb[0].mxu0
  %v910 = vadd.f32 0.0, %v909
  %v911 = vpop.f32.mrb[0].mxu0
  %912 = vmatprep.mubr.bf16.mxu0 0
  %913 = vmatmul.mubr.bf16.gmra.mrb[0].mxu0 %v848
  %v914 = vpop.f32.mrb[0].mxu0
  %v915 = vadd.f32 0.0, %v914
  %v916 = vpop.f32.mrb[0].mxu0
  %v917 = vpop.f32.mrb[0].mxu0
  %v918 = vadd.f32 0.0, %v917
  %v919 = vpop.f32.mrb[0].mxu0
  %920 = vmatprep.mubr.bf16.mxu0 0
  %921 = vmatmul.mubr.bf16.gmra.mrb[0].mxu0 %v851
  %v922 = vpop.f32.mrb[0].mxu0
  %v923 = vadd.f32 0.0, %v922
  %v924 = vpop.f32.mrb[0].mxu0
  %v925 = vpop.f32.mrb[0].mxu0
  %v926 = vadd.f32 0.0, %v925
  %v927 = vpop.f32.mrb[0].mxu0
  %928 = vmatprep.mubr.bf16.mxu0 0
  %929 = vmatmul.mubr.bf16.gmra.mrb[0].mxu0 %v854
  %v930 = vpop.f32.mrb[0].mxu0
  %v931 = vadd.f32 0.0, %v930
  %v932 = vpop.f32.mrb[0].mxu0
  %v933 = vpop.f32.mrb[0].mxu0
  %v934 = vadd.f32 0.0, %v933
  %v935 = vpop.f32.mrb[0].mxu0
  %936 = vmatprep.mubr.bf16.mxu0 0
  %937 = vmatmul.mubr.bf16.gmra.mrb[0].mxu0 %v857
  %v938 = vpop.f32.mrb[0].mxu0
  %v939 = vadd.f32 0.0, %v938
  %v940 = vpop.f32.mrb[0].mxu0
  %v941 = vpop.f32.mrb[0].mxu0
  %v942 = vadd.f32 0.0, %v941
  %v943 = vpop.f32.mrb[0].mxu0
  %944 = vmatprep.mubr.bf16.mxu0 0
  %945 = vmatmul.mubr.bf16.gmra.mrb[0].mxu0 %v860
  %v946 = vpop.f32.mrb[0].mxu0
  %v947 = vadd.f32 0.0, %v946
  %v948 = vpop.f32.mrb[0].mxu0
  %v949 = vpop.f32.mrb[0].mxu0
  %v950 = vadd.f32 0.0, %v949
  %v951 = vpop.f32.mrb[0].mxu0
  %952 = vmatprep.mubr.bf16.mxu0 0
  %953 = vmatmul.mubr.bf16.gmra.mrb[0].mxu0 %v863
  %v954 = vpop.f32.mrb[0].mxu0
  %v955 = vadd.f32 0.0, %v954
  %v956 = vpop.f32.mrb[0].mxu0
  %v957 = vpop.f32.mrb[0].mxu0
  %v958 = vadd.f32 0.0, %v957
  %v959 = vpop.f32.mrb[0].mxu0
  %960 = vmatprep.mubr.bf16.mxu0 0
  %961 = vmatmul.mubr.bf16.gmra.mrb[0].mxu0 %v866
  %v962 = vpop.f32.mrb[0].mxu0
  %v963 = vadd.f32 0.0, %v962
  %v964 = vpop.f32.mrb[0].mxu0
  %v965 = vpop.f32.mrb[0].mxu0
  %v966 = vadd.f32 0.0, %v965
  %v967 = vpop.f32.mrb[0].mxu0
  %968 = vdwg.mxu0
  %v985 = vunpack.c.l.b16 %v557
  %v986 = vunpack.c.l.b16 %v558
  %v987 = vunpack.c.l.b16 %v559
  %v988 = vunpack.c.l.b16 %v560
  %v989 = vunpack.c.l.b16 %v561
  %v990 = vunpack.c.l.b16 %v562
  %v991 = vunpack.c.l.b16 %v563
  %v992 = vunpack.c.l.b16 %v564
  %v993 = vunpack.c.l.b16 %v565
  %v994 = vunpack.c.l.b16 %v566
  %v995 = vunpack.c.l.b16 %v567
  %v996 = vunpack.c.l.b16 %v568
  %v997 = vunpack.c.l.b16 %v569
  %v998 = vunpack.c.l.b16 %v570
  %v999 = vunpack.c.l.b16 %v571
  %v1000 = vunpack.c.l.b16 %v572
  %v1001 = vpack.c.b16 %v986, %v985
  %v1002 = vpack.c.b16 %v988, %v987
  %v1003 = vpack.c.b16 %v990, %v989
  %v1004 = vpack.c.b16 %v992, %v991
  %v1005 = vpack.c.b16 %v994, %v993
  %v1006 = vpack.c.b16 %v996, %v995
  %v1007 = vpack.c.b16 %v998, %v997
  %v1008 = vpack.c.b16 %v1000, %v999
  %v1010 = vsel %vm843, %v1001, 0
  %v1013 = vsel %vm843, %v1002, 0
  %v1016 = vsel %vm843, %v1003, 0
  %v1019 = vsel %vm843, %v1004, 0
  %v1022 = vsel %vm843, %v1005, 0
  %v1025 = vsel %vm843, %v1006, 0
  %v1028 = vsel %vm843, %v1007, 0
  %v1031 = vsel %vm843, %v1008, 0
  %v1034 = vsel %vm868, %v573, 0
  %1036 = vmatprep.subr.bf16.mxu0 0
  %1037 = vmatpush1.bf16.msra.mxu0 %v1034
  %1038 = vmatprep.subr.bf16.mxu0 0
  %1039 = vmatpush1.bf16.msra.mxu0 0
  %1040 = vmatprep.subr.bf16.mxu0 0
  %1041 = vmatpush1.bf16.msra.mxu0 0
  %1042 = vmatprep.subr.bf16.mxu0 0
  %1043 = vmatpush1.bf16.msra.mxu0 0
  %1044 = vmatprep.subr.bf16.mxu0 0
  %1045 = vmatpush1.bf16.msra.mxu0 0
  %1046 = vmatprep.subr.bf16.mxu0 0
  %1047 = vmatpush1.bf16.msra.mxu0 0
  %1048 = vmatprep.subr.bf16.mxu0 0
  %1049 = vmatpush1.bf16.msra.mxu0 0
  %1050 = vmatprep.subr.bf16.mxu0 0
  %1051 = vmatpush1.bf16.msra.mxu0 0
  %1052 = vmatprep.subr.bf16.mxu0 0
  %1053 = vmatpush1.bf16.msra.mxu0 0
  %1054 = vmatprep.subr.bf16.mxu0 0
  %1055 = vmatpush1.bf16.msra.mxu0 0
  %1056 = vmatprep.subr.bf16.mxu0 0
  %1057 = vmatpush1.bf16.msra.mxu0 0
  %1058 = vmatprep.subr.bf16.mxu0 0
  %1059 = vmatpush1.bf16.msra.mxu0 0
  %1060 = vmatprep.subr.bf16.mxu0 0
  %1061 = vmatpush1.bf16.msra.mxu0 0
  %1062 = vmatprep.subr.bf16.mxu0 0
  %1063 = vmatpush1.bf16.msra.mxu0 0
  %1064 = vmatprep.subr.bf16.mxu0 0
  %1065 = vmatpush1.bf16.msra.mxu0 0
  %1066 = vmatprep.subr.bf16.mxu0 0
  %1067 = vmatpush1.bf16.msra.mxu0 0
  %1068 = vmatprep.mubr.bf16.mxu0 0
  %1069 = vmatmul.mubr.bf16.gmra.mrb[0].mxu0 %v1010
  %v1070 = vpop.f32.mrb[0].mxu0
  %v1071 = vadd.f32 %v907, %v1070
  %v1072 = vpop.f32.mrb[0].mxu0
  %v1073 = vpop.f32.mrb[0].mxu0
  %v1074 = vadd.f32 %v910, %v1073
  %v1075 = vpop.f32.mrb[0].mxu0
  %1076 = vmatprep.mubr.bf16.mxu0 0
  %1077 = vmatmul.mubr.bf16.gmra.mrb[0].mxu0 %v1013
  %v1078 = vpop.f32.mrb[0].mxu0
  %v1079 = vadd.f32 %v915, %v1078
  %v1080 = vpop.f32.mrb[0].mxu0
  %v1081 = vpop.f32.mrb[0].mxu0
  %v1082 = vadd.f32 %v918, %v1081
  %v1083 = vpop.f32.mrb[0].mxu0
  %1084 = vmatprep.mubr.bf16.mxu0 0
  %1085 = vmatmul.mubr.bf16.gmra.mrb[0].mxu0 %v1016
  %v1086 = vpop.f32.mrb[0].mxu0
  %v1087 = vadd.f32 %v923, %v1086
  %v1088 = vpop.f32.mrb[0].mxu0
  %v1089 = vpop.f32.mrb[0].mxu0
  %v1090 = vadd.f32 %v926, %v1089
  %v1091 = vpop.f32.mrb[0].mxu0
  %1092 = vmatprep.mubr.bf16.mxu0 0
  %1093 = vmatmul.mubr.bf16.gmra.mrb[0].mxu0 %v1019
  %v1094 = vpop.f32.mrb[0].mxu0
  %v1095 = vadd.f32 %v931, %v1094
  %v1096 = vpop.f32.mrb[0].mxu0
  %v1097 = vpop.f32.mrb[0].mxu0
  %v1098 = vadd.f32 %v934, %v1097
  %v1099 = vpop.f32.mrb[0].mxu0
  %1100 = vmatprep.mubr.bf16.mxu0 0
  %1101 = vmatmul.mubr.bf16.gmra.mrb[0].mxu0 %v1022
  %v1102 = vpop.f32.mrb[0].mxu0
  %v1103 = vadd.f32 %v939, %v1102
  %v1104 = vpop.f32.mrb[0].mxu0
  %v1105 = vpop.f32.mrb[0].mxu0
  %v1106 = vadd.f32 %v942, %v1105
  %v1107 = vpop.f32.mrb[0].mxu0
  %1108 = vmatprep.mubr.bf16.mxu0 0
  %1109 = vmatmul.mubr.bf16.gmra.mrb[0].mxu0 %v1025
  %v1110 = vpop.f32.mrb[0].mxu0
  %v1111 = vadd.f32 %v947, %v1110
  %v1112 = vpop.f32.mrb[0].mxu0
  %v1113 = vpop.f32.mrb[0].mxu0
  %v1114 = vadd.f32 %v950, %v1113
  %v1115 = vpop.f32.mrb[0].mxu0
  %1116 = vmatprep.mubr.bf16.mxu0 0
  %1117 = vmatmul.mubr.bf16.gmra.mrb[0].mxu0 %v1028
  %v1118 = vpop.f32.mrb[0].mxu0
  %v1119 = vadd.f32 %v955, %v1118
  %v1120 = vpop.f32.mrb[0].mxu0
  %v1121 = vpop.f32.mrb[0].mxu0
  %v1122 = vadd.f32 %v958, %v1121
  %v1123 = vpop.f32.mrb[0].mxu0
  %1124 = vmatprep.mubr.bf16.mxu0 0
  %1125 = vmatmul.mubr.bf16.gmra.mrb[0].mxu0 %v1031
  %v1126 = vpop.f32.mrb[0].mxu0
  %v1127 = vadd.f32 %v963, %v1126
  %v1128 = vpop.f32.mrb[0].mxu0
  %v1129 = vpop.f32.mrb[0].mxu0
  %v1130 = vadd.f32 %v966, %v1129
  %v1131 = vpop.f32.mrb[0].mxu0
  %1132 = vdwg.mxu0
  %v1133 = vld [vmem:[#allocation2] sm:$0xe]
  %v1134 = vld [vmem:[#allocation2 + $0x8] sm:$0xe]
  %v1135 = vld [vmem:[#allocation2 + $0x10] sm:$0xe]
  %v1136 = vld [vmem:[#allocation2 + $0x18] sm:$0xe]
  %v1137 = vld [vmem:[#allocation2 + $0x20] sm:$0xe]
  %v1138 = vld [vmem:[#allocation2 + $0x28] sm:$0xe]
  %v1139 = vld [vmem:[#allocation2 + $0x30] sm:$0xe]
  %v1140 = vld [vmem:[#allocation2 + $0x38] sm:$0xe]
  %v1141 = vld [vmem:[#allocation2 + $0x50] sm:$0xe]
  %v1142 = vld [vmem:[#allocation2 + $0x58] sm:$0xe]
  %v1143 = vld [vmem:[#allocation2 + $0x60] sm:$0xe]
  %v1144 = vld [vmem:[#allocation2 + $0x68] sm:$0xe]
  %v1145 = vld [vmem:[#allocation2 + $0x70] sm:$0xe]
  %v1146 = vld [vmem:[#allocation2 + $0x78] sm:$0xe]
  %v1147 = vld [vmem:[#allocation2 + $0x80] sm:$0xe]
  %v1148 = vld [vmem:[#allocation2 + $0x88] sm:$0xe]
  %vm1181 = vcmask 1042432
  %vm1182 = vcmask 1046532
  %vm1183 = vmor %vm1181, %vm1182
  %v1184 = vrot.slane %v1133, 5
  %v1185 = vrot.slane %v1184, 4
  %v1186 = vrot.slane %v574, 5
  %v1187 = vsel %vm1183, %v1185, %v1186
  %v1188 = vrot.slane %v1134, 5
  %v1189 = vrot.slane %v1188, 4
  %v1190 = vrot.slane %v575, 5
  %v1191 = vsel %vm1183, %v1189, %v1190
  %v1192 = vrot.slane %v1135, 5
  %v1193 = vrot.slane %v1192, 4
  %v1194 = vrot.slane %v576, 5
  %v1195 = vsel %vm1183, %v1193, %v1194
  %v1196 = vrot.slane %v1136, 5
  %v1197 = vrot.slane %v1196, 4
  %v1198 = vrot.slane %v577, 5
  %v1199 = vsel %vm1183, %v1197, %v1198
  %v1200 = vrot.slane %v1137, 5
  %v1201 = vrot.slane %v1200, 4
  %v1202 = vrot.slane %v578, 5
  %v1203 = vsel %vm1183, %v1201, %v1202
  %v1204 = vrot.slane %v1138, 5
  %v1205 = vrot.slane %v1204, 4
  %v1206 = vrot.slane %v579, 5
  %v1207 = vsel %vm1183, %v1205, %v1206
  %v1208 = vrot.slane %v1139, 5
  %v1209 = vrot.slane %v1208, 4
  %v1210 = vrot.slane %v580, 5
  %v1211 = vsel %vm1183, %v1209, %v1210
  %v1212 = vrot.slane %v1140, 5
  %v1213 = vrot.slane %v1212, 4
  %v1214 = vrot.slane %v581, 5
  %v1215 = vsel %vm1183, %v1213, %v1214
  %v1216 = vrot.slane %v1141, 5
  %v1217 = vrot.slane %v1216, 4
  %v1218 = vrot.slane %v582, 5
  %v1219 = vsel %vm1183, %v1217, %v1218
  %v1220 = vrot.slane %v1142, 5
  %v1221 = vrot.slane %v1220, 4
  %v1222 = vrot.slane %v583, 5
  %v1223 = vsel %vm1183, %v1221, %v1222
  %v1224 = vrot.slane %v1143, 5
  %v1225 = vrot.slane %v1224, 4
  %v1226 = vrot.slane %v584, 5
  %v1227 = vsel %vm1183, %v1225, %v1226
  %v1228 = vrot.slane %v1144, 5
  %v1229 = vrot.slane %v1228, 4
  %v1230 = vrot.slane %v585, 5
  %v1231 = vsel %vm1183, %v1229, %v1230
  %v1232 = vrot.slane %v1145, 5
  %v1233 = vrot.slane %v1232, 4
  %v1234 = vrot.slane %v586, 5
  %v1235 = vsel %vm1183, %v1233, %v1234
  %v1236 = vrot.slane %v1146, 5
  %v1237 = vrot.slane %v1236, 4
  %v1238 = vrot.slane %v587, 5
  %v1239 = vsel %vm1183, %v1237, %v1238
  %v1240 = vrot.slane %v1147, 5
  %v1241 = vrot.slane %v1240, 4
  %v1242 = vrot.slane %v588, 5
  %v1243 = vsel %vm1183, %v1241, %v1242
  %v1244 = vrot.slane %v1148, 5
  %v1245 = vrot.slane %v1244, 4
  %v1246 = vrot.slane %v589, 5
  %v1247 = vsel %vm1183, %v1245, %v1246
  %s1248 = scalar_lea.vmem %s3, 8
  %v1249 = vld [vmem:[%s1248] sm:$0xf]
  %v1250 = vunpack.c.l.b16 %v1187
  %v1251 = vunpack.c.l.b16 %v1191
  %v1252 = vunpack.c.l.b16 %v1195
  %v1253 = vunpack.c.l.b16 %v1199
  %v1254 = vunpack.c.l.b16 %v1203
  %v1255 = vunpack.c.l.b16 %v1207
  %v1256 = vunpack.c.l.b16 %v1211
  %v1257 = vunpack.c.l.b16 %v1215
  %v1258 = vunpack.c.l.b16 %v1219
  %v1259 = vunpack.c.l.b16 %v1223
  %v1260 = vunpack.c.l.b16 %v1227
  %v1261 = vunpack.c.l.b16 %v1231
  %v1262 = vunpack.c.l.b16 %v1235
  %v1263 = vunpack.c.l.b16 %v1239
  %v1264 = vunpack.c.l.b16 %v1243
  %v1265 = vunpack.c.l.b16 %v1247
  %v1266 = vpack.c.b16 %v1251, %v1250
  %v1267 = vpack.c.b16 %v1253, %v1252
  %v1268 = vpack.c.b16 %v1255, %v1254
  %v1269 = vpack.c.b16 %v1257, %v1256
  %v1270 = vpack.c.b16 %v1259, %v1258
  %v1271 = vpack.c.b16 %v1261, %v1260
  %v1272 = vpack.c.b16 %v1263, %v1262
  %v1273 = vpack.c.b16 %v1265, %v1264
  %v1275 = vsel %vm843, %v1266, 0
  %v1278 = vsel %vm843, %v1267, 0
  %v1281 = vsel %vm843, %v1268, 0
  %v1284 = vsel %vm843, %v1269, 0
  %v1287 = vsel %vm843, %v1270, 0
  %v1290 = vsel %vm843, %v1271, 0
  %v1293 = vsel %vm843, %v1272, 0
  %v1296 = vsel %vm843, %v1273, 0
  %v1299 = vsel %vm868, %v1249, 0
  %1301 = vmatprep.subr.bf16.mxu0 0
  %1302 = vmatpush1.bf16.msra.mxu0 %v1299
  %1303 = vmatprep.subr.bf16.mxu0 0
  %1304 = vmatpush1.bf16.msra.mxu0 0
  %1305 = vmatprep.subr.bf16.mxu0 0
  %1306 = vmatpush1.bf16.msra.mxu0 0
  %1307 = vmatprep.subr.bf16.mxu0 0
  %1308 = vmatpush1.bf16.msra.mxu0 0
  %1309 = vmatprep.subr.bf16.mxu0 0
  %1310 = vmatpush1.bf16.msra.mxu0 0
  %1311 = vmatprep.subr.bf16.mxu0 0
  %1312 = vmatpush1.bf16.msra.mxu0 0
  %1313 = vmatprep.subr.bf16.mxu0 0
  %1314 = vmatpush1.bf16.msra.mxu0 0
  %1315 = vmatprep.subr.bf16.mxu0 0
  %1316 = vmatpush1.bf16.msra.mxu0 0
  %1317 = vmatprep.subr.bf16.mxu0 0
  %1318 = vmatpush1.bf16.msra.mxu0 0
  %1319 = vmatprep.subr.bf16.mxu0 0
  %1320 = vmatpush1.bf16.msra.mxu0 0
  %1321 = vmatprep.subr.bf16.mxu0 0
  %1322 = vmatpush1.bf16.msra.mxu0 0
  %1323 = vmatprep.subr.bf16.mxu0 0
  %1324 = vmatpush1.bf16.msra.mxu0 0
  %1325 = vmatprep.subr.bf16.mxu0 0
  %1326 = vmatpush1.bf16.msra.mxu0 0
  %1327 = vmatprep.subr.bf16.mxu0 0
  %1328 = vmatpush1.bf16.msra.mxu0 0
  %1329 = vmatprep.subr.bf16.mxu0 0
  %1330 = vmatpush1.bf16.msra.mxu0 0
  %1331 = vmatprep.subr.bf16.mxu0 0
  %1332 = vmatpush1.bf16.msra.mxu0 0
  %1333 = vmatprep.mubr.bf16.mxu0 0
  %1334 = vmatmul.mubr.bf16.gmra.mrb[0].mxu0 %v1275
  %v1335 = vpop.f32.mrb[0].mxu0
  %v1336 = vadd.f32 0.0, %v1335
  %v1337 = vpop.f32.mrb[0].mxu0
  %v1338 = vpop.f32.mrb[0].mxu0
  %v1339 = vadd.f32 0.0, %v1338
  %v1340 = vpop.f32.mrb[0].mxu0
  %1341 = vmatprep.mubr.bf16.mxu0 0
  %1342 = vmatmul.mubr.bf16.gmra.mrb[0].mxu0 %v1278
  %v1343 = vpop.f32.mrb[0].mxu0
  %v1344 = vadd.f32 0.0, %v1343
  %v1345 = vpop.f32.mrb[0].mxu0
  %v1346 = vpop.f32.mrb[0].mxu0
  %v1347 = vadd.f32 0.0, %v1346
  %v1348 = vpop.f32.mrb[0].mxu0
  %1349 = vmatprep.mubr.bf16.mxu0 0
  %1350 = vmatmul.mubr.bf16.gmra.mrb[0].mxu0 %v1281
  %v1351 = vpop.f32.mrb[0].mxu0
  %v1352 = vadd.f32 0.0, %v1351
  %v1353 = vpop.f32.mrb[0].mxu0
  %v1354 = vpop.f32.mrb[0].mxu0
  %v1355 = vadd.f32 0.0, %v1354
  %v1356 = vpop.f32.mrb[0].mxu0
  %1357 = vmatprep.mubr.bf16.mxu0 0
  %1358 = vmatmul.mubr.bf16.gmra.mrb[0].mxu0 %v1284
  %v1359 = vpop.f32.mrb[0].mxu0
  %v1360 = vadd.f32 0.0, %v1359
  %v1361 = vpop.f32.mrb[0].mxu0
  %v1362 = vpop.f32.mrb[0].mxu0
  %v1363 = vadd.f32 0.0, %v1362
  %v1364 = vpop.f32.mrb[0].mxu0
  %1365 = vmatprep.mubr.bf16.mxu0 0
  %1366 = vmatmul.mubr.bf16.gmra.mrb[0].mxu0 %v1287
  %v1367 = vpop.f32.mrb[0].mxu0
  %v1368 = vadd.f32 0.0, %v1367
  %v1369 = vpop.f32.mrb[0].mxu0
  %v1370 = vpop.f32.mrb[0].mxu0
  %v1371 = vadd.f32 0.0, %v1370
  %v1372 = vpop.f32.mrb[0].mxu0
  %1373 = vmatprep.mubr.bf16.mxu0 0
  %1374 = vmatmul.mubr.bf16.gmra.mrb[0].mxu0 %v1290
  %v1375 = vpop.f32.mrb[0].mxu0
  %v1376 = vadd.f32 0.0, %v1375
  %v1377 = vpop.f32.mrb[0].mxu0
  %v1378 = vpop.f32.mrb[0].mxu0
  %v1379 = vadd.f32 0.0, %v1378
  %v1380 = vpop.f32.mrb[0].mxu0
  %1381 = vmatprep.mubr.bf16.mxu0 0
  %1382 = vmatmul.mubr.bf16.gmra.mrb[0].mxu0 %v1293
  %v1383 = vpop.f32.mrb[0].mxu0
  %v1384 = vadd.f32 0.0, %v1383
  %v1385 = vpop.f32.mrb[0].mxu0
  %v1386 = vpop.f32.mrb[0].mxu0
  %v1387 = vadd.f32 0.0, %v1386
  %v1388 = vpop.f32.mrb[0].mxu0
  %1389 = vmatprep.mubr.bf16.mxu0 0
  %1390 = vmatmul.mubr.bf16.gmra.mrb[0].mxu0 %v1296
  %v1391 = vpop.f32.mrb[0].mxu0
  %v1392 = vadd.f32 0.0, %v1391
  %v1393 = vpop.f32.mrb[0].mxu0
  %v1394 = vpop.f32.mrb[0].mxu0
  %v1395 = vadd.f32 0.0, %v1394
  %v1396 = vpop.f32.mrb[0].mxu0
  %1397 = vdwg.mxu0
  %v1398 = vadd.f32 %v1071, %v1336
  %v1399 = vadd.f32 %v1074, %v1339
  %v1400 = vadd.f32 %v1079, %v1344
  %v1401 = vadd.f32 %v1082, %v1347
  %v1402 = vadd.f32 %v1087, %v1352
  %v1403 = vadd.f32 %v1090, %v1355
  %v1404 = vadd.f32 %v1095, %v1360
  %v1405 = vadd.f32 %v1098, %v1363
  %v1406 = vadd.f32 %v1103, %v1368
  %v1407 = vadd.f32 %v1106, %v1371
  %v1408 = vadd.f32 %v1111, %v1376
  %v1409 = vadd.f32 %v1114, %v1379
  %v1410 = vadd.f32 %v1119, %v1384
  %v1411 = vadd.f32 %v1122, %v1387
  %v1412 = vadd.f32 %v1127, %v1392
  %v1413 = vadd.f32 %v1130, %v1395
  %v1414 = vld [vmem:[%s458] sm:$0xf]
  %v1415 = vld [vmem:[%s458 + $0x8] sm:$0xf]
  %v1416 = vld [vmem:[%s458 + $0x10] sm:$0xf]
  %v1417 = vld [vmem:[%s458 + $0x18] sm:$0xf]
  %v1418 = vld [vmem:[%s458 + $0x20] sm:$0xf]
  %v1419 = vld [vmem:[%s458 + $0x28] sm:$0xf]
  %v1420 = vld [vmem:[%s458 + $0x30] sm:$0xf]
  %v1421 = vld [vmem:[%s458 + $0x38] sm:$0xf]
  %v1422 = vld [vmem:[%s458 + $0x50] sm:$0xf]
  %v1423 = vld [vmem:[%s458 + $0x58] sm:$0xf]
  %v1424 = vld [vmem:[%s458 + $0x60] sm:$0xf]
  %v1425 = vld [vmem:[%s458 + $0x68] sm:$0xf]
  %v1426 = vld [vmem:[%s458 + $0x70] sm:$0xf]
  %v1427 = vld [vmem:[%s458 + $0x78] sm:$0xf]
  %v1428 = vld [vmem:[%s458 + $0x80] sm:$0xf]
  %v1429 = vld [vmem:[%s458 + $0x88] sm:$0xf]
  %s1430 = scalar_lea.vmem %s3, 12
  %v1431 = vld [vmem:[%s1430] sm:$0xf]
  %v1448 = vunpack.c.l.b16 %v1414
  %v1449 = vunpack.c.l.b16 %v1415
  %v1450 = vunpack.c.l.b16 %v1416
  %v1451 = vunpack.c.l.b16 %v1417
  %v1452 = vunpack.c.l.b16 %v1418
  %v1453 = vunpack.c.l.b16 %v1419
  %v1454 = vunpack.c.l.b16 %v1420
  %v1455 = vunpack.c.l.b16 %v1421
  %v1456 = vunpack.c.l.b16 %v1422
  %v1457 = vunpack.c.l.b16 %v1423
  %v1458 = vunpack.c.l.b16 %v1424
  %v1459 = vunpack.c.l.b16 %v1425
  %v1460 = vunpack.c.l.b16 %v1426
  %v1461 = vunpack.c.l.b16 %v1427
  %v1462 = vunpack.c.l.b16 %v1428
  %v1463 = vunpack.c.l.b16 %v1429
  %v1464 = vpack.c.b16 %v1449, %v1448
  %v1465 = vpack.c.b16 %v1451, %v1450
  %v1466 = vpack.c.b16 %v1453, %v1452
  %v1467 = vpack.c.b16 %v1455, %v1454
  %v1468 = vpack.c.b16 %v1457, %v1456
  %v1469 = vpack.c.b16 %v1459, %v1458
  %v1470 = vpack.c.b16 %v1461, %v1460
  %v1471 = vpack.c.b16 %v1463, %v1462
  %v1473 = vsel %vm843, %v1464, 0
  %v1476 = vsel %vm843, %v1465, 0
  %v1479 = vsel %vm843, %v1466, 0
  %v1482 = vsel %vm843, %v1467, 0
  %v1485 = vsel %vm843, %v1468, 0
  %v1488 = vsel %vm843, %v1469, 0
  %v1491 = vsel %vm843, %v1470, 0
  %v1494 = vsel %vm843, %v1471, 0
  %v1497 = vsel %vm868, %v1431, 0
  %1499 = vmatprep.subr.bf16.mxu0 0
  %1500 = vmatpush1.bf16.msra.mxu0 %v1497
  %1501 = vmatprep.subr.bf16.mxu0 0
  %1502 = vmatpush1.bf16.msra.mxu0 0
  %1503 = vmatprep.subr.bf16.mxu0 0
  %1504 = vmatpush1.bf16.msra.mxu0 0
  %1505 = vmatprep.subr.bf16.mxu0 0
  %1506 = vmatpush1.bf16.msra.mxu0 0
  %1507 = vmatprep.subr.bf16.mxu0 0
  %1508 = vmatpush1.bf16.msra.mxu0 0
  %1509 = vmatprep.subr.bf16.mxu0 0
  %1510 = vmatpush1.bf16.msra.mxu0 0
  %1511 = vmatprep.subr.bf16.mxu0 0
  %1512 = vmatpush1.bf16.msra.mxu0 0
  %1513 = vmatprep.subr.bf16.mxu0 0
  %1514 = vmatpush1.bf16.msra.mxu0 0
  %1515 = vmatprep.subr.bf16.mxu0 0
  %1516 = vmatpush1.bf16.msra.mxu0 0
  %1517 = vmatprep.subr.bf16.mxu0 0
  %1518 = vmatpush1.bf16.msra.mxu0 0
  %1519 = vmatprep.subr.bf16.mxu0 0
  %1520 = vmatpush1.bf16.msra.mxu0 0
  %1521 = vmatprep.subr.bf16.mxu0 0
  %1522 = vmatpush1.bf16.msra.mxu0 0
  %1523 = vmatprep.subr.bf16.mxu0 0
  %1524 = vmatpush1.bf16.msra.mxu0 0
  %1525 = vmatprep.subr.bf16.mxu0 0
  %1526 = vmatpush1.bf16.msra.mxu0 0
  %1527 = vmatprep.subr.bf16.mxu0 0
  %1528 = vmatpush1.bf16.msra.mxu0 0
  %1529 = vmatprep.subr.bf16.mxu0 0
  %1530 = vmatpush1.bf16.msra.mxu0 0
  %1531 = vmatprep.mubr.bf16.mxu0 0
  %1532 = vmatmul.mubr.bf16.gmra.mrb[0].mxu0 %v1473
  %v1533 = vpop.f32.mrb[0].mxu0
  %v1534 = vadd.f32 0.0, %v1533
  %v1535 = vpop.f32.mrb[0].mxu0
  %v1536 = vpop.f32.mrb[0].mxu0
  %v1537 = vadd.f32 0.0, %v1536
  %v1538 = vpop.f32.mrb[0].mxu0
  %1539 = vmatprep.mubr.bf16.mxu0 0
  %1540 = vmatmul.mubr.bf16.gmra.mrb[0].mxu0 %v1476
  %v1541 = vpop.f32.mrb[0].mxu0
  %v1542 = vadd.f32 0.0, %v1541
  %v1543 = vpop.f32.mrb[0].mxu0
  %v1544 = vpop.f32.mrb[0].mxu0
  %v1545 = vadd.f32 0.0, %v1544
  %v1546 = vpop.f32.mrb[0].mxu0
  %1547 = vmatprep.mubr.bf16.mxu0 0
  %1548 = vmatmul.mubr.bf16.gmra.mrb[0].mxu0 %v1479
  %v1549 = vpop.f32.mrb[0].mxu0
  %v1550 = vadd.f32 0.0, %v1549
  %v1551 = vpop.f32.mrb[0].mxu0
  %v1552 = vpop.f32.mrb[0].mxu0
  %v1553 = vadd.f32 0.0, %v1552
  %v1554 = vpop.f32.mrb[0].mxu0
  %1555 = vmatprep.mubr.bf16.mxu0 0
  %1556 = vmatmul.mubr.bf16.gmra.mrb[0].mxu0 %v1482
  %v1557 = vpop.f32.mrb[0].mxu0
  %v1558 = vadd.f32 0.0, %v1557
  %v1559 = vpop.f32.mrb[0].mxu0
  %v1560 = vpop.f32.mrb[0].mxu0
  %v1561 = vadd.f32 0.0, %v1560
  %v1562 = vpop.f32.mrb[0].mxu0
  %1563 = vmatprep.mubr.bf16.mxu0 0
  %1564 = vmatmul.mubr.bf16.gmra.mrb[0].mxu0 %v1485
  %v1565 = vpop.f32.mrb[0].mxu0
  %v1566 = vadd.f32 0.0, %v1565
  %v1567 = vpop.f32.mrb[0].mxu0
  %v1568 = vpop.f32.mrb[0].mxu0
  %v1569 = vadd.f32 0.0, %v1568
  %v1570 = vpop.f32.mrb[0].mxu0
  %1571 = vmatprep.mubr.bf16.mxu0 0
  %1572 = vmatmul.mubr.bf16.gmra.mrb[0].mxu0 %v1488
  %v1573 = vpop.f32.mrb[0].mxu0
  %v1574 = vadd.f32 0.0, %v1573
  %v1575 = vpop.f32.mrb[0].mxu0
  %v1576 = vpop.f32.mrb[0].mxu0
  %v1577 = vadd.f32 0.0, %v1576
  %v1578 = vpop.f32.mrb[0].mxu0
  %1579 = vmatprep.mubr.bf16.mxu0 0
  %1580 = vmatmul.mubr.bf16.gmra.mrb[0].mxu0 %v1491
  %v1581 = vpop.f32.mrb[0].mxu0
  %v1582 = vadd.f32 0.0, %v1581
  %v1583 = vpop.f32.mrb[0].mxu0
  %v1584 = vpop.f32.mrb[0].mxu0
  %v1585 = vadd.f32 0.0, %v1584
  %v1586 = vpop.f32.mrb[0].mxu0
  %1587 = vmatprep.mubr.bf16.mxu0 0
  %1588 = vmatmul.mubr.bf16.gmra.mrb[0].mxu0 %v1494
  %v1589 = vpop.f32.mrb[0].mxu0
  %v1590 = vadd.f32 0.0, %v1589
  %v1591 = vpop.f32.mrb[0].mxu0
  %v1592 = vpop.f32.mrb[0].mxu0
  %v1593 = vadd.f32 0.0, %v1592
  %v1594 = vpop.f32.mrb[0].mxu0
  %1595 = vdwg.mxu0
  %v1596 = vadd.f32 %v1398, %v1534
  %v1597 = vadd.f32 %v1399, %v1537
  %v1598 = vadd.f32 %v1400, %v1542
  %v1599 = vadd.f32 %v1401, %v1545
  %v1600 = vadd.f32 %v1402, %v1550
  %v1601 = vadd.f32 %v1403, %v1553
  %v1602 = vadd.f32 %v1404, %v1558
  %v1603 = vadd.f32 %v1405, %v1561
  %v1604 = vadd.f32 %v1406, %v1566
  %v1605 = vadd.f32 %v1407, %v1569
  %v1606 = vadd.f32 %v1408, %v1574
  %v1607 = vadd.f32 %v1409, %v1577
  %v1608 = vadd.f32 %v1410, %v1582
  %v1609 = vadd.f32 %v1411, %v1585
  %v1610 = vadd.f32 %v1412, %v1590
  %v1611 = vadd.f32 %v1413, %v1593
  %v1612 = vld [vmem:[%s458] sm:$0xf]
  %v1613 = vld [vmem:[%s458 + $0x4] sm:$0x1]
  %v1614 = vld [vmem:[%s458 + $0x8] sm:$0xf]
  %v1615 = vld [vmem:[%s458 + $0xc] sm:$0x1]
  %v1616 = vld [vmem:[%s458 + $0x10] sm:$0xf]
  %v1617 = vld [vmem:[%s458 + $0x14] sm:$0x1]
  %v1618 = vld [vmem:[%s458 + $0x18] sm:$0xf]
  %v1619 = vld [vmem:[%s458 + $0x1c] sm:$0x1]
  %v1620 = vld [vmem:[%s458 + $0x20] sm:$0xf]
  %v1621 = vld [vmem:[%s458 + $0x24] sm:$0x1]
  %v1622 = vld [vmem:[%s458 + $0x28] sm:$0xf]
  %v1623 = vld [vmem:[%s458 + $0x2c] sm:$0x1]
  %v1624 = vld [vmem:[%s458 + $0x30] sm:$0xf]
  %v1625 = vld [vmem:[%s458 + $0x34] sm:$0x1]
  %v1626 = vld [vmem:[%s458 + $0x38] sm:$0xf]
  %v1627 = vld [vmem:[%s458 + $0x3c] sm:$0x1]
  %v1628 = vld [vmem:[%s458 + $0x50] sm:$0xf]
  %v1629 = vld [vmem:[%s458 + $0x54] sm:$0x1]
  %v1630 = vld [vmem:[%s458 + $0x58] sm:$0xf]
  %v1631 = vld [vmem:[%s458 + $0x5c] sm:$0x1]
  %v1632 = vld [vmem:[%s458 + $0x60] sm:$0xf]
  %v1633 = vld [vmem:[%s458 + $0x64] sm:$0x1]
  %v1634 = vld [vmem:[%s458 + $0x68] sm:$0xf]
  %v1635 = vld [vmem:[%s458 + $0x6c] sm:$0x1]
  %v1636 = vld [vmem:[%s458 + $0x70] sm:$0xf]
  %v1637 = vld [vmem:[%s458 + $0x74] sm:$0x1]
  %v1638 = vld [vmem:[%s458 + $0x78] sm:$0xf]
  %v1639 = vld [vmem:[%s458 + $0x7c] sm:$0x1]
  %v1640 = vld [vmem:[%s458 + $0x80] sm:$0xf]
  %v1641 = vld [vmem:[%s458 + $0x84] sm:$0x1]
  %v1642 = vld [vmem:[%s458 + $0x88] sm:$0xf]
  %v1643 = vld [vmem:[%s458 + $0x8c] sm:$0x1]
  %v1645 = vshrl.u32 %v1612, 16
  %v1647 = vrot.slane %v1645, 4
  %v1648 = vshll.u32 %v1612, 16
  %v1650 = vrot.slane %v1648, 5
  %v1651 = vor.u32 %v1647, %v1650
  %v1652 = vrot.slane %v1651, 4
  %v1654 = vshll.u32 %v1613, 16
  %v1656 = vrot.slane %v1654, 5
  %v1657 = vsel %vm592, %v1652, %v1656
  %v1659 = vshrl.u32 %v1614, 16
  %v1661 = vrot.slane %v1659, 4
  %v1662 = vshll.u32 %v1614, 16
  %v1664 = vrot.slane %v1662, 5
  %v1665 = vor.u32 %v1661, %v1664
  %v1666 = vrot.slane %v1665, 4
  %v1668 = vshll.u32 %v1615, 16
  %v1670 = vrot.slane %v1668, 5
  %v1671 = vsel %vm592, %v1666, %v1670
  %v1673 = vshrl.u32 %v1616, 16
  %v1675 = vrot.slane %v1673, 4
  %v1676 = vshll.u32 %v1616, 16
  %v1678 = vrot.slane %v1676, 5
  %v1679 = vor.u32 %v1675, %v1678
  %v1680 = vrot.slane %v1679, 4
  %v1682 = vshll.u32 %v1617, 16
  %v1684 = vrot.slane %v1682, 5
  %v1685 = vsel %vm592, %v1680, %v1684
  %v1687 = vshrl.u32 %v1618, 16
  %v1689 = vrot.slane %v1687, 4
  %v1690 = vshll.u32 %v1618, 16
  %v1692 = vrot.slane %v1690, 5
  %v1693 = vor.u32 %v1689, %v1692
  %v1694 = vrot.slane %v1693, 4
  %v1696 = vshll.u32 %v1619, 16
  %v1698 = vrot.slane %v1696, 5
  %v1699 = vsel %vm592, %v1694, %v1698
  %v1701 = vshrl.u32 %v1620, 16
  %v1703 = vrot.slane %v1701, 4
  %v1704 = vshll.u32 %v1620, 16
  %v1706 = vrot.slane %v1704, 5
  %v1707 = vor.u32 %v1703, %v1706
  %v1708 = vrot.slane %v1707, 4
  %v1710 = vshll.u32 %v1621, 16
  %v1712 = vrot.slane %v1710, 5
  %v1713 = vsel %vm592, %v1708, %v1712
  %v1715 = vshrl.u32 %v1622, 16
  %v1717 = vrot.slane %v1715, 4
  %v1718 = vshll.u32 %v1622, 16
  %v1720 = vrot.slane %v1718, 5
  %v1721 = vor.u32 %v1717, %v1720
  %v1722 = vrot.slane %v1721, 4
  %v1724 = vshll.u32 %v1623, 16
  %v1726 = vrot.slane %v1724, 5
  %v1727 = vsel %vm592, %v1722, %v1726
  %v1729 = vshrl.u32 %v1624, 16
  %v1731 = vrot.slane %v1729, 4
  %v1732 = vshll.u32 %v1624, 16
  %v1734 = vrot.slane %v1732, 5
  %v1735 = vor.u32 %v1731, %v1734
  %v1736 = vrot.slane %v1735, 4
  %v1738 = vshll.u32 %v1625, 16
  %v1740 = vrot.slane %v1738, 5
  %v1741 = vsel %vm592, %v1736, %v1740
  %v1743 = vshrl.u32 %v1626, 16
  %v1745 = vrot.slane %v1743, 4
  %v1746 = vshll.u32 %v1626, 16
  %v1748 = vrot.slane %v1746, 5
  %v1749 = vor.u32 %v1745, %v1748
  %v1750 = vrot.slane %v1749, 4
  %v1752 = vshll.u32 %v1627, 16
  %v1754 = vrot.slane %v1752, 5
  %v1755 = vsel %vm592, %v1750, %v1754
  %v1757 = vshrl.u32 %v1628, 16
  %v1759 = vrot.slane %v1757, 4
  %v1760 = vshll.u32 %v1628, 16
  %v1762 = vrot.slane %v1760, 5
  %v1763 = vor.u32 %v1759, %v1762
  %v1764 = vrot.slane %v1763, 4
  %v1766 = vshll.u32 %v1629, 16
  %v1768 = vrot.slane %v1766, 5
  %v1769 = vsel %vm592, %v1764, %v1768
  %v1771 = vshrl.u32 %v1630, 16
  %v1773 = vrot.slane %v1771, 4
  %v1774 = vshll.u32 %v1630, 16
  %v1776 = vrot.slane %v1774, 5
  %v1777 = vor.u32 %v1773, %v1776
  %v1778 = vrot.slane %v1777, 4
  %v1780 = vshll.u32 %v1631, 16
  %v1782 = vrot.slane %v1780, 5
  %v1783 = vsel %vm592, %v1778, %v1782
  %v1785 = vshrl.u32 %v1632, 16
  %v1787 = vrot.slane %v1785, 4
  %v1788 = vshll.u32 %v1632, 16
  %v1790 = vrot.slane %v1788, 5
  %v1791 = vor.u32 %v1787, %v1790
  %v1792 = vrot.slane %v1791, 4
  %v1794 = vshll.u32 %v1633, 16
  %v1796 = vrot.slane %v1794, 5
  %v1797 = vsel %vm592, %v1792, %v1796
  %v1799 = vshrl.u32 %v1634, 16
  %v1801 = vrot.slane %v1799, 4
  %v1802 = vshll.u32 %v1634, 16
  %v1804 = vrot.slane %v1802, 5
  %v1805 = vor.u32 %v1801, %v1804
  %v1806 = vrot.slane %v1805, 4
  %v1808 = vshll.u32 %v1635, 16
  %v1810 = vrot.slane %v1808, 5
  %v1811 = vsel %vm592, %v1806, %v1810
  %v1813 = vshrl.u32 %v1636, 16
  %v1815 = vrot.slane %v1813, 4
  %v1816 = vshll.u32 %v1636, 16
  %v1818 = vrot.slane %v1816, 5
  %v1819 = vor.u32 %v1815, %v1818
  %v1820 = vrot.slane %v1819, 4
  %v1822 = vshll.u32 %v1637, 16
  %v1824 = vrot.slane %v1822, 5
  %v1825 = vsel %vm592, %v1820, %v1824
  %v1827 = vshrl.u32 %v1638, 16
  %v1829 = vrot.slane %v1827, 4
  %v1830 = vshll.u32 %v1638, 16
  %v1832 = vrot.slane %v1830, 5
  %v1833 = vor.u32 %v1829, %v1832
  %v1834 = vrot.slane %v1833, 4
  %v1836 = vshll.u32 %v1639, 16
  %v1838 = vrot.slane %v1836, 5
  %v1839 = vsel %vm592, %v1834, %v1838
  %v1841 = vshrl.u32 %v1640, 16
  %v1843 = vrot.slane %v1841, 4
  %v1844 = vshll.u32 %v1640, 16
  %v1846 = vrot.slane %v1844, 5
  %v1847 = vor.u32 %v1843, %v1846
  %v1848 = vrot.slane %v1847, 4
  %v1850 = vshll.u32 %v1641, 16
  %v1852 = vrot.slane %v1850, 5
  %v1853 = vsel %vm592, %v1848, %v1852
  %v1855 = vshrl.u32 %v1642, 16
  %v1857 = vrot.slane %v1855, 4
  %v1858 = vshll.u32 %v1642, 16
  %v1860 = vrot.slane %v1858, 5
  %v1861 = vor.u32 %v1857, %v1860
  %v1862 = vrot.slane %v1861, 4
  %v1864 = vshll.u32 %v1643, 16
  %v1866 = vrot.slane %v1864, 5
  %v1867 = vsel %vm592, %v1862, %v1866
  %s1868 = scalar_lea.vmem %s3, 16
  %v1869 = vld [vmem:[%s1868] sm:$0xf]
  %v1870 = vunpack.c.l.b16 %v1657
  %v1871 = vunpack.c.l.b16 %v1671
  %v1872 = vunpack.c.l.b16 %v1685
  %v1873 = vunpack.c.l.b16 %v1699
  %v1874 = vunpack.c.l.b16 %v1713
  %v1875 = vunpack.c.l.b16 %v1727
  %v1876 = vunpack.c.l.b16 %v1741
  %v1877 = vunpack.c.l.b16 %v1755
  %v1878 = vunpack.c.l.b16 %v1769
  %v1879 = vunpack.c.l.b16 %v1783
  %v1880 = vunpack.c.l.b16 %v1797
  %v1881 = vunpack.c.l.b16 %v1811
  %v1882 = vunpack.c.l.b16 %v1825
  %v1883 = vunpack.c.l.b16 %v1839
  %v1884 = vunpack.c.l.b16 %v1853
  %v1885 = vunpack.c.l.b16 %v1867
  %v1886 = vpack.c.b16 %v1871, %v1870
  %v1887 = vpack.c.b16 %v1873, %v1872
  %v1888 = vpack.c.b16 %v1875, %v1874
  %v1889 = vpack.c.b16 %v1877, %v1876
  %v1890 = vpack.c.b16 %v1879, %v1878
  %v1891 = vpack.c.b16 %v1881, %v1880
  %v1892 = vpack.c.b16 %v1883, %v1882
  %v1893 = vpack.c.b16 %v1885, %v1884
  %v1895 = vsel %vm843, %v1886, 0
  %v1898 = vsel %vm843, %v1887, 0
  %v1901 = vsel %vm843, %v1888, 0
  %v1904 = vsel %vm843, %v1889, 0
  %v1907 = vsel %vm843, %v1890, 0
  %v1910 = vsel %vm843, %v1891, 0
  %v1913 = vsel %vm843, %v1892, 0
  %v1916 = vsel %vm843, %v1893, 0
  %v1919 = vsel %vm868, %v1869, 0
  %1921 = vmatprep.subr.bf16.mxu0 0
  %1922 = vmatpush1.bf16.msra.mxu0 %v1919
  %1923 = vmatprep.subr.bf16.mxu0 0
  %1924 = vmatpush1.bf16.msra.mxu0 0
  %1925 = vmatprep.subr.bf16.mxu0 0
  %1926 = vmatpush1.bf16.msra.mxu0 0
  %1927 = vmatprep.subr.bf16.mxu0 0
  %1928 = vmatpush1.bf16.msra.mxu0 0
  %1929 = vmatprep.subr.bf16.mxu0 0
  %1930 = vmatpush1.bf16.msra.mxu0 0
  %1931 = vmatprep.subr.bf16.mxu0 0
  %1932 = vmatpush1.bf16.msra.mxu0 0
  %1933 = vmatprep.subr.bf16.mxu0 0
  %1934 = vmatpush1.bf16.msra.mxu0 0
  %1935 = vmatprep.subr.bf16.mxu0 0
  %1936 = vmatpush1.bf16.msra.mxu0 0
  %1937 = vmatprep.subr.bf16.mxu0 0
  %1938 = vmatpush1.bf16.msra.mxu0 0
  %1939 = vmatprep.subr.bf16.mxu0 0
  %1940 = vmatpush1.bf16.msra.mxu0 0
  %1941 = vmatprep.subr.bf16.mxu0 0
  %1942 = vmatpush1.bf16.msra.mxu0 0
  %1943 = vmatprep.subr.bf16.mxu0 0
  %1944 = vmatpush1.bf16.msra.mxu0 0
  %1945 = vmatprep.subr.bf16.mxu0 0
  %1946 = vmatpush1.bf16.msra.mxu0 0
  %1947 = vmatprep.subr.bf16.mxu0 0
  %1948 = vmatpush1.bf16.msra.mxu0 0
  %1949 = vmatprep.subr.bf16.mxu0 0
  %1950 = vmatpush1.bf16.msra.mxu0 0
  %1951 = vmatprep.subr.bf16.mxu0 0
  %1952 = vmatpush1.bf16.msra.mxu0 0
  %1953 = vmatprep.mubr.bf16.mxu0 0
  %1954 = vmatmul.mubr.bf16.gmra.mrb[0].mxu0 %v1895
  %v1955 = vpop.f32.mrb[0].mxu0
  %v1956 = vadd.f32 0.0, %v1955
  %v1957 = vpop.f32.mrb[0].mxu0
  %v1958 = vpop.f32.mrb[0].mxu0
  %v1959 = vadd.f32 0.0, %v1958
  %v1960 = vpop.f32.mrb[0].mxu0
  %1961 = vmatprep.mubr.bf16.mxu0 0
  %1962 = vmatmul.mubr.bf16.gmra.mrb[0].mxu0 %v1898
  %v1963 = vpop.f32.mrb[0].mxu0
  %v1964 = vadd.f32 0.0, %v1963
  %v1965 = vpop.f32.mrb[0].mxu0
  %v1966 = vpop.f32.mrb[0].mxu0
  %v1967 = vadd.f32 0.0, %v1966
  %v1968 = vpop.f32.mrb[0].mxu0
  %1969 = vmatprep.mubr.bf16.mxu0 0
  %1970 = vmatmul.mubr.bf16.gmra.mrb[0].mxu0 %v1901
  %v1971 = vpop.f32.mrb[0].mxu0
  %v1972 = vadd.f32 0.0, %v1971
  %v1973 = vpop.f32.mrb[0].mxu0
  %v1974 = vpop.f32.mrb[0].mxu0
  %v1975 = vadd.f32 0.0, %v1974
  %v1976 = vpop.f32.mrb[0].mxu0
  %1977 = vmatprep.mubr.bf16.mxu0 0
  %1978 = vmatmul.mubr.bf16.gmra.mrb[0].mxu0 %v1904
  %v1979 = vpop.f32.mrb[0].mxu0
  %v1980 = vadd.f32 0.0, %v1979
  %v1981 = vpop.f32.mrb[0].mxu0
  %v1982 = vpop.f32.mrb[0].mxu0
  %v1983 = vadd.f32 0.0, %v1982
  %v1984 = vpop.f32.mrb[0].mxu0
  %1985 = vmatprep.mubr.bf16.mxu0 0
  %1986 = vmatmul.mubr.bf16.gmra.mrb[0].mxu0 %v1907
  %v1987 = vpop.f32.mrb[0].mxu0
  %v1988 = vadd.f32 0.0, %v1987
  %v1989 = vpop.f32.mrb[0].mxu0
  %v1990 = vpop.f32.mrb[0].mxu0
  %v1991 = vadd.f32 0.0, %v1990
  %v1992 = vpop.f32.mrb[0].mxu0
  %1993 = vmatprep.mubr.bf16.mxu0 0
  %1994 = vmatmul.mubr.bf16.gmra.mrb[0].mxu0 %v1910
  %v1995 = vpop.f32.mrb[0].mxu0
  %v1996 = vadd.f32 0.0, %v1995
  %v1997 = vpop.f32.mrb[0].mxu0
  %v1998 = vpop.f32.mrb[0].mxu0
  %v1999 = vadd.f32 0.0, %v1998
  %v2000 = vpop.f32.mrb[0].mxu0
  %2001 = vmatprep.mubr.bf16.mxu0 0
  %2002 = vmatmul.mubr.bf16.gmra.mrb[0].mxu0 %v1913
  %v2003 = vpop.f32.mrb[0].mxu0
  %v2004 = vadd.f32 0.0, %v2003
  %v2005 = vpop.f32.mrb[0].mxu0
  %v2006 = vpop.f32.mrb[0].mxu0
  %v2007 = vadd.f32 0.0, %v2006
  %v2008 = vpop.f32.mrb[0].mxu0
  %2009 = vmatprep.mubr.bf16.mxu0 0
  %2010 = vmatmul.mubr.bf16.gmra.mrb[0].mxu0 %v1916
  %v2011 = vpop.f32.mrb[0].mxu0
  %v2012 = vadd.f32 0.0, %v2011
  %v2013 = vpop.f32.mrb[0].mxu0
  %v2014 = vpop.f32.mrb[0].mxu0
  %v2015 = vadd.f32 0.0, %v2014
  %v2016 = vpop.f32.mrb[0].mxu0
  %2017 = vdwg.mxu0
  %v2018 = vadd.f32 %v1596, %v1956
  %v2019 = vadd.f32 %v1597, %v1959
  %v2020 = vadd.f32 %v1598, %v1964
  %v2021 = vadd.f32 %v1599, %v1967
  %v2022 = vadd.f32 %v1600, %v1972
  %v2023 = vadd.f32 %v1601, %v1975
  %v2024 = vadd.f32 %v1602, %v1980
  %v2025 = vadd.f32 %v1603, %v1983
  %v2026 = vadd.f32 %v1604, %v1988
  %v2027 = vadd.f32 %v1605, %v1991
  %v2028 = vadd.f32 %v1606, %v1996
  %v2029 = vadd.f32 %v1607, %v1999
  %v2030 = vadd.f32 %v1608, %v2004
  %v2031 = vadd.f32 %v1609, %v2007
  %v2032 = vadd.f32 %v1610, %v2012
  %v2033 = vadd.f32 %v1611, %v2015
  %v2034 = vld [vmem:[%s458] sm:$0xe]
  %v2035 = vld [vmem:[%s458 + $0x8] sm:$0xe]
  %v2036 = vld [vmem:[%s458 + $0x10] sm:$0xe]
  %v2037 = vld [vmem:[%s458 + $0x18] sm:$0xe]
  %v2038 = vld [vmem:[%s458 + $0x20] sm:$0xe]
  %v2039 = vld [vmem:[%s458 + $0x28] sm:$0xe]
  %v2040 = vld [vmem:[%s458 + $0x30] sm:$0xe]
  %v2041 = vld [vmem:[%s458 + $0x38] sm:$0xe]
  %v2042 = vld [vmem:[%s458 + $0x50] sm:$0xe]
  %v2043 = vld [vmem:[%s458 + $0x58] sm:$0xe]
  %v2044 = vld [vmem:[%s458 + $0x60] sm:$0xe]
  %v2045 = vld [vmem:[%s458 + $0x68] sm:$0xe]
  %v2046 = vld [vmem:[%s458 + $0x70] sm:$0xe]
  %v2047 = vld [vmem:[%s458 + $0x78] sm:$0xe]
  %v2048 = vld [vmem:[%s458 + $0x80] sm:$0xe]
  %v2049 = vld [vmem:[%s458 + $0x88] sm:$0xe]
  %v2082 = vrot.slane %v2034, 5
  %v2083 = vrot.slane %v2082, 4
  %v2084 = vrot.slane %v1613, 5
  %v2085 = vsel %vm1183, %v2083, %v2084
  %v2086 = vrot.slane %v2035, 5
  %v2087 = vrot.slane %v2086, 4
  %v2088 = vrot.slane %v1615, 5
  %v2089 = vsel %vm1183, %v2087, %v2088
  %v2090 = vrot.slane %v2036, 5
  %v2091 = vrot.slane %v2090, 4
  %v2092 = vrot.slane %v1617, 5
  %v2093 = vsel %vm1183, %v2091, %v2092
  %v2094 = vrot.slane %v2037, 5
  %v2095 = vrot.slane %v2094, 4
  %v2096 = vrot.slane %v1619, 5
  %v2097 = vsel %vm1183, %v2095, %v2096
  %v2098 = vrot.slane %v2038, 5
  %v2099 = vrot.slane %v2098, 4
  %v2100 = vrot.slane %v1621, 5
  %v2101 = vsel %vm1183, %v2099, %v2100
  %v2102 = vrot.slane %v2039, 5
  %v2103 = vrot.slane %v2102, 4
  %v2104 = vrot.slane %v1623, 5
  %v2105 = vsel %vm1183, %v2103, %v2104
  %v2106 = vrot.slane %v2040, 5
  %v2107 = vrot.slane %v2106, 4
  %v2108 = vrot.slane %v1625, 5
  %v2109 = vsel %vm1183, %v2107, %v2108
  %v2110 = vrot.slane %v2041, 5
  %v2111 = vrot.slane %v2110, 4
  %v2112 = vrot.slane %v1627, 5
  %v2113 = vsel %vm1183, %v2111, %v2112
  %v2114 = vrot.slane %v2042, 5
  %v2115 = vrot.slane %v2114, 4
  %v2116 = vrot.slane %v1629, 5
  %v2117 = vsel %vm1183, %v2115, %v2116
  %v2118 = vrot.slane %v2043, 5
  %v2119 = vrot.slane %v2118, 4
  %v2120 = vrot.slane %v1631, 5
  %v2121 = vsel %vm1183, %v2119, %v2120
  %v2122 = vrot.slane %v2044, 5
  %v2123 = vrot.slane %v2122, 4
  %v2124 = vrot.slane %v1633, 5
  %v2125 = vsel %vm1183, %v2123, %v2124
  %v2126 = vrot.slane %v2045, 5
  %v2127 = vrot.slane %v2126, 4
  %v2128 = vrot.slane %v1635, 5
  %v2129 = vsel %vm1183, %v2127, %v2128
  %v2130 = vrot.slane %v2046, 5
  %v2131 = vrot.slane %v2130, 4
  %v2132 = vrot.slane %v1637, 5
  %v2133 = vsel %vm1183, %v2131, %v2132
  %v2134 = vrot.slane %v2047, 5
  %v2135 = vrot.slane %v2134, 4
  %v2136 = vrot.slane %v1639, 5
  %v2137 = vsel %vm1183, %v2135, %v2136
  %v2138 = vrot.slane %v2048, 5
  %v2139 = vrot.slane %v2138, 4
  %v2140 = vrot.slane %v1641, 5
  %v2141 = vsel %vm1183, %v2139, %v2140
  %v2142 = vrot.slane %v2049, 5
  %v2143 = vrot.slane %v2142, 4
  %v2144 = vrot.slane %v1643, 5
  %v2145 = vsel %vm1183, %v2143, %v2144
  %s2146 = scalar_lea.vmem %s3, 20
  %v2147 = vld [vmem:[%s2146] sm:$0xf]
  %v2148 = vunpack.c.l.b16 %v2085
  %v2149 = vunpack.c.l.b16 %v2089
  %v2150 = vunpack.c.l.b16 %v2093
  %v2151 = vunpack.c.l.b16 %v2097
  %v2152 = vunpack.c.l.b16 %v2101
  %v2153 = vunpack.c.l.b16 %v2105
  %v2154 = vunpack.c.l.b16 %v2109
  %v2155 = vunpack.c.l.b16 %v2113
  %v2156 = vunpack.c.l.b16 %v2117
  %v2157 = vunpack.c.l.b16 %v2121
  %v2158 = vunpack.c.l.b16 %v2125
  %v2159 = vunpack.c.l.b16 %v2129
  %v2160 = vunpack.c.l.b16 %v2133
  %v2161 = vunpack.c.l.b16 %v2137
  %v2162 = vunpack.c.l.b16 %v2141
  %v2163 = vunpack.c.l.b16 %v2145
  %v2164 = vpack.c.b16 %v2149, %v2148
  %v2165 = vpack.c.b16 %v2151, %v2150
  %v2166 = vpack.c.b16 %v2153, %v2152
  %v2167 = vpack.c.b16 %v2155, %v2154
  %v2168 = vpack.c.b16 %v2157, %v2156
  %v2169 = vpack.c.b16 %v2159, %v2158
  %v2170 = vpack.c.b16 %v2161, %v2160
  %v2171 = vpack.c.b16 %v2163, %v2162
  %v2173 = vsel %vm843, %v2164, 0
  %v2176 = vsel %vm843, %v2165, 0
  %v2179 = vsel %vm843, %v2166, 0
  %v2182 = vsel %vm843, %v2167, 0
  %v2185 = vsel %vm843, %v2168, 0
  %v2188 = vsel %vm843, %v2169, 0
  %v2191 = vsel %vm843, %v2170, 0
  %v2194 = vsel %vm843, %v2171, 0
  %v2197 = vsel %vm868, %v2147, 0
  %2199 = vmatprep.subr.bf16.mxu0 0
  %2200 = vmatpush1.bf16.msra.mxu0 %v2197
  %2201 = vmatprep.subr.bf16.mxu0 0
  %2202 = vmatpush1.bf16.msra.mxu0 0
  %2203 = vmatprep.subr.bf16.mxu0 0
  %2204 = vmatpush1.bf16.msra.mxu0 0
  %2205 = vmatprep.subr.bf16.mxu0 0
  %2206 = vmatpush1.bf16.msra.mxu0 0
  %2207 = vmatprep.subr.bf16.mxu0 0
  %2208 = vmatpush1.bf16.msra.mxu0 0
  %2209 = vmatprep.subr.bf16.mxu0 0
  %2210 = vmatpush1.bf16.msra.mxu0 0
  %2211 = vmatprep.subr.bf16.mxu0 0
  %2212 = vmatpush1.bf16.msra.mxu0 0
  %2213 = vmatprep.subr.bf16.mxu0 0
  %2214 = vmatpush1.bf16.msra.mxu0 0
  %2215 = vmatprep.subr.bf16.mxu0 0
  %2216 = vmatpush1.bf16.msra.mxu0 0
  %2217 = vmatprep.subr.bf16.mxu0 0
  %2218 = vmatpush1.bf16.msra.mxu0 0
  %2219 = vmatprep.subr.bf16.mxu0 0
  %2220 = vmatpush1.bf16.msra.mxu0 0
  %2221 = vmatprep.subr.bf16.mxu0 0
  %2222 = vmatpush1.bf16.msra.mxu0 0
  %2223 = vmatprep.subr.bf16.mxu0 0
  %2224 = vmatpush1.bf16.msra.mxu0 0
  %2225 = vmatprep.subr.bf16.mxu0 0
  %2226 = vmatpush1.bf16.msra.mxu0 0
  %2227 = vmatprep.subr.bf16.mxu0 0
  %2228 = vmatpush1.bf16.msra.mxu0 0
  %2229 = vmatprep.subr.bf16.mxu0 0
  %2230 = vmatpush1.bf16.msra.mxu0 0
  %2231 = vmatprep.mubr.bf16.mxu0 0
  %2232 = vmatmul.mubr.bf16.gmra.mrb[0].mxu0 %v2173
  %v2233 = vpop.f32.mrb[0].mxu0
  %v2234 = vadd.f32 0.0, %v2233
  %v2235 = vpop.f32.mrb[0].mxu0
  %v2236 = vpop.f32.mrb[0].mxu0
  %v2237 = vadd.f32 0.0, %v2236
  %v2238 = vpop.f32.mrb[0].mxu0
  %2239 = vmatprep.mubr.bf16.mxu0 0
  %2240 = vmatmul.mubr.bf16.gmra.mrb[0].mxu0 %v2176
  %v2241 = vpop.f32.mrb[0].mxu0
  %v2242 = vadd.f32 0.0, %v2241
  %v2243 = vpop.f32.mrb[0].mxu0
  %v2244 = vpop.f32.mrb[0].mxu0
  %v2245 = vadd.f32 0.0, %v2244
  %v2246 = vpop.f32.mrb[0].mxu0
  %2247 = vmatprep.mubr.bf16.mxu0 0
  %2248 = vmatmul.mubr.bf16.gmra.mrb[0].mxu0 %v2179
  %v2249 = vpop.f32.mrb[0].mxu0
  %v2250 = vadd.f32 0.0, %v2249
  %v2251 = vpop.f32.mrb[0].mxu0
  %v2252 = vpop.f32.mrb[0].mxu0
  %v2253 = vadd.f32 0.0, %v2252
  %v2254 = vpop.f32.mrb[0].mxu0
  %2255 = vmatprep.mubr.bf16.mxu0 0
  %2256 = vmatmul.mubr.bf16.gmra.mrb[0].mxu0 %v2182
  %v2257 = vpop.f32.mrb[0].mxu0
  %v2258 = vadd.f32 0.0, %v2257
  %v2259 = vpop.f32.mrb[0].mxu0
  %v2260 = vpop.f32.mrb[0].mxu0
  %v2261 = vadd.f32 0.0, %v2260
  %v2262 = vpop.f32.mrb[0].mxu0
  %2263 = vmatprep.mubr.bf16.mxu0 0
  %2264 = vmatmul.mubr.bf16.gmra.mrb[0].mxu0 %v2185
  %v2265 = vpop.f32.mrb[0].mxu0
  %v2266 = vadd.f32 0.0, %v2265
  %v2267 = vpop.f32.mrb[0].mxu0
  %v2268 = vpop.f32.mrb[0].mxu0
  %v2269 = vadd.f32 0.0, %v2268
  %v2270 = vpop.f32.mrb[0].mxu0
  %2271 = vmatprep.mubr.bf16.mxu0 0
  %2272 = vmatmul.mubr.bf16.gmra.mrb[0].mxu0 %v2188
  %v2273 = vpop.f32.mrb[0].mxu0
  %v2274 = vadd.f32 0.0, %v2273
  %v2275 = vpop.f32.mrb[0].mxu0
  %v2276 = vpop.f32.mrb[0].mxu0
  %v2277 = vadd.f32 0.0, %v2276
  %v2278 = vpop.f32.mrb[0].mxu0
  %2279 = vmatprep.mubr.bf16.mxu0 0
  %2280 = vmatmul.mubr.bf16.gmra.mrb[0].mxu0 %v2191
  %v2281 = vpop.f32.mrb[0].mxu0
  %v2282 = vadd.f32 0.0, %v2281
  %v2283 = vpop.f32.mrb[0].mxu0
  %v2284 = vpop.f32.mrb[0].mxu0
  %v2285 = vadd.f32 0.0, %v2284
  %v2286 = vpop.f32.mrb[0].mxu0
  %2287 = vmatprep.mubr.bf16.mxu0 0
  %2288 = vmatmul.mubr.bf16.gmra.mrb[0].mxu0 %v2194
  %v2289 = vpop.f32.mrb[0].mxu0
  %v2290 = vadd.f32 0.0, %v2289
  %v2291 = vpop.f32.mrb[0].mxu0
  %v2292 = vpop.f32.mrb[0].mxu0
  %v2293 = vadd.f32 0.0, %v2292
  %v2294 = vpop.f32.mrb[0].mxu0
  %2295 = vdwg.mxu0
  %v2296 = vadd.f32 %v2018, %v2234
  %v2297 = vadd.f32 %v2019, %v2237
  %v2298 = vadd.f32 %v2020, %v2242
  %v2299 = vadd.f32 %v2021, %v2245
  %v2300 = vadd.f32 %v2022, %v2250
  %v2301 = vadd.f32 %v2023, %v2253
  %v2302 = vadd.f32 %v2024, %v2258
  %v2303 = vadd.f32 %v2025, %v2261
  %v2304 = vadd.f32 %v2026, %v2266
  %v2305 = vadd.f32 %v2027, %v2269
  %v2306 = vadd.f32 %v2028, %v2274
  %v2307 = vadd.f32 %v2029, %v2277
  %v2308 = vadd.f32 %v2030, %v2282
  %v2309 = vadd.f32 %v2031, %v2285
  %v2310 = vadd.f32 %v2032, %v2290
  %v2311 = vadd.f32 %v2033, %v2293
  %s2312 = scalar_lea.vmem [#allocation2], 16
  %v2313 = vld [vmem:[%s2312] sm:$0xf]
  %v2314 = vld [vmem:[%s2312 + $0x8] sm:$0xf]
  %v2315 = vld [vmem:[%s2312 + $0x10] sm:$0xf]
  %v2316 = vld [vmem:[%s2312 + $0x18] sm:$0xf]
  %v2317 = vld [vmem:[%s2312 + $0x20] sm:$0xf]
  %v2318 = vld [vmem:[%s2312 + $0x28] sm:$0xf]
  %v2319 = vld [vmem:[%s2312 + $0x30] sm:$0xf]
  %v2320 = vld [vmem:[%s2312 + $0x38] sm:$0xf]
  %v2321 = vld [vmem:[%s2312 + $0x50] sm:$0xf]
  %v2322 = vld [vmem:[%s2312 + $0x58] sm:$0xf]
  %v2323 = vld [vmem:[%s2312 + $0x60] sm:$0xf]
  %v2324 = vld [vmem:[%s2312 + $0x68] sm:$0xf]
  %v2325 = vld [vmem:[%s2312 + $0x70] sm:$0xf]
  %v2326 = vld [vmem:[%s2312 + $0x78] sm:$0xf]
  %v2327 = vld [vmem:[%s2312 + $0x80] sm:$0xf]
  %v2328 = vld [vmem:[%s2312 + $0x88] sm:$0xf]
  %s2329 = scalar_lea.vmem %s3, 24
  %v2330 = vld [vmem:[%s2329] sm:$0xf]
  %v2347 = vunpack.c.l.b16 %v2313
  %v2348 = vunpack.c.l.b16 %v2314
  %v2349 = vunpack.c.l.b16 %v2315
  %v2350 = vunpack.c.l.b16 %v2316
  %v2351 = vunpack.c.l.b16 %v2317
  %v2352 = vunpack.c.l.b16 %v2318
  %v2353 = vunpack.c.l.b16 %v2319
  %v2354 = vunpack.c.l.b16 %v2320
  %v2355 = vunpack.c.l.b16 %v2321
  %v2356 = vunpack.c.l.b16 %v2322
  %v2357 = vunpack.c.l.b16 %v2323
  %v2358 = vunpack.c.l.b16 %v2324
  %v2359 = vunpack.c.l.b16 %v2325
  %v2360 = vunpack.c.l.b16 %v2326
  %v2361 = vunpack.c.l.b16 %v2327
  %v2362 = vunpack.c.l.b16 %v2328
  %v2363 = vpack.c.b16 %v2348, %v2347
  %v2364 = vpack.c.b16 %v2350, %v2349
  %v2365 = vpack.c.b16 %v2352, %v2351
  %v2366 = vpack.c.b16 %v2354, %v2353
  %v2367 = vpack.c.b16 %v2356, %v2355
  %v2368 = vpack.c.b16 %v2358, %v2357
  %v2369 = vpack.c.b16 %v2360, %v2359
  %v2370 = vpack.c.b16 %v2362, %v2361
  %v2372 = vsel %vm843, %v2363, 0
  %v2375 = vsel %vm843, %v2364, 0
  %v2378 = vsel %vm843, %v2365, 0
  %v2381 = vsel %vm843, %v2366, 0
  %v2384 = vsel %vm843, %v2367, 0
  %v2387 = vsel %vm843, %v2368, 0
  %v2390 = vsel %vm843, %v2369, 0
  %v2393 = vsel %vm843, %v2370, 0
  %v2396 = vsel %vm868, %v2330, 0
  %2398 = vmatprep.subr.bf16.mxu0 0
  %2399 = vmatpush1.bf16.msra.mxu0 %v2396
  %2400 = vmatprep.subr.bf16.mxu0 0
  %2401 = vmatpush1.bf16.msra.mxu0 0
  %2402 = vmatprep.subr.bf16.mxu0 0
  %2403 = vmatpush1.bf16.msra.mxu0 0
  %2404 = vmatprep.subr.bf16.mxu0 0
  %2405 = vmatpush1.bf16.msra.mxu0 0
  %2406 = vmatprep.subr.bf16.mxu0 0
  %2407 = vmatpush1.bf16.msra.mxu0 0
  %2408 = vmatprep.subr.bf16.mxu0 0
  %2409 = vmatpush1.bf16.msra.mxu0 0
  %2410 = vmatprep.subr.bf16.mxu0 0
  %2411 = vmatpush1.bf16.msra.mxu0 0
  %2412 = vmatprep.subr.bf16.mxu0 0
  %2413 = vmatpush1.bf16.msra.mxu0 0
  %2414 = vmatprep.subr.bf16.mxu0 0
  %2415 = vmatpush1.bf16.msra.mxu0 0
  %2416 = vmatprep.subr.bf16.mxu0 0
  %2417 = vmatpush1.bf16.msra.mxu0 0
  %2418 = vmatprep.subr.bf16.mxu0 0
  %2419 = vmatpush1.bf16.msra.mxu0 0
  %2420 = vmatprep.subr.bf16.mxu0 0
  %2421 = vmatpush1.bf16.msra.mxu0 0
  %2422 = vmatprep.subr.bf16.mxu0 0
  %2423 = vmatpush1.bf16.msra.mxu0 0
  %2424 = vmatprep.subr.bf16.mxu0 0
  %2425 = vmatpush1.bf16.msra.mxu0 0
  %2426 = vmatprep.subr.bf16.mxu0 0
  %2427 = vmatpush1.bf16.msra.mxu0 0
  %2428 = vmatprep.subr.bf16.mxu0 0
  %2429 = vmatpush1.bf16.msra.mxu0 0
  %2430 = vmatprep.mubr.bf16.mxu0 0
  %2431 = vmatmul.mubr.bf16.gmra.mrb[0].mxu0 %v2372
  %v2432 = vpop.f32.mrb[0].mxu0
  %v2433 = vadd.f32 0.0, %v2432
  %v2434 = vpop.f32.mrb[0].mxu0
  %v2435 = vpop.f32.mrb[0].mxu0
  %v2436 = vadd.f32 0.0, %v2435
  %v2437 = vpop.f32.mrb[0].mxu0
  %2438 = vmatprep.mubr.bf16.mxu0 0
  %2439 = vmatmul.mubr.bf16.gmra.mrb[0].mxu0 %v2375
  %v2440 = vpop.f32.mrb[0].mxu0
  %v2441 = vadd.f32 0.0, %v2440
  %v2442 = vpop.f32.mrb[0].mxu0
  %v2443 = vpop.f32.mrb[0].mxu0
  %v2444 = vadd.f32 0.0, %v2443
  %v2445 = vpop.f32.mrb[0].mxu0
  %2446 = vmatprep.mubr.bf16.mxu0 0
  %2447 = vmatmul.mubr.bf16.gmra.mrb[0].mxu0 %v2378
  %v2448 = vpop.f32.mrb[0].mxu0
  %v2449 = vadd.f32 0.0, %v2448
  %v2450 = vpop.f32.mrb[0].mxu0
  %v2451 = vpop.f32.mrb[0].mxu0
  %v2452 = vadd.f32 0.0, %v2451
  %v2453 = vpop.f32.mrb[0].mxu0
  %2454 = vmatprep.mubr.bf16.mxu0 0
  %2455 = vmatmul.mubr.bf16.gmra.mrb[0].mxu0 %v2381
  %v2456 = vpop.f32.mrb[0].mxu0
  %v2457 = vadd.f32 0.0, %v2456
  %v2458 = vpop.f32.mrb[0].mxu0
  %v2459 = vpop.f32.mrb[0].mxu0
  %v2460 = vadd.f32 0.0, %v2459
  %v2461 = vpop.f32.mrb[0].mxu0
  %2462 = vmatprep.mubr.bf16.mxu0 0
  %2463 = vmatmul.mubr.bf16.gmra.mrb[0].mxu0 %v2384
  %v2464 = vpop.f32.mrb[0].mxu0
  %v2465 = vadd.f32 0.0, %v2464
  %v2466 = vpop.f32.mrb[0].mxu0
  %v2467 = vpop.f32.mrb[0].mxu0
  %v2468 = vadd.f32 0.0, %v2467
  %v2469 = vpop.f32.mrb[0].mxu0
  %2470 = vmatprep.mubr.bf16.mxu0 0
  %2471 = vmatmul.mubr.bf16.gmra.mrb[0].mxu0 %v2387
  %v2472 = vpop.f32.mrb[0].mxu0
  %v2473 = vadd.f32 0.0, %v2472
  %v2474 = vpop.f32.mrb[0].mxu0
  %v2475 = vpop.f32.mrb[0].mxu0
  %v2476 = vadd.f32 0.0, %v2475
  %v2477 = vpop.f32.mrb[0].mxu0
  %2478 = vmatprep.mubr.bf16.mxu0 0
  %2479 = vmatmul.mubr.bf16.gmra.mrb[0].mxu0 %v2390
  %v2480 = vpop.f32.mrb[0].mxu0
  %v2481 = vadd.f32 0.0, %v2480
  %v2482 = vpop.f32.mrb[0].mxu0
  %v2483 = vpop.f32.mrb[0].mxu0
  %v2484 = vadd.f32 0.0, %v2483
  %v2485 = vpop.f32.mrb[0].mxu0
  %2486 = vmatprep.mubr.bf16.mxu0 0
  %2487 = vmatmul.mubr.bf16.gmra.mrb[0].mxu0 %v2393
  %v2488 = vpop.f32.mrb[0].mxu0
  %v2489 = vadd.f32 0.0, %v2488
  %v2490 = vpop.f32.mrb[0].mxu0
  %v2491 = vpop.f32.mrb[0].mxu0
  %v2492 = vadd.f32 0.0, %v2491
  %v2493 = vpop.f32.mrb[0].mxu0
  %2494 = vdwg.mxu0
  %v2495 = vadd.f32 %v2296, %v2433
  %v2496 = vadd.f32 %v2297, %v2436
  %v2497 = vadd.f32 %v2298, %v2441
  %v2498 = vadd.f32 %v2299, %v2444
  %v2499 = vadd.f32 %v2300, %v2449
  %v2500 = vadd.f32 %v2301, %v2452
  %v2501 = vadd.f32 %v2302, %v2457
  %v2502 = vadd.f32 %v2303, %v2460
  %v2503 = vadd.f32 %v2304, %v2465
  %v2504 = vadd.f32 %v2305, %v2468
  %v2505 = vadd.f32 %v2306, %v2473
  %v2506 = vadd.f32 %v2307, %v2476
  %v2507 = vadd.f32 %v2308, %v2481
  %v2508 = vadd.f32 %v2309, %v2484
  %v2509 = vadd.f32 %v2310, %v2489
  %v2510 = vadd.f32 %v2311, %v2492
  %v2511 = vld [vmem:[%s2312] sm:$0xf]
  %v2512 = vld [vmem:[%s2312 + $0x4] sm:$0x1]
  %v2513 = vld [vmem:[%s2312 + $0x8] sm:$0xf]
  %v2514 = vld [vmem:[%s2312 + $0xc] sm:$0x1]
  %v2515 = vld [vmem:[%s2312 + $0x10] sm:$0xf]
  %v2516 = vld [vmem:[%s2312 + $0x14] sm:$0x1]
  %v2517 = vld [vmem:[%s2312 + $0x18] sm:$0xf]
  %v2518 = vld [vmem:[%s2312 + $0x1c] sm:$0x1]
  %v2519 = vld [vmem:[%s2312 + $0x20] sm:$0xf]
  %v2520 = vld [vmem:[%s2312 + $0x24] sm:$0x1]
  %v2521 = vld [vmem:[%s2312 + $0x28] sm:$0xf]
  %v2522 = vld [vmem:[%s2312 + $0x2c] sm:$0x1]
  %v2523 = vld [vmem:[%s2312 + $0x30] sm:$0xf]
  %v2524 = vld [vmem:[%s2312 + $0x34] sm:$0x1]
  %v2525 = vld [vmem:[%s2312 + $0x38] sm:$0xf]
  %v2526 = vld [vmem:[%s2312 + $0x3c] sm:$0x1]
  %v2527 = vld [vmem:[%s2312 + $0x50] sm:$0xf]
  %v2528 = vld [vmem:[%s2312 + $0x54] sm:$0x1]
  %v2529 = vld [vmem:[%s2312 + $0x58] sm:$0xf]
  %v2530 = vld [vmem:[%s2312 + $0x5c] sm:$0x1]
  %v2531 = vld [vmem:[%s2312 + $0x60] sm:$0xf]
  %v2532 = vld [vmem:[%s2312 + $0x64] sm:$0x1]
  %v2533 = vld [vmem:[%s2312 + $0x68] sm:$0xf]
  %v2534 = vld [vmem:[%s2312 + $0x6c] sm:$0x1]
  %v2535 = vld [vmem:[%s2312 + $0x70] sm:$0xf]
  %v2536 = vld [vmem:[%s2312 + $0x74] sm:$0x1]
  %v2537 = vld [vmem:[%s2312 + $0x78] sm:$0xf]
  %v2538 = vld [vmem:[%s2312 + $0x7c] sm:$0x1]
  %v2539 = vld [vmem:[%s2312 + $0x80] sm:$0xf]
  %v2540 = vld [vmem:[%s2312 + $0x84] sm:$0x1]
  %v2541 = vld [vmem:[%s2312 + $0x88] sm:$0xf]
  %v2542 = vld [vmem:[%s2312 + $0x8c] sm:$0x1]
  %v2544 = vshrl.u32 %v2511, 16
  %v2546 = vrot.slane %v2544, 4
  %v2547 = vshll.u32 %v2511, 16
  %v2549 = vrot.slane %v2547, 5
  %v2550 = vor.u32 %v2546, %v2549
  %v2551 = vrot.slane %v2550, 4
  %v2553 = vshll.u32 %v2512, 16
  %v2555 = vrot.slane %v2553, 5
  %v2556 = vsel %vm592, %v2551, %v2555
  %v2558 = vshrl.u32 %v2513, 16
  %v2560 = vrot.slane %v2558, 4
  %v2561 = vshll.u32 %v2513, 16
  %v2563 = vrot.slane %v2561, 5
  %v2564 = vor.u32 %v2560, %v2563
  %v2565 = vrot.slane %v2564, 4
  %v2567 = vshll.u32 %v2514, 16
  %v2569 = vrot.slane %v2567, 5
  %v2570 = vsel %vm592, %v2565, %v2569
  %v2572 = vshrl.u32 %v2515, 16
  %v2574 = vrot.slane %v2572, 4
  %v2575 = vshll.u32 %v2515, 16
  %v2577 = vrot.slane %v2575, 5
  %v2578 = vor.u32 %v2574, %v2577
  %v2579 = vrot.slane %v2578, 4
  %v2581 = vshll.u32 %v2516, 16
  %v2583 = vrot.slane %v2581, 5
  %v2584 = vsel %vm592, %v2579, %v2583
  %v2586 = vshrl.u32 %v2517, 16
  %v2588 = vrot.slane %v2586, 4
  %v2589 = vshll.u32 %v2517, 16
  %v2591 = vrot.slane %v2589, 5
  %v2592 = vor.u32 %v2588, %v2591
  %v2593 = vrot.slane %v2592, 4
  %v2595 = vshll.u32 %v2518, 16
  %v2597 = vrot.slane %v2595, 5
  %v2598 = vsel %vm592, %v2593, %v2597
  %v2600 = vshrl.u32 %v2519, 16
  %v2602 = vrot.slane %v2600, 4
  %v2603 = vshll.u32 %v2519, 16
  %v2605 = vrot.slane %v2603, 5
  %v2606 = vor.u32 %v2602, %v2605
  %v2607 = vrot.slane %v2606, 4
  %v2609 = vshll.u32 %v2520, 16
  %v2611 = vrot.slane %v2609, 5
  %v2612 = vsel %vm592, %v2607, %v2611
  %v2614 = vshrl.u32 %v2521, 16
  %v2616 = vrot.slane %v2614, 4
  %v2617 = vshll.u32 %v2521, 16
  %v2619 = vrot.slane %v2617, 5
  %v2620 = vor.u32 %v2616, %v2619
  %v2621 = vrot.slane %v2620, 4
  %v2623 = vshll.u32 %v2522, 16
  %v2625 = vrot.slane %v2623, 5
  %v2626 = vsel %vm592, %v2621, %v2625
  %v2628 = vshrl.u32 %v2523, 16
  %v2630 = vrot.slane %v2628, 4
  %v2631 = vshll.u32 %v2523, 16
  %v2633 = vrot.slane %v2631, 5
  %v2634 = vor.u32 %v2630, %v2633
  %v2635 = vrot.slane %v2634, 4
  %v2637 = vshll.u32 %v2524, 16
  %v2639 = vrot.slane %v2637, 5
  %v2640 = vsel %vm592, %v2635, %v2639
  %v2642 = vshrl.u32 %v2525, 16
  %v2644 = vrot.slane %v2642, 4
  %v2645 = vshll.u32 %v2525, 16
  %v2647 = vrot.slane %v2645, 5
  %v2648 = vor.u32 %v2644, %v2647
  %v2649 = vrot.slane %v2648, 4
  %v2651 = vshll.u32 %v2526, 16
  %v2653 = vrot.slane %v2651, 5
  %v2654 = vsel %vm592, %v2649, %v2653
  %v2656 = vshrl.u32 %v2527, 16
  %v2658 = vrot.slane %v2656, 4
  %v2659 = vshll.u32 %v2527, 16
  %v2661 = vrot.slane %v2659, 5
  %v2662 = vor.u32 %v2658, %v2661
  %v2663 = vrot.slane %v2662, 4
  %v2665 = vshll.u32 %v2528, 16
  %v2667 = vrot.slane %v2665, 5
  %v2668 = vsel %vm592, %v2663, %v2667
  %v2670 = vshrl.u32 %v2529, 16
  %v2672 = vrot.slane %v2670, 4
  %v2673 = vshll.u32 %v2529, 16
  %v2675 = vrot.slane %v2673, 5
  %v2676 = vor.u32 %v2672, %v2675
  %v2677 = vrot.slane %v2676, 4
  %v2679 = vshll.u32 %v2530, 16
  %v2681 = vrot.slane %v2679, 5
  %v2682 = vsel %vm592, %v2677, %v2681
  %v2684 = vshrl.u32 %v2531, 16
  %v2686 = vrot.slane %v2684, 4
  %v2687 = vshll.u32 %v2531, 16
  %v2689 = vrot.slane %v2687, 5
  %v2690 = vor.u32 %v2686, %v2689
  %v2691 = vrot.slane %v2690, 4
  %v2693 = vshll.u32 %v2532, 16
  %v2695 = vrot.slane %v2693, 5
  %v2696 = vsel %vm592, %v2691, %v2695
  %v2698 = vshrl.u32 %v2533, 16
  %v2700 = vrot.slane %v2698, 4
  %v2701 = vshll.u32 %v2533, 16
  %v2703 = vrot.slane %v2701, 5
  %v2704 = vor.u32 %v2700, %v2703
  %v2705 = vrot.slane %v2704, 4
  %v2707 = vshll.u32 %v2534, 16
  %v2709 = vrot.slane %v2707, 5
  %v2710 = vsel %vm592, %v2705, %v2709
  %v2712 = vshrl.u32 %v2535, 16
  %v2714 = vrot.slane %v2712, 4
  %v2715 = vshll.u32 %v2535, 16
  %v2717 = vrot.slane %v2715, 5
  %v2718 = vor.u32 %v2714, %v2717
  %v2719 = vrot.slane %v2718, 4
  %v2721 = vshll.u32 %v2536, 16
  %v2723 = vrot.slane %v2721, 5
  %v2724 = vsel %vm592, %v2719, %v2723
  %v2726 = vshrl.u32 %v2537, 16
  %v2728 = vrot.slane %v2726, 4
  %v2729 = vshll.u32 %v2537, 16
  %v2731 = vrot.slane %v2729, 5
  %v2732 = vor.u32 %v2728, %v2731
  %v2733 = vrot.slane %v2732, 4
  %v2735 = vshll.u32 %v2538, 16
  %v2737 = vrot.slane %v2735, 5
  %v2738 = vsel %vm592, %v2733, %v2737
  %v2740 = vshrl.u32 %v2539, 16
  %v2742 = vrot.slane %v2740, 4
  %v2743 = vshll.u32 %v2539, 16
  %v2745 = vrot.slane %v2743, 5
  %v2746 = vor.u32 %v2742, %v2745
  %v2747 = vrot.slane %v2746, 4
  %v2749 = vshll.u32 %v2540, 16
  %v2751 = vrot.slane %v2749, 5
  %v2752 = vsel %vm592, %v2747, %v2751
  %v2754 = vshrl.u32 %v2541, 16
  %v2756 = vrot.slane %v2754, 4
  %v2757 = vshll.u32 %v2541, 16
  %v2759 = vrot.slane %v2757, 5
  %v2760 = vor.u32 %v2756, %v2759
  %v2761 = vrot.slane %v2760, 4
  %v2763 = vshll.u32 %v2542, 16
  %v2765 = vrot.slane %v2763, 5
  %v2766 = vsel %vm592, %v2761, %v2765
  %s2767 = scalar_lea.vmem %s3, 28
  %v2768 = vld [vmem:[%s2767] sm:$0xf]
  %v2769 = vunpack.c.l.b16 %v2556
  %v2770 = vunpack.c.l.b16 %v2570
  %v2771 = vunpack.c.l.b16 %v2584
  %v2772 = vunpack.c.l.b16 %v2598
  %v2773 = vunpack.c.l.b16 %v2612
  %v2774 = vunpack.c.l.b16 %v2626
  %v2775 = vunpack.c.l.b16 %v2640
  %v2776 = vunpack.c.l.b16 %v2654
  %v2777 = vunpack.c.l.b16 %v2668
  %v2778 = vunpack.c.l.b16 %v2682
  %v2779 = vunpack.c.l.b16 %v2696
  %v2780 = vunpack.c.l.b16 %v2710
  %v2781 = vunpack.c.l.b16 %v2724
  %v2782 = vunpack.c.l.b16 %v2738
  %v2783 = vunpack.c.l.b16 %v2752
  %v2784 = vunpack.c.l.b16 %v2766
  %v2785 = vpack.c.b16 %v2770, %v2769
  %v2786 = vpack.c.b16 %v2772, %v2771
  %v2787 = vpack.c.b16 %v2774, %v2773
  %v2788 = vpack.c.b16 %v2776, %v2775
  %v2789 = vpack.c.b16 %v2778, %v2777
  %v2790 = vpack.c.b16 %v2780, %v2779
  %v2791 = vpack.c.b16 %v2782, %v2781
  %v2792 = vpack.c.b16 %v2784, %v2783
  %v2794 = vsel %vm843, %v2785, 0
  %v2797 = vsel %vm843, %v2786, 0
  %v2800 = vsel %vm843, %v2787, 0
  %v2803 = vsel %vm843, %v2788, 0
  %v2806 = vsel %vm843, %v2789, 0
  %v2809 = vsel %vm843, %v2790, 0
  %v2812 = vsel %vm843, %v2791, 0
  %v2815 = vsel %vm843, %v2792, 0
  %v2818 = vsel %vm868, %v2768, 0
  %2820 = vmatprep.subr.bf16.mxu0 0
  %2821 = vmatpush1.bf16.msra.mxu0 %v2818
  %2822 = vmatprep.subr.bf16.mxu0 0
  %2823 = vmatpush1.bf16.msra.mxu0 0
  %2824 = vmatprep.subr.bf16.mxu0 0
  %2825 = vmatpush1.bf16.msra.mxu0 0
  %2826 = vmatprep.subr.bf16.mxu0 0
  %2827 = vmatpush1.bf16.msra.mxu0 0
  %2828 = vmatprep.subr.bf16.mxu0 0
  %2829 = vmatpush1.bf16.msra.mxu0 0
  %2830 = vmatprep.subr.bf16.mxu0 0
  %2831 = vmatpush1.bf16.msra.mxu0 0
  %2832 = vmatprep.subr.bf16.mxu0 0
  %2833 = vmatpush1.bf16.msra.mxu0 0
  %2834 = vmatprep.subr.bf16.mxu0 0
  %2835 = vmatpush1.bf16.msra.mxu0 0
  %2836 = vmatprep.subr.bf16.mxu0 0
  %2837 = vmatpush1.bf16.msra.mxu0 0
  %2838 = vmatprep.subr.bf16.mxu0 0
  %2839 = vmatpush1.bf16.msra.mxu0 0
  %2840 = vmatprep.subr.bf16.mxu0 0
  %2841 = vmatpush1.bf16.msra.mxu0 0
  %2842 = vmatprep.subr.bf16.mxu0 0
  %2843 = vmatpush1.bf16.msra.mxu0 0
  %2844 = vmatprep.subr.bf16.mxu0 0
  %2845 = vmatpush1.bf16.msra.mxu0 0
  %2846 = vmatprep.subr.bf16.mxu0 0
  %2847 = vmatpush1.bf16.msra.mxu0 0
  %2848 = vmatprep.subr.bf16.mxu0 0
  %2849 = vmatpush1.bf16.msra.mxu0 0
  %2850 = vmatprep.subr.bf16.mxu0 0
  %2851 = vmatpush1.bf16.msra.mxu0 0
  %2852 = vmatprep.mubr.bf16.mxu0 0
  %2853 = vmatmul.mubr.bf16.gmra.mrb[0].mxu0 %v2794
  %v2854 = vpop.f32.mrb[0].mxu0
  %v2855 = vadd.f32 0.0, %v2854
  %v2856 = vpop.f32.mrb[0].mxu0
  %v2857 = vpop.f32.mrb[0].mxu0
  %v2858 = vadd.f32 0.0, %v2857
  %v2859 = vpop.f32.mrb[0].mxu0
  %2860 = vmatprep.mubr.bf16.mxu0 0
  %2861 = vmatmul.mubr.bf16.gmra.mrb[0].mxu0 %v2797
  %v2862 = vpop.f32.mrb[0].mxu0
  %v2863 = vadd.f32 0.0, %v2862
  %v2864 = vpop.f32.mrb[0].mxu0
  %v2865 = vpop.f32.mrb[0].mxu0
  %v2866 = vadd.f32 0.0, %v2865
  %v2867 = vpop.f32.mrb[0].mxu0
  %2868 = vmatprep.mubr.bf16.mxu0 0
  %2869 = vmatmul.mubr.bf16.gmra.mrb[0].mxu0 %v2800
  %v2870 = vpop.f32.mrb[0].mxu0
  %v2871 = vadd.f32 0.0, %v2870
  %v2872 = vpop.f32.mrb[0].mxu0
  %v2873 = vpop.f32.mrb[0].mxu0
  %v2874 = vadd.f32 0.0, %v2873
  %v2875 = vpop.f32.mrb[0].mxu0
  %2876 = vmatprep.mubr.bf16.mxu0 0
  %2877 = vmatmul.mubr.bf16.gmra.mrb[0].mxu0 %v2803
  %v2878 = vpop.f32.mrb[0].mxu0
  %v2879 = vadd.f32 0.0, %v2878
  %v2880 = vpop.f32.mrb[0].mxu0
  %v2881 = vpop.f32.mrb[0].mxu0
  %v2882 = vadd.f32 0.0, %v2881
  %v2883 = vpop.f32.mrb[0].mxu0
  %2884 = vmatprep.mubr.bf16.mxu0 0
  %2885 = vmatmul.mubr.bf16.gmra.mrb[0].mxu0 %v2806
  %v2886 = vpop.f32.mrb[0].mxu0
  %v2887 = vadd.f32 0.0, %v2886
  %v2888 = vpop.f32.mrb[0].mxu0
  %v2889 = vpop.f32.mrb[0].mxu0
  %v2890 = vadd.f32 0.0, %v2889
  %v2891 = vpop.f32.mrb[0].mxu0
  %2892 = vmatprep.mubr.bf16.mxu0 0
  %2893 = vmatmul.mubr.bf16.gmra.mrb[0].mxu0 %v2809
  %v2894 = vpop.f32.mrb[0].mxu0
  %v2895 = vadd.f32 0.0, %v2894
  %v2896 = vpop.f32.mrb[0].mxu0
  %v2897 = vpop.f32.mrb[0].mxu0
  %v2898 = vadd.f32 0.0, %v2897
  %v2899 = vpop.f32.mrb[0].mxu0
  %2900 = vmatprep.mubr.bf16.mxu0 0
  %2901 = vmatmul.mubr.bf16.gmra.mrb[0].mxu0 %v2812
  %v2902 = vpop.f32.mrb[0].mxu0
  %v2903 = vadd.f32 0.0, %v2902
  %v2904 = vpop.f32.mrb[0].mxu0
  %v2905 = vpop.f32.mrb[0].mxu0
  %v2906 = vadd.f32 0.0, %v2905
  %v2907 = vpop.f32.mrb[0].mxu0
  %2908 = vmatprep.mubr.bf16.mxu0 0
  %2909 = vmatmul.mubr.bf16.gmra.mrb[0].mxu0 %v2815
  %v2910 = vpop.f32.mrb[0].mxu0
  %v2911 = vadd.f32 0.0, %v2910
  %v2912 = vpop.f32.mrb[0].mxu0
  %v2913 = vpop.f32.mrb[0].mxu0
  %v2914 = vadd.f32 0.0, %v2913
  %v2915 = vpop.f32.mrb[0].mxu0
  %2916 = vdwg.mxu0
  %v2917 = vadd.f32 %v2495, %v2855
  %v2918 = vadd.f32 %v2496, %v2858
  %v2919 = vadd.f32 %v2497, %v2863
  %v2920 = vadd.f32 %v2498, %v2866
  %v2921 = vadd.f32 %v2499, %v2871
  %v2922 = vadd.f32 %v2500, %v2874
  %v2923 = vadd.f32 %v2501, %v2879
  %v2924 = vadd.f32 %v2502, %v2882
  %v2925 = vadd.f32 %v2503, %v2887
  %v2926 = vadd.f32 %v2504, %v2890
  %v2927 = vadd.f32 %v2505, %v2895
  %v2928 = vadd.f32 %v2506, %v2898
  %v2929 = vadd.f32 %v2507, %v2903
  %v2930 = vadd.f32 %v2508, %v2906
  %v2931 = vadd.f32 %v2509, %v2911
  %v2932 = vadd.f32 %v2510, %v2914
  %v2933 = vld [vmem:[%s2312] sm:$0xe]
  %v2934 = vld [vmem:[%s2312 + $0x8] sm:$0xe]
  %v2935 = vld [vmem:[%s2312 + $0x10] sm:$0xe]
  %v2936 = vld [vmem:[%s2312 + $0x18] sm:$0xe]
  %v2937 = vld [vmem:[%s2312 + $0x20] sm:$0xe]
  %v2938 = vld [vmem:[%s2312 + $0x28] sm:$0xe]
  %v2939 = vld [vmem:[%s2312 + $0x30] sm:$0xe]
  %v2940 = vld [vmem:[%s2312 + $0x38] sm:$0xe]
  %v2941 = vld [vmem:[%s2312 + $0x50] sm:$0xe]
  %v2942 = vld [vmem:[%s2312 + $0x58] sm:$0xe]
  %v2943 = vld [vmem:[%s2312 + $0x60] sm:$0xe]
  %v2944 = vld [vmem:[%s2312 + $0x68] sm:$0xe]
  %v2945 = vld [vmem:[%s2312 + $0x70] sm:$0xe]
  %v2946 = vld [vmem:[%s2312 + $0x78] sm:$0xe]
  %v2947 = vld [vmem:[%s2312 + $0x80] sm:$0xe]
  %v2948 = vld [vmem:[%s2312 + $0x88] sm:$0xe]
  %v2981 = vrot.slane %v2933, 5
  %v2982 = vrot.slane %v2981, 4
  %v2983 = vrot.slane %v2512, 5
  %v2984 = vsel %vm1183, %v2982, %v2983
  %v2985 = vrot.slane %v2934, 5
  %v2986 = vrot.slane %v2985, 4
  %v2987 = vrot.slane %v2514, 5
  %v2988 = vsel %vm1183, %v2986, %v2987
  %v2989 = vrot.slane %v2935, 5
  %v2990 = vrot.slane %v2989, 4
  %v2991 = vrot.slane %v2516, 5
  %v2992 = vsel %vm1183, %v2990, %v2991
  %v2993 = vrot.slane %v2936, 5
  %v2994 = vrot.slane %v2993, 4
  %v2995 = vrot.slane %v2518, 5
  %v2996 = vsel %vm1183, %v2994, %v2995
  %v2997 = vrot.slane %v2937, 5
  %v2998 = vrot.slane %v2997, 4
  %v2999 = vrot.slane %v2520, 5
  %v3000 = vsel %vm1183, %v2998, %v2999
  %v3001 = vrot.slane %v2938, 5
  %v3002 = vrot.slane %v3001, 4
  %v3003 = vrot.slane %v2522, 5
  %v3004 = vsel %vm1183, %v3002, %v3003
  %v3005 = vrot.slane %v2939, 5
  %v3006 = vrot.slane %v3005, 4
  %v3007 = vrot.slane %v2524, 5
  %v3008 = vsel %vm1183, %v3006, %v3007
  %v3009 = vrot.slane %v2940, 5
  %v3010 = vrot.slane %v3009, 4
  %v3011 = vrot.slane %v2526, 5
  %v3012 = vsel %vm1183, %v3010, %v3011
  %v3013 = vrot.slane %v2941, 5
  %v3014 = vrot.slane %v3013, 4
  %v3015 = vrot.slane %v2528, 5
  %v3016 = vsel %vm1183, %v3014, %v3015
  %v3017 = vrot.slane %v2942, 5
  %v3018 = vrot.slane %v3017, 4
  %v3019 = vrot.slane %v2530, 5
  %v3020 = vsel %vm1183, %v3018, %v3019
  %v3021 = vrot.slane %v2943, 5
  %v3022 = vrot.slane %v3021, 4
  %v3023 = vrot.slane %v2532, 5
  %v3024 = vsel %vm1183, %v3022, %v3023
  %v3025 = vrot.slane %v2944, 5
  %v3026 = vrot.slane %v3025, 4
  %v3027 = vrot.slane %v2534, 5
  %v3028 = vsel %vm1183, %v3026, %v3027
  %v3029 = vrot.slane %v2945, 5
  %v3030 = vrot.slane %v3029, 4
  %v3031 = vrot.slane %v2536, 5
  %v3032 = vsel %vm1183, %v3030, %v3031
  %v3033 = vrot.slane %v2946, 5
  %v3034 = vrot.slane %v3033, 4
  %v3035 = vrot.slane %v2538, 5
  %v3036 = vsel %vm1183, %v3034, %v3035
  %v3037 = vrot.slane %v2947, 5
  %v3038 = vrot.slane %v3037, 4
  %v3039 = vrot.slane %v2540, 5
  %v3040 = vsel %vm1183, %v3038, %v3039
  %v3041 = vrot.slane %v2948, 5
  %v3042 = vrot.slane %v3041, 4
  %v3043 = vrot.slane %v2542, 5
  %v3044 = vsel %vm1183, %v3042, %v3043
  %s3045 = scalar_lea.vmem %s3, 32
  %v3046 = vld [vmem:[%s3045] sm:$0xf]
  %v3047 = vunpack.c.l.b16 %v2984
  %v3048 = vunpack.c.l.b16 %v2988
  %v3049 = vunpack.c.l.b16 %v2992
  %v3050 = vunpack.c.l.b16 %v2996
  %v3051 = vunpack.c.l.b16 %v3000
  %v3052 = vunpack.c.l.b16 %v3004
  %v3053 = vunpack.c.l.b16 %v3008
  %v3054 = vunpack.c.l.b16 %v3012
  %v3055 = vunpack.c.l.b16 %v3016
  %v3056 = vunpack.c.l.b16 %v3020
  %v3057 = vunpack.c.l.b16 %v3024
  %v3058 = vunpack.c.l.b16 %v3028
  %v3059 = vunpack.c.l.b16 %v3032
  %v3060 = vunpack.c.l.b16 %v3036
  %v3061 = vunpack.c.l.b16 %v3040
  %v3062 = vunpack.c.l.b16 %v3044
  %v3063 = vpack.c.b16 %v3048, %v3047
  %v3064 = vpack.c.b16 %v3050, %v3049
  %v3065 = vpack.c.b16 %v3052, %v3051
  %v3066 = vpack.c.b16 %v3054, %v3053
  %v3067 = vpack.c.b16 %v3056, %v3055
  %v3068 = vpack.c.b16 %v3058, %v3057
  %v3069 = vpack.c.b16 %v3060, %v3059
  %v3070 = vpack.c.b16 %v3062, %v3061
  %v3072 = vsel %vm843, %v3063, 0
  %v3075 = vsel %vm843, %v3064, 0
  %v3078 = vsel %vm843, %v3065, 0
  %v3081 = vsel %vm843, %v3066, 0
  %v3084 = vsel %vm843, %v3067, 0
  %v3087 = vsel %vm843, %v3068, 0
  %v3090 = vsel %vm843, %v3069, 0
  %v3093 = vsel %vm843, %v3070, 0
  %v3096 = vsel %vm868, %v3046, 0
  %3098 = vmatprep.subr.bf16.mxu0 0
  %3099 = vmatpush1.bf16.msra.mxu0 %v3096
  %3100 = vmatprep.subr.bf16.mxu0 0
  %3101 = vmatpush1.bf16.msra.mxu0 0
  %3102 = vmatprep.subr.bf16.mxu0 0
  %3103 = vmatpush1.bf16.msra.mxu0 0
  %3104 = vmatprep.subr.bf16.mxu0 0
  %3105 = vmatpush1.bf16.msra.mxu0 0
  %3106 = vmatprep.subr.bf16.mxu0 0
  %3107 = vmatpush1.bf16.msra.mxu0 0
  %3108 = vmatprep.subr.bf16.mxu0 0
  %3109 = vmatpush1.bf16.msra.mxu0 0
  %3110 = vmatprep.subr.bf16.mxu0 0
  %3111 = vmatpush1.bf16.msra.mxu0 0
  %3112 = vmatprep.subr.bf16.mxu0 0
  %3113 = vmatpush1.bf16.msra.mxu0 0
  %3114 = vmatprep.subr.bf16.mxu0 0
  %3115 = vmatpush1.bf16.msra.mxu0 0
  %3116 = vmatprep.subr.bf16.mxu0 0
  %3117 = vmatpush1.bf16.msra.mxu0 0
  %3118 = vmatprep.subr.bf16.mxu0 0
  %3119 = vmatpush1.bf16.msra.mxu0 0
  %3120 = vmatprep.subr.bf16.mxu0 0
  %3121 = vmatpush1.bf16.msra.mxu0 0
  %3122 = vmatprep.subr.bf16.mxu0 0
  %3123 = vmatpush1.bf16.msra.mxu0 0
  %3124 = vmatprep.subr.bf16.mxu0 0
  %3125 = vmatpush1.bf16.msra.mxu0 0
  %3126 = vmatprep.subr.bf16.mxu0 0
  %3127 = vmatpush1.bf16.msra.mxu0 0
  %3128 = vmatprep.subr.bf16.mxu0 0
  %3129 = vmatpush1.bf16.msra.mxu0 0
  %3130 = vmatprep.mubr.bf16.mxu0 0
  %3131 = vmatmul.mubr.bf16.gmra.mrb[0].mxu0 %v3072
  %v3132 = vpop.f32.mrb[0].mxu0
  %v3133 = vadd.f32 0.0, %v3132
  %v3134 = vpop.f32.mrb[0].mxu0
  %v3135 = vpop.f32.mrb[0].mxu0
  %v3136 = vadd.f32 0.0, %v3135
  %v3137 = vpop.f32.mrb[0].mxu0
  %3138 = vmatprep.mubr.bf16.mxu0 0
  %3139 = vmatmul.mubr.bf16.gmra.mrb[0].mxu0 %v3075
  %v3140 = vpop.f32.mrb[0].mxu0
  %v3141 = vadd.f32 0.0, %v3140
  %v3142 = vpop.f32.mrb[0].mxu0
  %v3143 = vpop.f32.mrb[0].mxu0
  %v3144 = vadd.f32 0.0, %v3143
  %v3145 = vpop.f32.mrb[0].mxu0
  %3146 = vmatprep.mubr.bf16.mxu0 0
  %3147 = vmatmul.mubr.bf16.gmra.mrb[0].mxu0 %v3078
  %v3148 = vpop.f32.mrb[0].mxu0
  %v3149 = vadd.f32 0.0, %v3148
  %v3150 = vpop.f32.mrb[0].mxu0
  %v3151 = vpop.f32.mrb[0].mxu0
  %v3152 = vadd.f32 0.0, %v3151
  %v3153 = vpop.f32.mrb[0].mxu0
  %3154 = vmatprep.mubr.bf16.mxu0 0
  %3155 = vmatmul.mubr.bf16.gmra.mrb[0].mxu0 %v3081
  %v3156 = vpop.f32.mrb[0].mxu0
  %v3157 = vadd.f32 0.0, %v3156
  %v3158 = vpop.f32.mrb[0].mxu0
  %v3159 = vpop.f32.mrb[0].mxu0
  %v3160 = vadd.f32 0.0, %v3159
  %v3161 = vpop.f32.mrb[0].mxu0
  %3162 = vmatprep.mubr.bf16.mxu0 0
  %3163 = vmatmul.mubr.bf16.gmra.mrb[0].mxu0 %v3084
  %v3164 = vpop.f32.mrb[0].mxu0
  %v3165 = vadd.f32 0.0, %v3164
  %v3166 = vpop.f32.mrb[0].mxu0
  %v3167 = vpop.f32.mrb[0].mxu0
  %v3168 = vadd.f32 0.0, %v3167
  %v3169 = vpop.f32.mrb[0].mxu0
  %3170 = vmatprep.mubr.bf16.mxu0 0
  %3171 = vmatmul.mubr.bf16.gmra.mrb[0].mxu0 %v3087
  %v3172 = vpop.f32.mrb[0].mxu0
  %v3173 = vadd.f32 0.0, %v3172
  %v3174 = vpop.f32.mrb[0].mxu0
  %v3175 = vpop.f32.mrb[0].mxu0
  %v3176 = vadd.f32 0.0, %v3175
  %v3177 = vpop.f32.mrb[0].mxu0
  %3178 = vmatprep.mubr.bf16.mxu0 0
  %3179 = vmatmul.mubr.bf16.gmra.mrb[0].mxu0 %v3090
  %v3180 = vpop.f32.mrb[0].mxu0
  %v3181 = vadd.f32 0.0, %v3180
  %v3182 = vpop.f32.mrb[0].mxu0
  %v3183 = vpop.f32.mrb[0].mxu0
  %v3184 = vadd.f32 0.0, %v3183
  %v3185 = vpop.f32.mrb[0].mxu0
  %3186 = vmatprep.mubr.bf16.mxu0 0
  %3187 = vmatmul.mubr.bf16.gmra.mrb[0].mxu0 %v3093
  %v3188 = vpop.f32.mrb[0].mxu0
  %v3189 = vadd.f32 0.0, %v3188
  %v3190 = vpop.f32.mrb[0].mxu0
  %v3191 = vpop.f32.mrb[0].mxu0
  %v3192 = vadd.f32 0.0, %v3191
  %v3193 = vpop.f32.mrb[0].mxu0
  %3194 = vdwg.mxu0
  %v3195 = vadd.f32 %v2917, %v3133
  %v3196 = vadd.f32 %v2918, %v3136
  %v3197 = vadd.f32 %v2919, %v3141
  %v3198 = vadd.f32 %v2920, %v3144
  %v3199 = vadd.f32 %v2921, %v3149
  %v3200 = vadd.f32 %v2922, %v3152
  %v3201 = vadd.f32 %v2923, %v3157
  %v3202 = vadd.f32 %v2924, %v3160
  %v3203 = vadd.f32 %v2925, %v3165
  %v3204 = vadd.f32 %v2926, %v3168
  %v3205 = vadd.f32 %v2927, %v3173
  %v3206 = vadd.f32 %v2928, %v3176
  %v3207 = vadd.f32 %v2929, %v3181
  %v3208 = vadd.f32 %v2930, %v3184
  %v3209 = vadd.f32 %v2931, %v3189
  %v3210 = vadd.f32 %v2932, %v3192
  %3211 = vst.msk [vmem:[%s4] sm:$0xff] %vm843, %v3195
  %3212 = vst.msk [vmem:[%s4 + $0x8] sm:$0xff] %vm843, %v3196
  %3213 = vst.msk [vmem:[%s4 + $0x10] sm:$0xff] %vm843, %v3197
  %3214 = vst.msk [vmem:[%s4 + $0x18] sm:$0xff] %vm843, %v3198
  %3215 = vst.msk [vmem:[%s4 + $0x20] sm:$0xff] %vm843, %v3199
  %3216 = vst.msk [vmem:[%s4 + $0x28] sm:$0xff] %vm843, %v3200
  %3217 = vst.msk [vmem:[%s4 + $0x30] sm:$0xff] %vm843, %v3201
  %3218 = vst.msk [vmem:[%s4 + $0x38] sm:$0xff] %vm843, %v3202
  %3219 = vst.msk [vmem:[%s4 + $0x40] sm:$0xff] %vm843, %v3203
  %3220 = vst.msk [vmem:[%s4 + $0x48] sm:$0xff] %vm843, %v3204
  %3221 = vst.msk [vmem:[%s4 + $0x50] sm:$0xff] %vm843, %v3205
  %3222 = vst.msk [vmem:[%s4 + $0x58] sm:$0xff] %vm843, %v3206
  %3223 = vst.msk [vmem:[%s4 + $0x60] sm:$0xff] %vm843, %v3207
  %3224 = vst.msk [vmem:[%s4 + $0x68] sm:$0xff] %vm843, %v3208
  %3225 = vst.msk [vmem:[%s4 + $0x70] sm:$0xff] %vm843, %v3209
  %3226 = vst.msk [vmem:[%s4 + $0x78] sm:$0xff] %vm843, %v3210
  %v3227 = vsel %vm843, %v3195, 0.0
  %v3228 = vsel %vm843, %v3196, 0.0
  %v3229 = vadd.f32 %v3227, %v3228
  %v3230 = vsel %vm843, %v3197, 0.0
  %v3231 = vadd.f32 %v3229, %v3230
  %v3232 = vsel %vm843, %v3198, 0.0
  %v3233 = vadd.f32 %v3231, %v3232
  %v3234 = vsel %vm843, %v3199, 0.0
  %v3235 = vadd.f32 %v3233, %v3234
  %v3236 = vsel %vm843, %v3200, 0.0
  %v3237 = vadd.f32 %v3235, %v3236
  %v3238 = vsel %vm843, %v3201, 0.0
  %v3239 = vadd.f32 %v3237, %v3238
  %v3240 = vsel %vm843, %v3202, 0.0
  %v3241 = vadd.f32 %v3239, %v3240
  %v3242 = vsel %vm843, %v3203, 0.0
  %v3243 = vadd.f32 %v3241, %v3242
  %v3244 = vsel %vm843, %v3204, 0.0
  %v3245 = vadd.f32 %v3243, %v3244
  %v3246 = vsel %vm843, %v3205, 0.0
  %v3247 = vadd.f32 %v3245, %v3246
  %v3248 = vsel %vm843, %v3206, 0.0
  %v3249 = vadd.f32 %v3247, %v3248
  %v3250 = vsel %vm843, %v3207, 0.0
  %v3251 = vadd.f32 %v3249, %v3250
  %v3252 = vsel %vm843, %v3208, 0.0
  %v3253 = vadd.f32 %v3251, %v3252
  %v3254 = vsel %vm843, %v3209, 0.0
  %v3255 = vadd.f32 %v3253, %v3254
  %v3256 = vsel %vm843, %v3210, 0.0
  %v3257 = vadd.f32 %v3255, %v3256
  %v3258 = vrot.slane %v3257, 4
  %v3259 = vadd.f32 %v3257, %v3258
  %v3260 = vrot.slane %v3259, 2
  %v3261 = vadd.f32 %v3259, %v3260
  %v3262 = vrot.slane %v3261, 1
  %v3263 = vadd.f32 %v3261, %v3262
  %3264 = vst.msk [vmem:[%s5] sm:$0x1] %vm100, %v3263
  %v3265 = vmul.f32 %v3195, %v3195
  %v3266 = vmul.f32 %v3196, %v3196
  %v3267 = vmul.f32 %v3197, %v3197
  %v3268 = vmul.f32 %v3198, %v3198
  %v3269 = vmul.f32 %v3199, %v3199
  %v3270 = vmul.f32 %v3200, %v3200
  %v3271 = vmul.f32 %v3201, %v3201
  %v3272 = vmul.f32 %v3202, %v3202
  %v3273 = vmul.f32 %v3203, %v3203
  %v3274 = vmul.f32 %v3204, %v3204
  %v3275 = vmul.f32 %v3205, %v3205
  %v3276 = vmul.f32 %v3206, %v3206
  %v3277 = vmul.f32 %v3207, %v3207
  %v3278 = vmul.f32 %v3208, %v3208
  %v3279 = vmul.f32 %v3209, %v3209
  %v3280 = vmul.f32 %v3210, %v3210
  %v3281 = vsel %vm843, %v3265, 0.0
  %v3282 = vsel %vm843, %v3266, 0.0
  %v3283 = vadd.f32 %v3281, %v3282
  %v3284 = vsel %vm843, %v3267, 0.0
  %v3285 = vadd.f32 %v3283, %v3284
  %v3286 = vsel %vm843, %v3268, 0.0
  %v3287 = vadd.f32 %v3285, %v3286
  %v3288 = vsel %vm843, %v3269, 0.0
  %v3289 = vadd.f32 %v3287, %v3288
  %v3290 = vsel %vm843, %v3270, 0.0
  %v3291 = vadd.f32 %v3289, %v3290
  %v3292 = vsel %vm843, %v3271, 0.0
  %v3293 = vadd.f32 %v3291, %v3292
  %v3294 = vsel %vm843, %v3272, 0.0
  %v3295 = vadd.f32 %v3293, %v3294
  %v3296 = vsel %vm843, %v3273, 0.0
  %v3297 = vadd.f32 %v3295, %v3296
  %v3298 = vsel %vm843, %v3274, 0.0
  %v3299 = vadd.f32 %v3297, %v3298
  %v3300 = vsel %vm843, %v3275, 0.0
  %v3301 = vadd.f32 %v3299, %v3300
  %v3302 = vsel %vm843, %v3276, 0.0
  %v3303 = vadd.f32 %v3301, %v3302
  %v3304 = vsel %vm843, %v3277, 0.0
  %v3305 = vadd.f32 %v3303, %v3304
  %v3306 = vsel %vm843, %v3278, 0.0
  %v3307 = vadd.f32 %v3305, %v3306
  %v3308 = vsel %vm843, %v3279, 0.0
  %v3309 = vadd.f32 %v3307, %v3308
  %v3310 = vsel %vm843, %v3280, 0.0
  %v3311 = vadd.f32 %v3309, %v3310
  %v3312 = vrot.slane %v3311, 4
  %v3313 = vadd.f32 %v3311, %v3312
  %v3314 = vrot.slane %v3313, 2
  %v3315 = vadd.f32 %v3313, %v3314
  %v3316 = vrot.slane %v3315, 1
  %v3317 = vadd.f32 %v3315, %v3316
  %3318 = vst.msk [vmem:[%s5 + $0x1] sm:$0x1] %vm100, %v3317
  // Predicated region
  $region18: #{down_pallas.3} parent=0 // pred_check
    _
  $region19: #{down_pallas.3} parent=0 // pred_check_branch
    %3320 = sbr.rel (0) target = $region21
  $region20: #{down_pallas.3} parent=0 // pred_region
    _
  $region21: #{down_pallas.3} parent=0 // pred_fallthru
    _
  // Predicated region
  $region22: #{down_pallas.3} parent=0 // pred_check
    _
  $region23: #{down_pallas.3} parent=0 // pred_check_branch
    %3322 = sbr.rel (0) target = $region25
  $region24: #{down_pallas.3} parent=0 // pred_region
    _
  $region25: #{down_pallas.3} parent=0 // pred_fallthru
    _
  // Predicated region
  $region26: #{down_pallas.3} parent=0 // pred_check
    _
  $region27: #{down_pallas.3} parent=0 // pred_check_branch
    %3324 = sbr.rel (0) target = $region29
  $region28: #{down_pallas.3} parent=0 // pred_region
    _
  $region29: #{down_pallas.3} parent=0 // pred_fallthru
    _
  // Predicated region
  $region30: #{down_pallas.3} parent=0 // pred_check
    _
  $region31: #{down_pallas.3} parent=0 // pred_check_branch
    %3326 = sbr.rel (0) target = $region33
  $region32: #{down_pallas.3} parent=0 // pred_region
    _
  $region33: #{down_pallas.3} parent=0 // pred_fallthru
    _

// kernel: down_pallas.2
$region0: #{down_pallas.2}
  #allocation0 [shape = 'u32[]', space=smem, size = 0x4, offset = 0x4, fixed_abs, tag = 'smem constant byte address 0x4 - core index']
  #allocation1 [shape = 'u32[144,128]{1,0:T(1,128)}', space=vmem, size = 0x12000, scoped, tag = 'internal scratch']
  #allocation2 [shape = 'bf16[2,10,10,4]{3,2,1,0:T(8,128)(2,1)}', space=vmem, size = 0x14000, scoped, tag = 'scratch operand']
  %s0 = inlined_call_operand.vmem [shape: bf16[2,8,2,8,8], index: 0, kind: input, shape index: {}]
  %s1 = inlined_call_operand.vmem [shape: bf16[9,4,8], index: 1, kind: input, shape index: {}]
  %s2 = inlined_call_operand.vmem [shape: f32[128,8], index: 2, kind: output, shape index: {0}]
  %s3 = inlined_call_operand.vmem [shape: f32[1,2,8], index: 3, kind: output, shape index: {1}]
  %4 = xla_tuple %s2, %s3
  %s5 = sld [smem:[#allocation0]]
  $region26: #{down_pallas.2} parent=0
    _
  %s7 = ssub.s32 1, %s5
  %s8 = scalar_select 0, %s7, %s5
  // Predicated region
  $region2: #{down_pallas.2} parent=0 // pred_check
    _
  $region3: #{down_pallas.2} parent=0 // pred_check_branch
    %10 = sbr.rel (0) target = $region5
  $region4: #{down_pallas.2} parent=0 // pred_region
    _
  $region5: #{down_pallas.2} parent=0 // pred_fallthru
    _
  // Predicated region
  $region6: #{down_pallas.2} parent=0 // pred_check
    _
  $region7: #{down_pallas.2} parent=0 // pred_check_branch
    %12 = sbr.rel (0) target = $region9
  $region8: #{down_pallas.2} parent=0 // pred_region
    _
  $region9: #{down_pallas.2} parent=0 // pred_fallthru
    _
  %v14 = vld [vmem:[%s0] sm:$0xf]
  %v15 = vld [vmem:[%s0 + $0x8] sm:$0xf]
  %v16 = vld [vmem:[%s0 + $0x10] sm:$0xf]
  %v17 = vld [vmem:[%s0 + $0x18] sm:$0xf]
  %v18 = vld [vmem:[%s0 + $0x20] sm:$0xf]
  %v19 = vld [vmem:[%s0 + $0x28] sm:$0xf]
  %v20 = vld [vmem:[%s0 + $0x30] sm:$0xf]
  %v21 = vld [vmem:[%s0 + $0x38] sm:$0xf]
  %v22 = vld [vmem:[%s0 + $0x40] sm:$0xf]
  %v23 = vld [vmem:[%s0 + $0x48] sm:$0xf]
  %v24 = vld [vmem:[%s0 + $0x50] sm:$0xf]
  %v25 = vld [vmem:[%s0 + $0x58] sm:$0xf]
  %v26 = vld [vmem:[%s0 + $0x60] sm:$0xf]
  %v27 = vld [vmem:[%s0 + $0x68] sm:$0xf]
  %v28 = vld [vmem:[%s0 + $0x70] sm:$0xf]
  %v29 = vld [vmem:[%s0 + $0x78] sm:$0xf]
  %v30 = vunpack.c.l.bf16 %v14
  %v31 = vunpack.c.l.bf16 %v15
  %v32 = vunpack.c.l.bf16 %v16
  %v33 = vunpack.c.l.bf16 %v17
  %v34 = vunpack.c.l.bf16 %v18
  %v35 = vunpack.c.l.bf16 %v19
  %v36 = vunpack.c.l.bf16 %v20
  %v37 = vunpack.c.l.bf16 %v21
  %v38 = vunpack.c.l.bf16 %v22
  %v39 = vunpack.c.l.bf16 %v23
  %v40 = vunpack.c.l.bf16 %v24
  %v41 = vunpack.c.l.bf16 %v25
  %v42 = vunpack.c.l.bf16 %v26
  %v43 = vunpack.c.l.bf16 %v27
  %v44 = vunpack.c.l.bf16 %v28
  %v45 = vunpack.c.l.bf16 %v29
  %s46 = scalar_lea.vmem %s0, 4
  %v47 = vld [vmem:[%s46] sm:$0xf]
  %v48 = vld [vmem:[%s46 + $0x8] sm:$0xf]
  %v49 = vld [vmem:[%s46 + $0x10] sm:$0xf]
  %v50 = vld [vmem:[%s46 + $0x18] sm:$0xf]
  %v51 = vld [vmem:[%s46 + $0x20] sm:$0xf]
  %v52 = vld [vmem:[%s46 + $0x28] sm:$0xf]
  %v53 = vld [vmem:[%s46 + $0x30] sm:$0xf]
  %v54 = vld [vmem:[%s46 + $0x38] sm:$0xf]
  %v55 = vld [vmem:[%s46 + $0x40] sm:$0xf]
  %v56 = vld [vmem:[%s46 + $0x48] sm:$0xf]
  %v57 = vld [vmem:[%s46 + $0x50] sm:$0xf]
  %v58 = vld [vmem:[%s46 + $0x58] sm:$0xf]
  %v59 = vld [vmem:[%s46 + $0x60] sm:$0xf]
  %v60 = vld [vmem:[%s46 + $0x68] sm:$0xf]
  %v61 = vld [vmem:[%s46 + $0x70] sm:$0xf]
  %v62 = vld [vmem:[%s46 + $0x78] sm:$0xf]
  %v63 = vunpack.c.l.bf16 %v47
  %v64 = vunpack.c.l.bf16 %v48
  %v65 = vunpack.c.l.bf16 %v49
  %v66 = vunpack.c.l.bf16 %v50
  %v67 = vunpack.c.l.bf16 %v51
  %v68 = vunpack.c.l.bf16 %v52
  %v69 = vunpack.c.l.bf16 %v53
  %v70 = vunpack.c.l.bf16 %v54
  %v71 = vunpack.c.l.bf16 %v55
  %v72 = vunpack.c.l.bf16 %v56
  %v73 = vunpack.c.l.bf16 %v57
  %v74 = vunpack.c.l.bf16 %v58
  %v75 = vunpack.c.l.bf16 %v59
  %v76 = vunpack.c.l.bf16 %v60
  %v77 = vunpack.c.l.bf16 %v61
  %v78 = vunpack.c.l.bf16 %v62
  %v79 = vadd.f32 %v30, %v63
  %v80 = vadd.f32 %v31, %v64
  %v81 = vadd.f32 %v32, %v65
  %v82 = vadd.f32 %v33, %v66
  %v83 = vadd.f32 %v34, %v67
  %v84 = vadd.f32 %v35, %v68
  %v85 = vadd.f32 %v36, %v69
  %v86 = vadd.f32 %v37, %v70
  %v87 = vadd.f32 %v38, %v71
  %v88 = vadd.f32 %v39, %v72
  %v89 = vadd.f32 %v40, %v73
  %v90 = vadd.f32 %v41, %v74
  %v91 = vadd.f32 %v42, %v75
  %v92 = vadd.f32 %v43, %v76
  %v93 = vadd.f32 %v44, %v77
  %v94 = vadd.f32 %v45, %v78
  %111 = vrot.lane.b32.xlu0 %v79, 124
  %v112 = vpop.permute.xlu0 %111
  %113 = vrot.lane.b32.xlu0 %v80, 124
  %v114 = vpop.permute.xlu0 %113
  %115 = vrot.lane.b32.xlu0 %v81, 124
  %v116 = vpop.permute.xlu0 %115
  %117 = vrot.lane.b32.xlu0 %v82, 124
  %v118 = vpop.permute.xlu0 %117
  %119 = vrot.lane.b32.xlu0 %v83, 124
  %v120 = vpop.permute.xlu0 %119
  %121 = vrot.lane.b32.xlu0 %v84, 124
  %v122 = vpop.permute.xlu0 %121
  %123 = vrot.lane.b32.xlu0 %v85, 124
  %v124 = vpop.permute.xlu0 %123
  %125 = vrot.lane.b32.xlu0 %v86, 124
  %v126 = vpop.permute.xlu0 %125
  %127 = vrot.lane.b32.xlu0 %v87, 124
  %v128 = vpop.permute.xlu0 %127
  %129 = vrot.lane.b32.xlu0 %v88, 124
  %v130 = vpop.permute.xlu0 %129
  %131 = vrot.lane.b32.xlu0 %v89, 124
  %v132 = vpop.permute.xlu0 %131
  %133 = vrot.lane.b32.xlu0 %v90, 124
  %v134 = vpop.permute.xlu0 %133
  %135 = vrot.lane.b32.xlu0 %v91, 124
  %v136 = vpop.permute.xlu0 %135
  %137 = vrot.lane.b32.xlu0 %v92, 124
  %v138 = vpop.permute.xlu0 %137
  %139 = vrot.lane.b32.xlu0 %v93, 124
  %v140 = vpop.permute.xlu0 %139
  %141 = vrot.lane.b32.xlu0 %v94, 124
  %v142 = vpop.permute.xlu0 %141
  %v159 = vadd.f32 %v79, %v112
  %v160 = vadd.f32 %v80, %v114
  %v161 = vadd.f32 %v81, %v116
  %v162 = vadd.f32 %v82, %v118
  %v163 = vadd.f32 %v83, %v120
  %v164 = vadd.f32 %v84, %v122
  %v165 = vadd.f32 %v85, %v124
  %v166 = vadd.f32 %v86, %v126
  %v167 = vadd.f32 %v87, %v128
  %v168 = vadd.f32 %v88, %v130
  %v169 = vadd.f32 %v89, %v132
  %v170 = vadd.f32 %v90, %v134
  %v171 = vadd.f32 %v91, %v136
  %v172 = vadd.f32 %v92, %v138
  %v173 = vadd.f32 %v93, %v140
  %v174 = vadd.f32 %v94, %v142
  %v175 = vmul.f32 %v159, 0.25
  %v176 = vmul.f32 %v160, 0.25
  %v177 = vmul.f32 %v161, 0.25
  %v178 = vmul.f32 %v162, 0.25
  %v179 = vmul.f32 %v163, 0.25
  %v180 = vmul.f32 %v164, 0.25
  %v181 = vmul.f32 %v165, 0.25
  %v182 = vmul.f32 %v166, 0.25
  %v183 = vmul.f32 %v167, 0.25
  %v184 = vmul.f32 %v168, 0.25
  %v185 = vmul.f32 %v169, 0.25
  %v186 = vmul.f32 %v170, 0.25
  %v187 = vmul.f32 %v171, 0.25
  %v188 = vmul.f32 %v172, 0.25
  %v189 = vmul.f32 %v173, 0.25
  %v190 = vmul.f32 %v174, 0.25
  %vm191 = vcmask 27648
  %192 = vst.msk [vmem:[#allocation2] sm:$0xf] %vm191, 0
  %vm193 = vcmask 24576
  %194 = vst.msk [vmem:[#allocation2 + $0x4] sm:$0x1] %vm193, 0
  %195 = vst.msk [vmem:[#allocation2 + $0x50] sm:$0xf] %vm191, 0
  %196 = vst.msk [vmem:[#allocation2 + $0x54] sm:$0x1] %vm193, 0
  %s197 = scalar_lea.vmem [#allocation2], 72
  %198 = vst.msk [vmem:[%s197] sm:$0xf] %vm191, 0
  %199 = vst.msk [vmem:[%s197 + $0x4] sm:$0x1] %vm193, 0
  %200 = vst.msk [vmem:[%s197 + $0x50] sm:$0xf] %vm191, 0
  %201 = vst.msk [vmem:[%s197 + $0x54] sm:$0x1] %vm193, 0
  %vm202 = vcmask 24576
  %vm203 = vsmask.f32 256
  %vm204 = vmand %vm202, %vm203
  %v205 = vld [vmem:[#allocation2] sm:$0x1]
  %v206 = vsel %vm204, 0, %v205
  %207 = vst [vmem:[#allocation2] sm:$0x1] %v206
  %v208 = vld [vmem:[#allocation2 + $0x8] sm:$0x1]
  %v209 = vsel %vm204, 0, %v208
  %210 = vst [vmem:[#allocation2 + $0x8] sm:$0x1] %v209
  %v211 = vld [vmem:[#allocation2 + $0x10] sm:$0x1]
  %v212 = vsel %vm204, 0, %v211
  %213 = vst [vmem:[#allocation2 + $0x10] sm:$0x1] %v212
  %v214 = vld [vmem:[#allocation2 + $0x18] sm:$0x1]
  %v215 = vsel %vm204, 0, %v214
  %216 = vst [vmem:[#allocation2 + $0x18] sm:$0x1] %v215
  %v217 = vld [vmem:[#allocation2 + $0x20] sm:$0x1]
  %v218 = vsel %vm204, 0, %v217
  %219 = vst [vmem:[#allocation2 + $0x20] sm:$0x1] %v218
  %v220 = vld [vmem:[#allocation2 + $0x28] sm:$0x1]
  %v221 = vsel %vm204, 0, %v220
  %222 = vst [vmem:[#allocation2 + $0x28] sm:$0x1] %v221
  %v223 = vld [vmem:[#allocation2 + $0x30] sm:$0x1]
  %v224 = vsel %vm204, 0, %v223
  %225 = vst [vmem:[#allocation2 + $0x30] sm:$0x1] %v224
  %v226 = vld [vmem:[#allocation2 + $0x38] sm:$0x1]
  %v227 = vsel %vm204, 0, %v226
  %228 = vst [vmem:[#allocation2 + $0x38] sm:$0x1] %v227
  %v229 = vld [vmem:[#allocation2 + $0x40] sm:$0x1]
  %v230 = vsel %vm204, 0, %v229
  %231 = vst [vmem:[#allocation2 + $0x40] sm:$0x1] %v230
  %v232 = vld [vmem:[#allocation2 + $0x48] sm:$0x1]
  %v233 = vsel %vm204, 0, %v232
  %234 = vst [vmem:[#allocation2 + $0x48] sm:$0x1] %v233
  %v235 = vld [vmem:[#allocation2 + $0x50] sm:$0x1]
  %v236 = vsel %vm204, 0, %v235
  %237 = vst [vmem:[#allocation2 + $0x50] sm:$0x1] %v236
  %v238 = vld [vmem:[#allocation2 + $0x58] sm:$0x1]
  %v239 = vsel %vm204, 0, %v238
  %240 = vst [vmem:[#allocation2 + $0x58] sm:$0x1] %v239
  %v241 = vld [vmem:[#allocation2 + $0x60] sm:$0x1]
  %v242 = vsel %vm204, 0, %v241
  %243 = vst [vmem:[#allocation2 + $0x60] sm:$0x1] %v242
  %v244 = vld [vmem:[#allocation2 + $0x68] sm:$0x1]
  %v245 = vsel %vm204, 0, %v244
  %246 = vst [vmem:[#allocation2 + $0x68] sm:$0x1] %v245
  %v247 = vld [vmem:[#allocation2 + $0x70] sm:$0x1]
  %v248 = vsel %vm204, 0, %v247
  %249 = vst [vmem:[#allocation2 + $0x70] sm:$0x1] %v248
  %v250 = vld [vmem:[#allocation2 + $0x78] sm:$0x1]
  %v251 = vsel %vm204, 0, %v250
  %252 = vst [vmem:[#allocation2 + $0x78] sm:$0x1] %v251
  %v253 = vld [vmem:[#allocation2 + $0x80] sm:$0x1]
  %v254 = vsel %vm204, 0, %v253
  %255 = vst [vmem:[#allocation2 + $0x80] sm:$0x1] %v254
  %v256 = vld [vmem:[#allocation2 + $0x88] sm:$0x1]
  %v257 = vsel %vm204, 0, %v256
  %258 = vst [vmem:[#allocation2 + $0x88] sm:$0x1] %v257
  %v259 = vld [vmem:[#allocation2 + $0x90] sm:$0x1]
  %v260 = vsel %vm204, 0, %v259
  %261 = vst [vmem:[#allocation2 + $0x90] sm:$0x1] %v260
  %v262 = vld [vmem:[#allocation2 + $0x98] sm:$0x1]
  %v263 = vsel %vm204, 0, %v262
  %264 = vst [vmem:[#allocation2 + $0x98] sm:$0x1] %v263
  %vm265 = vsmask.f32 7938
  %vm266 = vmand %vm202, %vm265
  %v267 = vld [vmem:[#allocation2 + $0x4] sm:$0x1]
  %v268 = vsel %vm266, 0, %v267
  %269 = vst [vmem:[#allocation2 + $0x4] sm:$0x1] %v268
  %v270 = vld [vmem:[#allocation2 + $0xc] sm:$0x1]
  %v271 = vsel %vm266, 0, %v270
  %272 = vst [vmem:[#allocation2 + $0xc] sm:$0x1] %v271
  %v273 = vld [vmem:[#allocation2 + $0x14] sm:$0x1]
  %v274 = vsel %vm266, 0, %v273
  %275 = vst [vmem:[#allocation2 + $0x14] sm:$0x1] %v274
  %v276 = vld [vmem:[#allocation2 + $0x1c] sm:$0x1]
  %v277 = vsel %vm266, 0, %v276
  %278 = vst [vmem:[#allocation2 + $0x1c] sm:$0x1] %v277
  %v279 = vld [vmem:[#allocation2 + $0x24] sm:$0x1]
  %v280 = vsel %vm266, 0, %v279
  %281 = vst [vmem:[#allocation2 + $0x24] sm:$0x1] %v280
  %v282 = vld [vmem:[#allocation2 + $0x2c] sm:$0x1]
  %v283 = vsel %vm266, 0, %v282
  %284 = vst [vmem:[#allocation2 + $0x2c] sm:$0x1] %v283
  %v285 = vld [vmem:[#allocation2 + $0x34] sm:$0x1]
  %v286 = vsel %vm266, 0, %v285
  %287 = vst [vmem:[#allocation2 + $0x34] sm:$0x1] %v286
  %v288 = vld [vmem:[#allocation2 + $0x3c] sm:$0x1]
  %v289 = vsel %vm266, 0, %v288
  %290 = vst [vmem:[#allocation2 + $0x3c] sm:$0x1] %v289
  %v291 = vld [vmem:[#allocation2 + $0x44] sm:$0x1]
  %v292 = vsel %vm266, 0, %v291
  %293 = vst [vmem:[#allocation2 + $0x44] sm:$0x1] %v292
  %v294 = vld [vmem:[#allocation2 + $0x4c] sm:$0x1]
  %v295 = vsel %vm266, 0, %v294
  %296 = vst [vmem:[#allocation2 + $0x4c] sm:$0x1] %v295
  %v297 = vld [vmem:[#allocation2 + $0x54] sm:$0x1]
  %v298 = vsel %vm266, 0, %v297
  %299 = vst [vmem:[#allocation2 + $0x54] sm:$0x1] %v298
  %v300 = vld [vmem:[#allocation2 + $0x5c] sm:$0x1]
  %v301 = vsel %vm266, 0, %v300
  %302 = vst [vmem:[#allocation2 + $0x5c] sm:$0x1] %v301
  %v303 = vld [vmem:[#allocation2 + $0x64] sm:$0x1]
  %v304 = vsel %vm266, 0, %v303
  %305 = vst [vmem:[#allocation2 + $0x64] sm:$0x1] %v304
  %v306 = vld [vmem:[#allocation2 + $0x6c] sm:$0x1]
  %v307 = vsel %vm266, 0, %v306
  %308 = vst [vmem:[#allocation2 + $0x6c] sm:$0x1] %v307
  %v309 = vld [vmem:[#allocation2 + $0x74] sm:$0x1]
  %v310 = vsel %vm266, 0, %v309
  %311 = vst [vmem:[#allocation2 + $0x74] sm:$0x1] %v310
  %v312 = vld [vmem:[#allocation2 + $0x7c] sm:$0x1]
  %v313 = vsel %vm266, 0, %v312
  %314 = vst [vmem:[#allocation2 + $0x7c] sm:$0x1] %v313
  %v315 = vld [vmem:[#allocation2 + $0x84] sm:$0x1]
  %v316 = vsel %vm266, 0, %v315
  %317 = vst [vmem:[#allocation2 + $0x84] sm:$0x1] %v316
  %v318 = vld [vmem:[#allocation2 + $0x8c] sm:$0x1]
  %v319 = vsel %vm266, 0, %v318
  %320 = vst [vmem:[#allocation2 + $0x8c] sm:$0x1] %v319
  %v321 = vld [vmem:[#allocation2 + $0x94] sm:$0x1]
  %v322 = vsel %vm266, 0, %v321
  %323 = vst [vmem:[#allocation2 + $0x94] sm:$0x1] %v322
  %v324 = vld [vmem:[#allocation2 + $0x9c] sm:$0x1]
  %v325 = vsel %vm266, 0, %v324
  %326 = vst [vmem:[#allocation2 + $0x9c] sm:$0x1] %v325
  %v327 = vpack.c.bf16 %v175, %v175
  %v328 = vpack.c.bf16 %v176, %v176
  %v329 = vpack.c.bf16 %v177, %v177
  %v330 = vpack.c.bf16 %v178, %v178
  %v331 = vpack.c.bf16 %v179, %v179
  %v332 = vpack.c.bf16 %v180, %v180
  %v333 = vpack.c.bf16 %v181, %v181
  %v334 = vpack.c.bf16 %v182, %v182
  %v335 = vpack.c.bf16 %v183, %v183
  %v336 = vpack.c.bf16 %v184, %v184
  %v337 = vpack.c.bf16 %v185, %v185
  %v338 = vpack.c.bf16 %v186, %v186
  %v339 = vpack.c.bf16 %v187, %v187
  %v340 = vpack.c.bf16 %v188, %v188
  %v341 = vpack.c.bf16 %v189, %v189
  %v342 = vpack.c.bf16 %v190, %v190
  %v359 = vunpack.c.l.b16 %v327
  %v360 = vunpack.c.l.b16 %v328
  %v361 = vunpack.c.l.b16 %v329
  %v362 = vunpack.c.l.b16 %v330
  %v363 = vunpack.c.l.b16 %v331
  %v364 = vunpack.c.l.b16 %v332
  %v365 = vunpack.c.l.b16 %v333
  %v366 = vunpack.c.l.b16 %v334
  %v367 = vunpack.c.l.b16 %v335
  %v368 = vunpack.c.l.b16 %v336
  %v369 = vunpack.c.l.b16 %v337
  %v370 = vunpack.c.l.b16 %v338
  %v371 = vunpack.c.l.b16 %v339
  %v372 = vunpack.c.l.b16 %v340
  %v373 = vunpack.c.l.b16 %v341
  %v374 = vunpack.c.l.b16 %v342
  %v375 = vpack.c.b16 %v359, %v359
  %v376 = vpack.c.b16 %v360, %v360
  %v377 = vpack.c.b16 %v361, %v361
  %v378 = vpack.c.b16 %v362, %v362
  %v379 = vpack.c.b16 %v363, %v363
  %v380 = vpack.c.b16 %v364, %v364
  %v381 = vpack.c.b16 %v365, %v365
  %v382 = vpack.c.b16 %v366, %v366
  %v383 = vpack.c.b16 %v367, %v367
  %v384 = vpack.c.b16 %v368, %v368
  %v385 = vpack.c.b16 %v369, %v369
  %v386 = vpack.c.b16 %v370, %v370
  %v387 = vpack.c.b16 %v371, %v371
  %v388 = vpack.c.b16 %v372, %v372
  %v389 = vpack.c.b16 %v373, %v373
  %v390 = vpack.c.b16 %v374, %v374
  %v392 = vshrl.u32 %v375, 16
  %v394 = vrot.slane %v392, 7
  %v395 = vshll.u32 %v375, 16
  %v397 = vor.u32 %v394, %v395
  %v398 = vrot.slane %v394, 4
  %v400 = vshrl.u32 %v376, 16
  %v402 = vrot.slane %v400, 7
  %v403 = vshll.u32 %v376, 16
  %v405 = vor.u32 %v402, %v403
  %v406 = vrot.slane %v402, 4
  %v408 = vshrl.u32 %v377, 16
  %v410 = vrot.slane %v408, 7
  %v411 = vshll.u32 %v377, 16
  %v413 = vor.u32 %v410, %v411
  %v414 = vrot.slane %v410, 4
  %v416 = vshrl.u32 %v378, 16
  %v418 = vrot.slane %v416, 7
  %v419 = vshll.u32 %v378, 16
  %v421 = vor.u32 %v418, %v419
  %v422 = vrot.slane %v418, 4
  %v424 = vshrl.u32 %v379, 16
  %v426 = vrot.slane %v424, 7
  %v427 = vshll.u32 %v379, 16
  %v429 = vor.u32 %v426, %v427
  %v430 = vrot.slane %v426, 4
  %v432 = vshrl.u32 %v380, 16
  %v434 = vrot.slane %v432, 7
  %v435 = vshll.u32 %v380, 16
  %v437 = vor.u32 %v434, %v435
  %v438 = vrot.slane %v434, 4
  %v440 = vshrl.u32 %v381, 16
  %v442 = vrot.slane %v440, 7
  %v443 = vshll.u32 %v381, 16
  %v445 = vor.u32 %v442, %v443
  %v446 = vrot.slane %v442, 4
  %v448 = vshrl.u32 %v382, 16
  %v450 = vrot.slane %v448, 7
  %v451 = vshll.u32 %v382, 16
  %v453 = vor.u32 %v450, %v451
  %v454 = vrot.slane %v450, 4
  %v456 = vshrl.u32 %v383, 16
  %v458 = vrot.slane %v456, 7
  %v459 = vshll.u32 %v383, 16
  %v461 = vor.u32 %v458, %v459
  %v462 = vrot.slane %v458, 4
  %v464 = vshrl.u32 %v384, 16
  %v466 = vrot.slane %v464, 7
  %v467 = vshll.u32 %v384, 16
  %v469 = vor.u32 %v466, %v467
  %v470 = vrot.slane %v466, 4
  %v472 = vshrl.u32 %v385, 16
  %v474 = vrot.slane %v472, 7
  %v475 = vshll.u32 %v385, 16
  %v477 = vor.u32 %v474, %v475
  %v478 = vrot.slane %v474, 4
  %v480 = vshrl.u32 %v386, 16
  %v482 = vrot.slane %v480, 7
  %v483 = vshll.u32 %v386, 16
  %v485 = vor.u32 %v482, %v483
  %v486 = vrot.slane %v482, 4
  %v488 = vshrl.u32 %v387, 16
  %v490 = vrot.slane %v488, 7
  %v491 = vshll.u32 %v387, 16
  %v493 = vor.u32 %v490, %v491
  %v494 = vrot.slane %v490, 4
  %v496 = vshrl.u32 %v388, 16
  %v498 = vrot.slane %v496, 7
  %v499 = vshll.u32 %v388, 16
  %v501 = vor.u32 %v498, %v499
  %v502 = vrot.slane %v498, 4
  %v504 = vshrl.u32 %v389, 16
  %v506 = vrot.slane %v504, 7
  %v507 = vshll.u32 %v389, 16
  %v509 = vor.u32 %v506, %v507
  %v510 = vrot.slane %v506, 4
  %v512 = vshrl.u32 %v390, 16
  %v514 = vrot.slane %v512, 7
  %v515 = vshll.u32 %v390, 16
  %v517 = vor.u32 %v514, %v515
  %v518 = vrot.slane %v514, 4
  %s551 = scalar_lea.vmem [#allocation2], 8
  %vm552 = vcmask 27648
  %vm553 = vmand %vm552, %vm265
  %v554 = vld [vmem:[%s551] sm:$0xf]
  %v555 = vsel %vm553, %v397, %v554
  %556 = vst [vmem:[%s551] sm:$0xf] %v555
  %v557 = vld [vmem:[%s551 + $0x4] sm:$0x1]
  %v558 = vsel %vm204, %v398, %v557
  %559 = vst [vmem:[%s551 + $0x4] sm:$0x1] %v558
  %v560 = vld [vmem:[%s551 + $0x8] sm:$0xf]
  %v561 = vsel %vm553, %v405, %v560
  %562 = vst [vmem:[%s551 + $0x8] sm:$0xf] %v561
  %v563 = vld [vmem:[%s551 + $0xc] sm:$0x1]
  %v564 = vsel %vm204, %v406, %v563
  %565 = vst [vmem:[%s551 + $0xc] sm:$0x1] %v564
  %v566 = vld [vmem:[%s551 + $0x10] sm:$0xf]
  %v567 = vsel %vm553, %v413, %v566
  %568 = vst [vmem:[%s551 + $0x10] sm:$0xf] %v567
  %v569 = vld [vmem:[%s551 + $0x14] sm:$0x1]
  %v570 = vsel %vm204, %v414, %v569
  %571 = vst [vmem:[%s551 + $0x14] sm:$0x1] %v570
  %v572 = vld [vmem:[%s551 + $0x18] sm:$0xf]
  %v573 = vsel %vm553, %v421, %v572
  %574 = vst [vmem:[%s551 + $0x18] sm:$0xf] %v573
  %v575 = vld [vmem:[%s551 + $0x1c] sm:$0x1]
  %v576 = vsel %vm204, %v422, %v575
  %577 = vst [vmem:[%s551 + $0x1c] sm:$0x1] %v576
  %v578 = vld [vmem:[%s551 + $0x20] sm:$0xf]
  %v579 = vsel %vm553, %v429, %v578
  %580 = vst [vmem:[%s551 + $0x20] sm:$0xf] %v579
  %v581 = vld [vmem:[%s551 + $0x24] sm:$0x1]
  %v582 = vsel %vm204, %v430, %v581
  %583 = vst [vmem:[%s551 + $0x24] sm:$0x1] %v582
  %v584 = vld [vmem:[%s551 + $0x28] sm:$0xf]
  %v585 = vsel %vm553, %v437, %v584
  %586 = vst [vmem:[%s551 + $0x28] sm:$0xf] %v585
  %v587 = vld [vmem:[%s551 + $0x2c] sm:$0x1]
  %v588 = vsel %vm204, %v438, %v587
  %589 = vst [vmem:[%s551 + $0x2c] sm:$0x1] %v588
  %v590 = vld [vmem:[%s551 + $0x30] sm:$0xf]
  %v591 = vsel %vm553, %v445, %v590
  %592 = vst [vmem:[%s551 + $0x30] sm:$0xf] %v591
  %v593 = vld [vmem:[%s551 + $0x34] sm:$0x1]
  %v594 = vsel %vm204, %v446, %v593
  %595 = vst [vmem:[%s551 + $0x34] sm:$0x1] %v594
  %v596 = vld [vmem:[%s551 + $0x38] sm:$0xf]
  %v597 = vsel %vm553, %v453, %v596
  %598 = vst [vmem:[%s551 + $0x38] sm:$0xf] %v597
  %v599 = vld [vmem:[%s551 + $0x3c] sm:$0x1]
  %v600 = vsel %vm204, %v454, %v599
  %601 = vst [vmem:[%s551 + $0x3c] sm:$0x1] %v600
  %v602 = vld [vmem:[%s551 + $0x50] sm:$0xf]
  %v603 = vsel %vm553, %v461, %v602
  %604 = vst [vmem:[%s551 + $0x50] sm:$0xf] %v603
  %v605 = vld [vmem:[%s551 + $0x54] sm:$0x1]
  %v606 = vsel %vm204, %v462, %v605
  %607 = vst [vmem:[%s551 + $0x54] sm:$0x1] %v606
  %v608 = vld [vmem:[%s551 + $0x58] sm:$0xf]
  %v609 = vsel %vm553, %v469, %v608
  %610 = vst [vmem:[%s551 + $0x58] sm:$0xf] %v609
  %v611 = vld [vmem:[%s551 + $0x5c] sm:$0x1]
  %v612 = vsel %vm204, %v470, %v611
  %613 = vst [vmem:[%s551 + $0x5c] sm:$0x1] %v612
  %v614 = vld [vmem:[%s551 + $0x60] sm:$0xf]
  %v615 = vsel %vm553, %v477, %v614
  %616 = vst [vmem:[%s551 + $0x60] sm:$0xf] %v615
  %v617 = vld [vmem:[%s551 + $0x64] sm:$0x1]
  %v618 = vsel %vm204, %v478, %v617
  %619 = vst [vmem:[%s551 + $0x64] sm:$0x1] %v618
  %v620 = vld [vmem:[%s551 + $0x68] sm:$0xf]
  %v621 = vsel %vm553, %v485, %v620
  %622 = vst [vmem:[%s551 + $0x68] sm:$0xf] %v621
  %v623 = vld [vmem:[%s551 + $0x6c] sm:$0x1]
  %v624 = vsel %vm204, %v486, %v623
  %625 = vst [vmem:[%s551 + $0x6c] sm:$0x1] %v624
  %v626 = vld [vmem:[%s551 + $0x70] sm:$0xf]
  %v627 = vsel %vm553, %v493, %v626
  %628 = vst [vmem:[%s551 + $0x70] sm:$0xf] %v627
  %v629 = vld [vmem:[%s551 + $0x74] sm:$0x1]
  %v630 = vsel %vm204, %v494, %v629
  %631 = vst [vmem:[%s551 + $0x74] sm:$0x1] %v630
  %v632 = vld [vmem:[%s551 + $0x78] sm:$0xf]
  %v633 = vsel %vm553, %v501, %v632
  %634 = vst [vmem:[%s551 + $0x78] sm:$0xf] %v633
  %v635 = vld [vmem:[%s551 + $0x7c] sm:$0x1]
  %v636 = vsel %vm204, %v502, %v635
  %637 = vst [vmem:[%s551 + $0x7c] sm:$0x1] %v636
  %v638 = vld [vmem:[%s551 + $0x80] sm:$0xf]
  %v639 = vsel %vm553, %v509, %v638
  %640 = vst [vmem:[%s551 + $0x80] sm:$0xf] %v639
  %v641 = vld [vmem:[%s551 + $0x84] sm:$0x1]
  %v642 = vsel %vm204, %v510, %v641
  %643 = vst [vmem:[%s551 + $0x84] sm:$0x1] %v642
  %v644 = vld [vmem:[%s551 + $0x88] sm:$0xf]
  %v645 = vsel %vm553, %v517, %v644
  %646 = vst [vmem:[%s551 + $0x88] sm:$0xf] %v645
  %v647 = vld [vmem:[%s551 + $0x8c] sm:$0x1]
  %v648 = vsel %vm204, %v518, %v647
  %649 = vst [vmem:[%s551 + $0x8c] sm:$0x1] %v648
  %v650 = vld [vmem:[#allocation2] sm:$0xf]
  %v651 = vld [vmem:[#allocation2 + $0x8] sm:$0xf]
  %v652 = vld [vmem:[#allocation2 + $0x10] sm:$0xf]
  %v653 = vld [vmem:[#allocation2 + $0x18] sm:$0xf]
  %v654 = vld [vmem:[#allocation2 + $0x20] sm:$0xf]
  %v655 = vld [vmem:[#allocation2 + $0x28] sm:$0xf]
  %v656 = vld [vmem:[#allocation2 + $0x30] sm:$0xf]
  %v657 = vld [vmem:[#allocation2 + $0x38] sm:$0xf]
  %v658 = vld [vmem:[#allocation2 + $0x50] sm:$0xf]
  %v659 = vld [vmem:[#allocation2 + $0x58] sm:$0xf]
  %v660 = vld [vmem:[#allocation2 + $0x60] sm:$0xf]
  %v661 = vld [vmem:[#allocation2 + $0x68] sm:$0xf]
  %v662 = vld [vmem:[#allocation2 + $0x70] sm:$0xf]
  %v663 = vld [vmem:[#allocation2 + $0x78] sm:$0xf]
  %v664 = vld [vmem:[#allocation2 + $0x80] sm:$0xf]
  %v665 = vld [vmem:[#allocation2 + $0x88] sm:$0xf]
  %v666 = vld [vmem:[%s1] sm:$0x3]
  %v667 = vld [vmem:[#allocation2 + $0x4] sm:$0x1]
  %v668 = vld [vmem:[#allocation2 + $0xc] sm:$0x1]
  %v669 = vld [vmem:[#allocation2 + $0x14] sm:$0x1]
  %v670 = vld [vmem:[#allocation2 + $0x1c] sm:$0x1]
  %v671 = vld [vmem:[#allocation2 + $0x24] sm:$0x1]
  %v672 = vld [vmem:[#allocation2 + $0x2c] sm:$0x1]
  %v673 = vld [vmem:[#allocation2 + $0x34] sm:$0x1]
  %v674 = vld [vmem:[#allocation2 + $0x3c] sm:$0x1]
  %v675 = vld [vmem:[#allocation2 + $0x54] sm:$0x1]
  %v676 = vld [vmem:[#allocation2 + $0x5c] sm:$0x1]
  %v677 = vld [vmem:[#allocation2 + $0x64] sm:$0x1]
  %v678 = vld [vmem:[#allocation2 + $0x6c] sm:$0x1]
  %v679 = vld [vmem:[#allocation2 + $0x74] sm:$0x1]
  %v680 = vld [vmem:[#allocation2 + $0x7c] sm:$0x1]
  %v681 = vld [vmem:[#allocation2 + $0x84] sm:$0x1]
  %v682 = vld [vmem:[#allocation2 + $0x8c] sm:$0x1]
  %vm683 = vsmask.f32 3328
  %vm684 = vsmask.f32 7440
  %vm685 = vmor %vm683, %vm684
  %v687 = vshrl.u32 %v650, 16
  %v689 = vrot.slane %v687, 4
  %v690 = vshll.u32 %v650, 16
  %v692 = vrot.slane %v690, 5
  %v693 = vor.u32 %v689, %v692
  %v694 = vrot.slane %v693, 4
  %v696 = vshll.u32 %v667, 16
  %v698 = vrot.slane %v696, 5
  %v699 = vsel %vm685, %v694, %v698
  %v701 = vshrl.u32 %v651, 16
  %v703 = vrot.slane %v701, 4
  %v704 = vshll.u32 %v651, 16
  %v706 = vrot.slane %v704, 5
  %v707 = vor.u32 %v703, %v706
  %v708 = vrot.slane %v707, 4
  %v710 = vshll.u32 %v668, 16
  %v712 = vrot.slane %v710, 5
  %v713 = vsel %vm685, %v708, %v712
  %v715 = vshrl.u32 %v652, 16
  %v717 = vrot.slane %v715, 4
  %v718 = vshll.u32 %v652, 16
  %v720 = vrot.slane %v718, 5
  %v721 = vor.u32 %v717, %v720
  %v722 = vrot.slane %v721, 4
  %v724 = vshll.u32 %v669, 16
  %v726 = vrot.slane %v724, 5
  %v727 = vsel %vm685, %v722, %v726
  %v729 = vshrl.u32 %v653, 16
  %v731 = vrot.slane %v729, 4
  %v732 = vshll.u32 %v653, 16
  %v734 = vrot.slane %v732, 5
  %v735 = vor.u32 %v731, %v734
  %v736 = vrot.slane %v735, 4
  %v738 = vshll.u32 %v670, 16
  %v740 = vrot.slane %v738, 5
  %v741 = vsel %vm685, %v736, %v740
  %v743 = vshrl.u32 %v654, 16
  %v745 = vrot.slane %v743, 4
  %v746 = vshll.u32 %v654, 16
  %v748 = vrot.slane %v746, 5
  %v749 = vor.u32 %v745, %v748
  %v750 = vrot.slane %v749, 4
  %v752 = vshll.u32 %v671, 16
  %v754 = vrot.slane %v752, 5
  %v755 = vsel %vm685, %v750, %v754
  %v757 = vshrl.u32 %v655, 16
  %v759 = vrot.slane %v757, 4
  %v760 = vshll.u32 %v655, 16
  %v762 = vrot.slane %v760, 5
  %v763 = vor.u32 %v759, %v762
  %v764 = vrot.slane %v763, 4
  %v766 = vshll.u32 %v672, 16
  %v768 = vrot.slane %v766, 5
  %v769 = vsel %vm685, %v764, %v768
  %v771 = vshrl.u32 %v656, 16
  %v773 = vrot.slane %v771, 4
  %v774 = vshll.u32 %v656, 16
  %v776 = vrot.slane %v774, 5
  %v777 = vor.u32 %v773, %v776
  %v778 = vrot.slane %v777, 4
  %v780 = vshll.u32 %v673, 16
  %v782 = vrot.slane %v780, 5
  %v783 = vsel %vm685, %v778, %v782
  %v785 = vshrl.u32 %v657, 16
  %v787 = vrot.slane %v785, 4
  %v788 = vshll.u32 %v657, 16
  %v790 = vrot.slane %v788, 5
  %v791 = vor.u32 %v787, %v790
  %v792 = vrot.slane %v791, 4
  %v794 = vshll.u32 %v674, 16
  %v796 = vrot.slane %v794, 5
  %v797 = vsel %vm685, %v792, %v796
  %v799 = vshrl.u32 %v658, 16
  %v801 = vrot.slane %v799, 4
  %v802 = vshll.u32 %v658, 16
  %v804 = vrot.slane %v802, 5
  %v805 = vor.u32 %v801, %v804
  %v806 = vrot.slane %v805, 4
  %v808 = vshll.u32 %v675, 16
  %v810 = vrot.slane %v808, 5
  %v811 = vsel %vm685, %v806, %v810
  %v813 = vshrl.u32 %v659, 16
  %v815 = vrot.slane %v813, 4
  %v816 = vshll.u32 %v659, 16
  %v818 = vrot.slane %v816, 5
  %v819 = vor.u32 %v815, %v818
  %v820 = vrot.slane %v819, 4
  %v822 = vshll.u32 %v676, 16
  %v824 = vrot.slane %v822, 5
  %v825 = vsel %vm685, %v820, %v824
  %v827 = vshrl.u32 %v660, 16
  %v829 = vrot.slane %v827, 4
  %v830 = vshll.u32 %v660, 16
  %v832 = vrot.slane %v830, 5
  %v833 = vor.u32 %v829, %v832
  %v834 = vrot.slane %v833, 4
  %v836 = vshll.u32 %v677, 16
  %v838 = vrot.slane %v836, 5
  %v839 = vsel %vm685, %v834, %v838
  %v841 = vshrl.u32 %v661, 16
  %v843 = vrot.slane %v841, 4
  %v844 = vshll.u32 %v661, 16
  %v846 = vrot.slane %v844, 5
  %v847 = vor.u32 %v843, %v846
  %v848 = vrot.slane %v847, 4
  %v850 = vshll.u32 %v678, 16
  %v852 = vrot.slane %v850, 5
  %v853 = vsel %vm685, %v848, %v852
  %v855 = vshrl.u32 %v662, 16
  %v857 = vrot.slane %v855, 4
  %v858 = vshll.u32 %v662, 16
  %v860 = vrot.slane %v858, 5
  %v861 = vor.u32 %v857, %v860
  %v862 = vrot.slane %v861, 4
  %v864 = vshll.u32 %v679, 16
  %v866 = vrot.slane %v864, 5
  %v867 = vsel %vm685, %v862, %v866
  %v869 = vshrl.u32 %v663, 16
  %v871 = vrot.slane %v869, 4
  %v872 = vshll.u32 %v663, 16
  %v874 = vrot.slane %v872, 5
  %v875 = vor.u32 %v871, %v874
  %v876 = vrot.slane %v875, 4
  %v878 = vshll.u32 %v680, 16
  %v880 = vrot.slane %v878, 5
  %v881 = vsel %vm685, %v876, %v880
  %v883 = vshrl.u32 %v664, 16
  %v885 = vrot.slane %v883, 4
  %v886 = vshll.u32 %v664, 16
  %v888 = vrot.slane %v886, 5
  %v889 = vor.u32 %v885, %v888
  %v890 = vrot.slane %v889, 4
  %v892 = vshll.u32 %v681, 16
  %v894 = vrot.slane %v892, 5
  %v895 = vsel %vm685, %v890, %v894
  %v897 = vshrl.u32 %v665, 16
  %v899 = vrot.slane %v897, 4
  %v900 = vshll.u32 %v665, 16
  %v902 = vrot.slane %v900, 5
  %v903 = vor.u32 %v899, %v902
  %v904 = vrot.slane %v903, 4
  %v906 = vshll.u32 %v682, 16
  %v908 = vrot.slane %v906, 5
  %v909 = vsel %vm685, %v904, %v908
  %s910 = scalar_lea.vmem %s1, 2
  %v911 = vld [vmem:[%s910] sm:$0x3]
  %v912 = vunpack.c.l.b16 %v699
  %v913 = vunpack.c.l.b16 %v713
  %v914 = vunpack.c.l.b16 %v727
  %v915 = vunpack.c.l.b16 %v741
  %v916 = vunpack.c.l.b16 %v755
  %v917 = vunpack.c.l.b16 %v769
  %v918 = vunpack.c.l.b16 %v783
  %v919 = vunpack.c.l.b16 %v797
  %v920 = vunpack.c.l.b16 %v811
  %v921 = vunpack.c.l.b16 %v825
  %v922 = vunpack.c.l.b16 %v839
  %v923 = vunpack.c.l.b16 %v853
  %v924 = vunpack.c.l.b16 %v867
  %v925 = vunpack.c.l.b16 %v881
  %v926 = vunpack.c.l.b16 %v895
  %v927 = vunpack.c.l.b16 %v909
  %v928 = vpack.c.b16 %v913, %v912
  %v929 = vpack.c.b16 %v915, %v914
  %v930 = vpack.c.b16 %v917, %v916
  %v931 = vpack.c.b16 %v919, %v918
  %v932 = vpack.c.b16 %v921, %v920
  %v933 = vpack.c.b16 %v923, %v922
  %v934 = vpack.c.b16 %v925, %v924
  %v935 = vpack.c.b16 %v927, %v926
  %vm936 = vcmask 31744
  %v938 = vsel %vm936, %v928, 0
  %v941 = vsel %vm936, %v929, 0
  %v944 = vsel %vm936, %v930, 0
  %v947 = vsel %vm936, %v931, 0
  %v950 = vsel %vm936, %v932, 0
  %v953 = vsel %vm936, %v933, 0
  %v956 = vsel %vm936, %v934, 0
  %v959 = vsel %vm936, %v935, 0
  %vm961 = vcmask 1041408
  %v963 = vsel %vm961, %v911, 0
  %965 = vmatprep.subr.bf16.mxu0 0
  %966 = vmatpush1.bf16.msra.mxu0 %v963
  %967 = vmatprep.subr.bf16.mxu0 0
  %968 = vmatpush1.bf16.msra.mxu0 0
  %969 = vmatprep.subr.bf16.mxu0 0
  %970 = vmatpush1.bf16.msra.mxu0 0
  %971 = vmatprep.subr.bf16.mxu0 0
  %972 = vmatpush1.bf16.msra.mxu0 0
  %973 = vmatprep.subr.bf16.mxu0 0
  %974 = vmatpush1.bf16.msra.mxu0 0
  %975 = vmatprep.subr.bf16.mxu0 0
  %976 = vmatpush1.bf16.msra.mxu0 0
  %977 = vmatprep.subr.bf16.mxu0 0
  %978 = vmatpush1.bf16.msra.mxu0 0
  %979 = vmatprep.subr.bf16.mxu0 0
  %980 = vmatpush1.bf16.msra.mxu0 0
  %981 = vmatprep.subr.bf16.mxu0 0
  %982 = vmatpush1.bf16.msra.mxu0 0
  %983 = vmatprep.subr.bf16.mxu0 0
  %984 = vmatpush1.bf16.msra.mxu0 0
  %985 = vmatprep.subr.bf16.mxu0 0
  %986 = vmatpush1.bf16.msra.mxu0 0
  %987 = vmatprep.subr.bf16.mxu0 0
  %988 = vmatpush1.bf16.msra.mxu0 0
  %989 = vmatprep.subr.bf16.mxu0 0
  %990 = vmatpush1.bf16.msra.mxu0 0
  %991 = vmatprep.subr.bf16.mxu0 0
  %992 = vmatpush1.bf16.msra.mxu0 0
  %993 = vmatprep.subr.bf16.mxu0 0
  %994 = vmatpush1.bf16.msra.mxu0 0
  %995 = vmatprep.subr.bf16.mxu0 0
  %996 = vmatpush1.bf16.msra.mxu0 0
  %997 = vmatprep.mubr.bf16.mxu0 0
  %998 = vmatmul.mubr.bf16.gmra.mrb[0].mxu0 %v938
  %v999 = vpop.f32.mrb[0].mxu0
  %v1000 = vadd.f32 0.0, %v999
  %v1001 = vpop.f32.mrb[0].mxu0
  %v1002 = vpop.f32.mrb[0].mxu0
  %v1003 = vadd.f32 0.0, %v1002
  %v1004 = vpop.f32.mrb[0].mxu0
  %1005 = vmatprep.mubr.bf16.mxu0 0
  %1006 = vmatmul.mubr.bf16.gmra.mrb[0].mxu0 %v941
  %v1007 = vpop.f32.mrb[0].mxu0
  %v1008 = vadd.f32 0.0, %v1007
  %v1009 = vpop.f32.mrb[0].mxu0
  %v1010 = vpop.f32.mrb[0].mxu0
  %v1011 = vadd.f32 0.0, %v1010
  %v1012 = vpop.f32.mrb[0].mxu0
  %1013 = vmatprep.mubr.bf16.mxu0 0
  %1014 = vmatmul.mubr.bf16.gmra.mrb[0].mxu0 %v944
  %v1015 = vpop.f32.mrb[0].mxu0
  %v1016 = vadd.f32 0.0, %v1015
  %v1017 = vpop.f32.mrb[0].mxu0
  %v1018 = vpop.f32.mrb[0].mxu0
  %v1019 = vadd.f32 0.0, %v1018
  %v1020 = vpop.f32.mrb[0].mxu0
  %1021 = vmatprep.mubr.bf16.mxu0 0
  %1022 = vmatmul.mubr.bf16.gmra.mrb[0].mxu0 %v947
  %v1023 = vpop.f32.mrb[0].mxu0
  %v1024 = vadd.f32 0.0, %v1023
  %v1025 = vpop.f32.mrb[0].mxu0
  %v1026 = vpop.f32.mrb[0].mxu0
  %v1027 = vadd.f32 0.0, %v1026
  %v1028 = vpop.f32.mrb[0].mxu0
  %1029 = vmatprep.mubr.bf16.mxu0 0
  %1030 = vmatmul.mubr.bf16.gmra.mrb[0].mxu0 %v950
  %v1031 = vpop.f32.mrb[0].mxu0
  %v1032 = vadd.f32 0.0, %v1031
  %v1033 = vpop.f32.mrb[0].mxu0
  %v1034 = vpop.f32.mrb[0].mxu0
  %v1035 = vadd.f32 0.0, %v1034
  %v1036 = vpop.f32.mrb[0].mxu0
  %1037 = vmatprep.mubr.bf16.mxu0 0
  %1038 = vmatmul.mubr.bf16.gmra.mrb[0].mxu0 %v953
  %v1039 = vpop.f32.mrb[0].mxu0
  %v1040 = vadd.f32 0.0, %v1039
  %v1041 = vpop.f32.mrb[0].mxu0
  %v1042 = vpop.f32.mrb[0].mxu0
  %v1043 = vadd.f32 0.0, %v1042
  %v1044 = vpop.f32.mrb[0].mxu0
  %1045 = vmatprep.mubr.bf16.mxu0 0
  %1046 = vmatmul.mubr.bf16.gmra.mrb[0].mxu0 %v956
  %v1047 = vpop.f32.mrb[0].mxu0
  %v1048 = vadd.f32 0.0, %v1047
  %v1049 = vpop.f32.mrb[0].mxu0
  %v1050 = vpop.f32.mrb[0].mxu0
  %v1051 = vadd.f32 0.0, %v1050
  %v1052 = vpop.f32.mrb[0].mxu0
  %1053 = vmatprep.mubr.bf16.mxu0 0
  %1054 = vmatmul.mubr.bf16.gmra.mrb[0].mxu0 %v959
  %v1055 = vpop.f32.mrb[0].mxu0
  %v1056 = vadd.f32 0.0, %v1055
  %v1057 = vpop.f32.mrb[0].mxu0
  %v1058 = vpop.f32.mrb[0].mxu0
  %v1059 = vadd.f32 0.0, %v1058
  %v1060 = vpop.f32.mrb[0].mxu0
  %1061 = vdwg.mxu0
  %v1078 = vunpack.c.l.b16 %v650
  %v1079 = vunpack.c.l.b16 %v651
  %v1080 = vunpack.c.l.b16 %v652
  %v1081 = vunpack.c.l.b16 %v653
  %v1082 = vunpack.c.l.b16 %v654
  %v1083 = vunpack.c.l.b16 %v655
  %v1084 = vunpack.c.l.b16 %v656
  %v1085 = vunpack.c.l.b16 %v657
  %v1086 = vunpack.c.l.b16 %v658
  %v1087 = vunpack.c.l.b16 %v659
  %v1088 = vunpack.c.l.b16 %v660
  %v1089 = vunpack.c.l.b16 %v661
  %v1090 = vunpack.c.l.b16 %v662
  %v1091 = vunpack.c.l.b16 %v663
  %v1092 = vunpack.c.l.b16 %v664
  %v1093 = vunpack.c.l.b16 %v665
  %v1094 = vpack.c.b16 %v1079, %v1078
  %v1095 = vpack.c.b16 %v1081, %v1080
  %v1096 = vpack.c.b16 %v1083, %v1082
  %v1097 = vpack.c.b16 %v1085, %v1084
  %v1098 = vpack.c.b16 %v1087, %v1086
  %v1099 = vpack.c.b16 %v1089, %v1088
  %v1100 = vpack.c.b16 %v1091, %v1090
  %v1101 = vpack.c.b16 %v1093, %v1092
  %v1103 = vsel %vm936, %v1094, 0
  %v1106 = vsel %vm936, %v1095, 0
  %v1109 = vsel %vm936, %v1096, 0
  %v1112 = vsel %vm936, %v1097, 0
  %v1115 = vsel %vm936, %v1098, 0
  %v1118 = vsel %vm936, %v1099, 0
  %v1121 = vsel %vm936, %v1100, 0
  %v1124 = vsel %vm936, %v1101, 0
  %v1127 = vsel %vm961, %v666, 0
  %1129 = vmatprep.subr.bf16.mxu0 0
  %1130 = vmatpush1.bf16.msra.mxu0 %v1127
  %1131 = vmatprep.subr.bf16.mxu0 0
  %1132 = vmatpush1.bf16.msra.mxu0 0
  %1133 = vmatprep.subr.bf16.mxu0 0
  %1134 = vmatpush1.bf16.msra.mxu0 0
  %1135 = vmatprep.subr.bf16.mxu0 0
  %1136 = vmatpush1.bf16.msra.mxu0 0
  %1137 = vmatprep.subr.bf16.mxu0 0
  %1138 = vmatpush1.bf16.msra.mxu0 0
  %1139 = vmatprep.subr.bf16.mxu0 0
  %1140 = vmatpush1.bf16.msra.mxu0 0
  %1141 = vmatprep.subr.bf16.mxu0 0
  %1142 = vmatpush1.bf16.msra.mxu0 0
  %1143 = vmatprep.subr.bf16.mxu0 0
  %1144 = vmatpush1.bf16.msra.mxu0 0
  %1145 = vmatprep.subr.bf16.mxu0 0
  %1146 = vmatpush1.bf16.msra.mxu0 0
  %1147 = vmatprep.subr.bf16.mxu0 0
  %1148 = vmatpush1.bf16.msra.mxu0 0
  %1149 = vmatprep.subr.bf16.mxu0 0
  %1150 = vmatpush1.bf16.msra.mxu0 0
  %1151 = vmatprep.subr.bf16.mxu0 0
  %1152 = vmatpush1.bf16.msra.mxu0 0
  %1153 = vmatprep.subr.bf16.mxu0 0
  %1154 = vmatpush1.bf16.msra.mxu0 0
  %1155 = vmatprep.subr.bf16.mxu0 0
  %1156 = vmatpush1.bf16.msra.mxu0 0
  %1157 = vmatprep.subr.bf16.mxu0 0
  %1158 = vmatpush1.bf16.msra.mxu0 0
  %1159 = vmatprep.subr.bf16.mxu0 0
  %1160 = vmatpush1.bf16.msra.mxu0 0
  %1161 = vmatprep.mubr.bf16.mxu0 0
  %1162 = vmatmul.mubr.bf16.gmra.mrb[0].mxu0 %v1103
  %v1163 = vpop.f32.mrb[0].mxu0
  %v1164 = vadd.f32 %v1000, %v1163
  %v1165 = vpop.f32.mrb[0].mxu0
  %v1166 = vpop.f32.mrb[0].mxu0
  %v1167 = vadd.f32 %v1003, %v1166
  %v1168 = vpop.f32.mrb[0].mxu0
  %1169 = vmatprep.mubr.bf16.mxu0 0
  %1170 = vmatmul.mubr.bf16.gmra.mrb[0].mxu0 %v1106
  %v1171 = vpop.f32.mrb[0].mxu0
  %v1172 = vadd.f32 %v1008, %v1171
  %v1173 = vpop.f32.mrb[0].mxu0
  %v1174 = vpop.f32.mrb[0].mxu0
  %v1175 = vadd.f32 %v1011, %v1174
  %v1176 = vpop.f32.mrb[0].mxu0
  %1177 = vmatprep.mubr.bf16.mxu0 0
  %1178 = vmatmul.mubr.bf16.gmra.mrb[0].mxu0 %v1109
  %v1179 = vpop.f32.mrb[0].mxu0
  %v1180 = vadd.f32 %v1016, %v1179
  %v1181 = vpop.f32.mrb[0].mxu0
  %v1182 = vpop.f32.mrb[0].mxu0
  %v1183 = vadd.f32 %v1019, %v1182
  %v1184 = vpop.f32.mrb[0].mxu0
  %1185 = vmatprep.mubr.bf16.mxu0 0
  %1186 = vmatmul.mubr.bf16.gmra.mrb[0].mxu0 %v1112
  %v1187 = vpop.f32.mrb[0].mxu0
  %v1188 = vadd.f32 %v1024, %v1187
  %v1189 = vpop.f32.mrb[0].mxu0
  %v1190 = vpop.f32.mrb[0].mxu0
  %v1191 = vadd.f32 %v1027, %v1190
  %v1192 = vpop.f32.mrb[0].mxu0
  %1193 = vmatprep.mubr.bf16.mxu0 0
  %1194 = vmatmul.mubr.bf16.gmra.mrb[0].mxu0 %v1115
  %v1195 = vpop.f32.mrb[0].mxu0
  %v1196 = vadd.f32 %v1032, %v1195
  %v1197 = vpop.f32.mrb[0].mxu0
  %v1198 = vpop.f32.mrb[0].mxu0
  %v1199 = vadd.f32 %v1035, %v1198
  %v1200 = vpop.f32.mrb[0].mxu0
  %1201 = vmatprep.mubr.bf16.mxu0 0
  %1202 = vmatmul.mubr.bf16.gmra.mrb[0].mxu0 %v1118
  %v1203 = vpop.f32.mrb[0].mxu0
  %v1204 = vadd.f32 %v1040, %v1203
  %v1205 = vpop.f32.mrb[0].mxu0
  %v1206 = vpop.f32.mrb[0].mxu0
  %v1207 = vadd.f32 %v1043, %v1206
  %v1208 = vpop.f32.mrb[0].mxu0
  %1209 = vmatprep.mubr.bf16.mxu0 0
  %1210 = vmatmul.mubr.bf16.gmra.mrb[0].mxu0 %v1121
  %v1211 = vpop.f32.mrb[0].mxu0
  %v1212 = vadd.f32 %v1048, %v1211
  %v1213 = vpop.f32.mrb[0].mxu0
  %v1214 = vpop.f32.mrb[0].mxu0
  %v1215 = vadd.f32 %v1051, %v1214
  %v1216 = vpop.f32.mrb[0].mxu0
  %1217 = vmatprep.mubr.bf16.mxu0 0
  %1218 = vmatmul.mubr.bf16.gmra.mrb[0].mxu0 %v1124
  %v1219 = vpop.f32.mrb[0].mxu0
  %v1220 = vadd.f32 %v1056, %v1219
  %v1221 = vpop.f32.mrb[0].mxu0
  %v1222 = vpop.f32.mrb[0].mxu0
  %v1223 = vadd.f32 %v1059, %v1222
  %v1224 = vpop.f32.mrb[0].mxu0
  %1225 = vdwg.mxu0
  %v1226 = vld [vmem:[#allocation2] sm:$0xe]
  %v1227 = vld [vmem:[#allocation2 + $0x8] sm:$0xe]
  %v1228 = vld [vmem:[#allocation2 + $0x10] sm:$0xe]
  %v1229 = vld [vmem:[#allocation2 + $0x18] sm:$0xe]
  %v1230 = vld [vmem:[#allocation2 + $0x20] sm:$0xe]
  %v1231 = vld [vmem:[#allocation2 + $0x28] sm:$0xe]
  %v1232 = vld [vmem:[#allocation2 + $0x30] sm:$0xe]
  %v1233 = vld [vmem:[#allocation2 + $0x38] sm:$0xe]
  %v1234 = vld [vmem:[#allocation2 + $0x50] sm:$0xe]
  %v1235 = vld [vmem:[#allocation2 + $0x58] sm:$0xe]
  %v1236 = vld [vmem:[#allocation2 + $0x60] sm:$0xe]
  %v1237 = vld [vmem:[#allocation2 + $0x68] sm:$0xe]
  %v1238 = vld [vmem:[#allocation2 + $0x70] sm:$0xe]
  %v1239 = vld [vmem:[#allocation2 + $0x78] sm:$0xe]
  %v1240 = vld [vmem:[#allocation2 + $0x80] sm:$0xe]
  %v1241 = vld [vmem:[#allocation2 + $0x88] sm:$0xe]
  %vm1274 = vcmask 1042432
  %vm1275 = vcmask 1046532
  %vm1276 = vmor %vm1274, %vm1275
  %v1277 = vrot.slane %v1226, 5
  %v1278 = vrot.slane %v1277, 4
  %v1279 = vrot.slane %v667, 5
  %v1280 = vsel %vm1276, %v1278, %v1279
  %v1281 = vrot.slane %v1227, 5
  %v1282 = vrot.slane %v1281, 4
  %v1283 = vrot.slane %v668, 5
  %v1284 = vsel %vm1276, %v1282, %v1283
  %v1285 = vrot.slane %v1228, 5
  %v1286 = vrot.slane %v1285, 4
  %v1287 = vrot.slane %v669, 5
  %v1288 = vsel %vm1276, %v1286, %v1287
  %v1289 = vrot.slane %v1229, 5
  %v1290 = vrot.slane %v1289, 4
  %v1291 = vrot.slane %v670, 5
  %v1292 = vsel %vm1276, %v1290, %v1291
  %v1293 = vrot.slane %v1230, 5
  %v1294 = vrot.slane %v1293, 4
  %v1295 = vrot.slane %v671, 5
  %v1296 = vsel %vm1276, %v1294, %v1295
  %v1297 = vrot.slane %v1231, 5
  %v1298 = vrot.slane %v1297, 4
  %v1299 = vrot.slane %v672, 5
  %v1300 = vsel %vm1276, %v1298, %v1299
  %v1301 = vrot.slane %v1232, 5
  %v1302 = vrot.slane %v1301, 4
  %v1303 = vrot.slane %v673, 5
  %v1304 = vsel %vm1276, %v1302, %v1303
  %v1305 = vrot.slane %v1233, 5
  %v1306 = vrot.slane %v1305, 4
  %v1307 = vrot.slane %v674, 5
  %v1308 = vsel %vm1276, %v1306, %v1307
  %v1309 = vrot.slane %v1234, 5
  %v1310 = vrot.slane %v1309, 4
  %v1311 = vrot.slane %v675, 5
  %v1312 = vsel %vm1276, %v1310, %v1311
  %v1313 = vrot.slane %v1235, 5
  %v1314 = vrot.slane %v1313, 4
  %v1315 = vrot.slane %v676, 5
  %v1316 = vsel %vm1276, %v1314, %v1315
  %v1317 = vrot.slane %v1236, 5
  %v1318 = vrot.slane %v1317, 4
  %v1319 = vrot.slane %v677, 5
  %v1320 = vsel %vm1276, %v1318, %v1319
  %v1321 = vrot.slane %v1237, 5
  %v1322 = vrot.slane %v1321, 4
  %v1323 = vrot.slane %v678, 5
  %v1324 = vsel %vm1276, %v1322, %v1323
  %v1325 = vrot.slane %v1238, 5
  %v1326 = vrot.slane %v1325, 4
  %v1327 = vrot.slane %v679, 5
  %v1328 = vsel %vm1276, %v1326, %v1327
  %v1329 = vrot.slane %v1239, 5
  %v1330 = vrot.slane %v1329, 4
  %v1331 = vrot.slane %v680, 5
  %v1332 = vsel %vm1276, %v1330, %v1331
  %v1333 = vrot.slane %v1240, 5
  %v1334 = vrot.slane %v1333, 4
  %v1335 = vrot.slane %v681, 5
  %v1336 = vsel %vm1276, %v1334, %v1335
  %v1337 = vrot.slane %v1241, 5
  %v1338 = vrot.slane %v1337, 4
  %v1339 = vrot.slane %v682, 5
  %v1340 = vsel %vm1276, %v1338, %v1339
  %s1341 = scalar_lea.vmem %s1, 4
  %v1342 = vld [vmem:[%s1341] sm:$0x3]
  %v1343 = vunpack.c.l.b16 %v1280
  %v1344 = vunpack.c.l.b16 %v1284
  %v1345 = vunpack.c.l.b16 %v1288
  %v1346 = vunpack.c.l.b16 %v1292
  %v1347 = vunpack.c.l.b16 %v1296
  %v1348 = vunpack.c.l.b16 %v1300
  %v1349 = vunpack.c.l.b16 %v1304
  %v1350 = vunpack.c.l.b16 %v1308
  %v1351 = vunpack.c.l.b16 %v1312
  %v1352 = vunpack.c.l.b16 %v1316
  %v1353 = vunpack.c.l.b16 %v1320
  %v1354 = vunpack.c.l.b16 %v1324
  %v1355 = vunpack.c.l.b16 %v1328
  %v1356 = vunpack.c.l.b16 %v1332
  %v1357 = vunpack.c.l.b16 %v1336
  %v1358 = vunpack.c.l.b16 %v1340
  %v1359 = vpack.c.b16 %v1344, %v1343
  %v1360 = vpack.c.b16 %v1346, %v1345
  %v1361 = vpack.c.b16 %v1348, %v1347
  %v1362 = vpack.c.b16 %v1350, %v1349
  %v1363 = vpack.c.b16 %v1352, %v1351
  %v1364 = vpack.c.b16 %v1354, %v1353
  %v1365 = vpack.c.b16 %v1356, %v1355
  %v1366 = vpack.c.b16 %v1358, %v1357
  %v1368 = vsel %vm936, %v1359, 0
  %v1371 = vsel %vm936, %v1360, 0
  %v1374 = vsel %vm936, %v1361, 0
  %v1377 = vsel %vm936, %v1362, 0
  %v1380 = vsel %vm936, %v1363, 0
  %v1383 = vsel %vm936, %v1364, 0
  %v1386 = vsel %vm936, %v1365, 0
  %v1389 = vsel %vm936, %v1366, 0
  %v1392 = vsel %vm961, %v1342, 0
  %1394 = vmatprep.subr.bf16.mxu0 0
  %1395 = vmatpush1.bf16.msra.mxu0 %v1392
  %1396 = vmatprep.subr.bf16.mxu0 0
  %1397 = vmatpush1.bf16.msra.mxu0 0
  %1398 = vmatprep.subr.bf16.mxu0 0
  %1399 = vmatpush1.bf16.msra.mxu0 0
  %1400 = vmatprep.subr.bf16.mxu0 0
  %1401 = vmatpush1.bf16.msra.mxu0 0
  %1402 = vmatprep.subr.bf16.mxu0 0
  %1403 = vmatpush1.bf16.msra.mxu0 0
  %1404 = vmatprep.subr.bf16.mxu0 0
  %1405 = vmatpush1.bf16.msra.mxu0 0
  %1406 = vmatprep.subr.bf16.mxu0 0
  %1407 = vmatpush1.bf16.msra.mxu0 0
  %1408 = vmatprep.subr.bf16.mxu0 0
  %1409 = vmatpush1.bf16.msra.mxu0 0
  %1410 = vmatprep.subr.bf16.mxu0 0
  %1411 = vmatpush1.bf16.msra.mxu0 0
  %1412 = vmatprep.subr.bf16.mxu0 0
  %1413 = vmatpush1.bf16.msra.mxu0 0
  %1414 = vmatprep.subr.bf16.mxu0 0
  %1415 = vmatpush1.bf16.msra.mxu0 0
  %1416 = vmatprep.subr.bf16.mxu0 0
  %1417 = vmatpush1.bf16.msra.mxu0 0
  %1418 = vmatprep.subr.bf16.mxu0 0
  %1419 = vmatpush1.bf16.msra.mxu0 0
  %1420 = vmatprep.subr.bf16.mxu0 0
  %1421 = vmatpush1.bf16.msra.mxu0 0
  %1422 = vmatprep.subr.bf16.mxu0 0
  %1423 = vmatpush1.bf16.msra.mxu0 0
  %1424 = vmatprep.subr.bf16.mxu0 0
  %1425 = vmatpush1.bf16.msra.mxu0 0
  %1426 = vmatprep.mubr.bf16.mxu0 0
  %1427 = vmatmul.mubr.bf16.gmra.mrb[0].mxu0 %v1368
  %v1428 = vpop.f32.mrb[0].mxu0
  %v1429 = vadd.f32 0.0, %v1428
  %v1430 = vpop.f32.mrb[0].mxu0
  %v1431 = vpop.f32.mrb[0].mxu0
  %v1432 = vadd.f32 0.0, %v1431
  %v1433 = vpop.f32.mrb[0].mxu0
  %1434 = vmatprep.mubr.bf16.mxu0 0
  %1435 = vmatmul.mubr.bf16.gmra.mrb[0].mxu0 %v1371
  %v1436 = vpop.f32.mrb[0].mxu0
  %v1437 = vadd.f32 0.0, %v1436
  %v1438 = vpop.f32.mrb[0].mxu0
  %v1439 = vpop.f32.mrb[0].mxu0
  %v1440 = vadd.f32 0.0, %v1439
  %v1441 = vpop.f32.mrb[0].mxu0
  %1442 = vmatprep.mubr.bf16.mxu0 0
  %1443 = vmatmul.mubr.bf16.gmra.mrb[0].mxu0 %v1374
  %v1444 = vpop.f32.mrb[0].mxu0
  %v1445 = vadd.f32 0.0, %v1444
  %v1446 = vpop.f32.mrb[0].mxu0
  %v1447 = vpop.f32.mrb[0].mxu0
  %v1448 = vadd.f32 0.0, %v1447
  %v1449 = vpop.f32.mrb[0].mxu0
  %1450 = vmatprep.mubr.bf16.mxu0 0
  %1451 = vmatmul.mubr.bf16.gmra.mrb[0].mxu0 %v1377
  %v1452 = vpop.f32.mrb[0].mxu0
  %v1453 = vadd.f32 0.0, %v1452
  %v1454 = vpop.f32.mrb[0].mxu0
  %v1455 = vpop.f32.mrb[0].mxu0
  %v1456 = vadd.f32 0.0, %v1455
  %v1457 = vpop.f32.mrb[0].mxu0
  %1458 = vmatprep.mubr.bf16.mxu0 0
  %1459 = vmatmul.mubr.bf16.gmra.mrb[0].mxu0 %v1380
  %v1460 = vpop.f32.mrb[0].mxu0
  %v1461 = vadd.f32 0.0, %v1460
  %v1462 = vpop.f32.mrb[0].mxu0
  %v1463 = vpop.f32.mrb[0].mxu0
  %v1464 = vadd.f32 0.0, %v1463
  %v1465 = vpop.f32.mrb[0].mxu0
  %1466 = vmatprep.mubr.bf16.mxu0 0
  %1467 = vmatmul.mubr.bf16.gmra.mrb[0].mxu0 %v1383
  %v1468 = vpop.f32.mrb[0].mxu0
  %v1469 = vadd.f32 0.0, %v1468
  %v1470 = vpop.f32.mrb[0].mxu0
  %v1471 = vpop.f32.mrb[0].mxu0
  %v1472 = vadd.f32 0.0, %v1471
  %v1473 = vpop.f32.mrb[0].mxu0
  %1474 = vmatprep.mubr.bf16.mxu0 0
  %1475 = vmatmul.mubr.bf16.gmra.mrb[0].mxu0 %v1386
  %v1476 = vpop.f32.mrb[0].mxu0
  %v1477 = vadd.f32 0.0, %v1476
  %v1478 = vpop.f32.mrb[0].mxu0
  %v1479 = vpop.f32.mrb[0].mxu0
  %v1480 = vadd.f32 0.0, %v1479
  %v1481 = vpop.f32.mrb[0].mxu0
  %1482 = vmatprep.mubr.bf16.mxu0 0
  %1483 = vmatmul.mubr.bf16.gmra.mrb[0].mxu0 %v1389
  %v1484 = vpop.f32.mrb[0].mxu0
  %v1485 = vadd.f32 0.0, %v1484
  %v1486 = vpop.f32.mrb[0].mxu0
  %v1487 = vpop.f32.mrb[0].mxu0
  %v1488 = vadd.f32 0.0, %v1487
  %v1489 = vpop.f32.mrb[0].mxu0
  %1490 = vdwg.mxu0
  %v1491 = vadd.f32 %v1164, %v1429
  %v1492 = vadd.f32 %v1167, %v1432
  %v1493 = vadd.f32 %v1172, %v1437
  %v1494 = vadd.f32 %v1175, %v1440
  %v1495 = vadd.f32 %v1180, %v1445
  %v1496 = vadd.f32 %v1183, %v1448
  %v1497 = vadd.f32 %v1188, %v1453
  %v1498 = vadd.f32 %v1191, %v1456
  %v1499 = vadd.f32 %v1196, %v1461
  %v1500 = vadd.f32 %v1199, %v1464
  %v1501 = vadd.f32 %v1204, %v1469
  %v1502 = vadd.f32 %v1207, %v1472
  %v1503 = vadd.f32 %v1212, %v1477
  %v1504 = vadd.f32 %v1215, %v1480
  %v1505 = vadd.f32 %v1220, %v1485
  %v1506 = vadd.f32 %v1223, %v1488
  %v1507 = vld [vmem:[%s551] sm:$0xf]
  %v1508 = vld [vmem:[%s551 + $0x8] sm:$0xf]
  %v1509 = vld [vmem:[%s551 + $0x10] sm:$0xf]
  %v1510 = vld [vmem:[%s551 + $0x18] sm:$0xf]
  %v1511 = vld [vmem:[%s551 + $0x20] sm:$0xf]
  %v1512 = vld [vmem:[%s551 + $0x28] sm:$0xf]
  %v1513 = vld [vmem:[%s551 + $0x30] sm:$0xf]
  %v1514 = vld [vmem:[%s551 + $0x38] sm:$0xf]
  %v1515 = vld [vmem:[%s551 + $0x50] sm:$0xf]
  %v1516 = vld [vmem:[%s551 + $0x58] sm:$0xf]
  %v1517 = vld [vmem:[%s551 + $0x60] sm:$0xf]
  %v1518 = vld [vmem:[%s551 + $0x68] sm:$0xf]
  %v1519 = vld [vmem:[%s551 + $0x70] sm:$0xf]
  %v1520 = vld [vmem:[%s551 + $0x78] sm:$0xf]
  %v1521 = vld [vmem:[%s551 + $0x80] sm:$0xf]
  %v1522 = vld [vmem:[%s551 + $0x88] sm:$0xf]
  %s1523 = scalar_lea.vmem %s1, 6
  %v1524 = vld [vmem:[%s1523] sm:$0x3]
  %v1541 = vunpack.c.l.b16 %v1507
  %v1542 = vunpack.c.l.b16 %v1508
  %v1543 = vunpack.c.l.b16 %v1509
  %v1544 = vunpack.c.l.b16 %v1510
  %v1545 = vunpack.c.l.b16 %v1511
  %v1546 = vunpack.c.l.b16 %v1512
  %v1547 = vunpack.c.l.b16 %v1513
  %v1548 = vunpack.c.l.b16 %v1514
  %v1549 = vunpack.c.l.b16 %v1515
  %v1550 = vunpack.c.l.b16 %v1516
  %v1551 = vunpack.c.l.b16 %v1517
  %v1552 = vunpack.c.l.b16 %v1518
  %v1553 = vunpack.c.l.b16 %v1519
  %v1554 = vunpack.c.l.b16 %v1520
  %v1555 = vunpack.c.l.b16 %v1521
  %v1556 = vunpack.c.l.b16 %v1522
  %v1557 = vpack.c.b16 %v1542, %v1541
  %v1558 = vpack.c.b16 %v1544, %v1543
  %v1559 = vpack.c.b16 %v1546, %v1545
  %v1560 = vpack.c.b16 %v1548, %v1547
  %v1561 = vpack.c.b16 %v1550, %v1549
  %v1562 = vpack.c.b16 %v1552, %v1551
  %v1563 = vpack.c.b16 %v1554, %v1553
  %v1564 = vpack.c.b16 %v1556, %v1555
  %v1566 = vsel %vm936, %v1557, 0
  %v1569 = vsel %vm936, %v1558, 0
  %v1572 = vsel %vm936, %v1559, 0
  %v1575 = vsel %vm936, %v1560, 0
  %v1578 = vsel %vm936, %v1561, 0
  %v1581 = vsel %vm936, %v1562, 0
  %v1584 = vsel %vm936, %v1563, 0
  %v1587 = vsel %vm936, %v1564, 0
  %v1590 = vsel %vm961, %v1524, 0
  %1592 = vmatprep.subr.bf16.mxu0 0
  %1593 = vmatpush1.bf16.msra.mxu0 %v1590
  %1594 = vmatprep.subr.bf16.mxu0 0
  %1595 = vmatpush1.bf16.msra.mxu0 0
  %1596 = vmatprep.subr.bf16.mxu0 0
  %1597 = vmatpush1.bf16.msra.mxu0 0
  %1598 = vmatprep.subr.bf16.mxu0 0
  %1599 = vmatpush1.bf16.msra.mxu0 0
  %1600 = vmatprep.subr.bf16.mxu0 0
  %1601 = vmatpush1.bf16.msra.mxu0 0
  %1602 = vmatprep.subr.bf16.mxu0 0
  %1603 = vmatpush1.bf16.msra.mxu0 0
  %1604 = vmatprep.subr.bf16.mxu0 0
  %1605 = vmatpush1.bf16.msra.mxu0 0
  %1606 = vmatprep.subr.bf16.mxu0 0
  %1607 = vmatpush1.bf16.msra.mxu0 0
  %1608 = vmatprep.subr.bf16.mxu0 0
  %1609 = vmatpush1.bf16.msra.mxu0 0
  %1610 = vmatprep.subr.bf16.mxu0 0
  %1611 = vmatpush1.bf16.msra.mxu0 0
  %1612 = vmatprep.subr.bf16.mxu0 0
  %1613 = vmatpush1.bf16.msra.mxu0 0
  %1614 = vmatprep.subr.bf16.mxu0 0
  %1615 = vmatpush1.bf16.msra.mxu0 0
  %1616 = vmatprep.subr.bf16.mxu0 0
  %1617 = vmatpush1.bf16.msra.mxu0 0
  %1618 = vmatprep.subr.bf16.mxu0 0
  %1619 = vmatpush1.bf16.msra.mxu0 0
  %1620 = vmatprep.subr.bf16.mxu0 0
  %1621 = vmatpush1.bf16.msra.mxu0 0
  %1622 = vmatprep.subr.bf16.mxu0 0
  %1623 = vmatpush1.bf16.msra.mxu0 0
  %1624 = vmatprep.mubr.bf16.mxu0 0
  %1625 = vmatmul.mubr.bf16.gmra.mrb[0].mxu0 %v1566
  %v1626 = vpop.f32.mrb[0].mxu0
  %v1627 = vadd.f32 0.0, %v1626
  %v1628 = vpop.f32.mrb[0].mxu0
  %v1629 = vpop.f32.mrb[0].mxu0
  %v1630 = vadd.f32 0.0, %v1629
  %v1631 = vpop.f32.mrb[0].mxu0
  %1632 = vmatprep.mubr.bf16.mxu0 0
  %1633 = vmatmul.mubr.bf16.gmra.mrb[0].mxu0 %v1569
  %v1634 = vpop.f32.mrb[0].mxu0
  %v1635 = vadd.f32 0.0, %v1634
  %v1636 = vpop.f32.mrb[0].mxu0
  %v1637 = vpop.f32.mrb[0].mxu0
  %v1638 = vadd.f32 0.0, %v1637
  %v1639 = vpop.f32.mrb[0].mxu0
  %1640 = vmatprep.mubr.bf16.mxu0 0
  %1641 = vmatmul.mubr.bf16.gmra.mrb[0].mxu0 %v1572
  %v1642 = vpop.f32.mrb[0].mxu0
  %v1643 = vadd.f32 0.0, %v1642
  %v1644 = vpop.f32.mrb[0].mxu0
  %v1645 = vpop.f32.mrb[0].mxu0
  %v1646 = vadd.f32 0.0, %v1645
  %v1647 = vpop.f32.mrb[0].mxu0
  %1648 = vmatprep.mubr.bf16.mxu0 0
  %1649 = vmatmul.mubr.bf16.gmra.mrb[0].mxu0 %v1575
  %v1650 = vpop.f32.mrb[0].mxu0
  %v1651 = vadd.f32 0.0, %v1650
  %v1652 = vpop.f32.mrb[0].mxu0
  %v1653 = vpop.f32.mrb[0].mxu0
  %v1654 = vadd.f32 0.0, %v1653
  %v1655 = vpop.f32.mrb[0].mxu0
  %1656 = vmatprep.mubr.bf16.mxu0 0
  %1657 = vmatmul.mubr.bf16.gmra.mrb[0].mxu0 %v1578
  %v1658 = vpop.f32.mrb[0].mxu0
  %v1659 = vadd.f32 0.0, %v1658
  %v1660 = vpop.f32.mrb[0].mxu0
  %v1661 = vpop.f32.mrb[0].mxu0
  %v1662 = vadd.f32 0.0, %v1661
  %v1663 = vpop.f32.mrb[0].mxu0
  %1664 = vmatprep.mubr.bf16.mxu0 0
  %1665 = vmatmul.mubr.bf16.gmra.mrb[0].mxu0 %v1581
  %v1666 = vpop.f32.mrb[0].mxu0
  %v1667 = vadd.f32 0.0, %v1666
  %v1668 = vpop.f32.mrb[0].mxu0
  %v1669 = vpop.f32.mrb[0].mxu0
  %v1670 = vadd.f32 0.0, %v1669
  %v1671 = vpop.f32.mrb[0].mxu0
  %1672 = vmatprep.mubr.bf16.mxu0 0
  %1673 = vmatmul.mubr.bf16.gmra.mrb[0].mxu0 %v1584
  %v1674 = vpop.f32.mrb[0].mxu0
  %v1675 = vadd.f32 0.0, %v1674
  %v1676 = vpop.f32.mrb[0].mxu0
  %v1677 = vpop.f32.mrb[0].mxu0
  %v1678 = vadd.f32 0.0, %v1677
  %v1679 = vpop.f32.mrb[0].mxu0
  %1680 = vmatprep.mubr.bf16.mxu0 0
  %1681 = vmatmul.mubr.bf16.gmra.mrb[0].mxu0 %v1587
  %v1682 = vpop.f32.mrb[0].mxu0
  %v1683 = vadd.f32 0.0, %v1682
  %v1684 = vpop.f32.mrb[0].mxu0
  %v1685 = vpop.f32.mrb[0].mxu0
  %v1686 = vadd.f32 0.0, %v1685
  %v1687 = vpop.f32.mrb[0].mxu0
  %1688 = vdwg.mxu0
  %v1689 = vadd.f32 %v1491, %v1627
  %v1690 = vadd.f32 %v1492, %v1630
  %v1691 = vadd.f32 %v1493, %v1635
  %v1692 = vadd.f32 %v1494, %v1638
  %v1693 = vadd.f32 %v1495, %v1643
  %v1694 = vadd.f32 %v1496, %v1646
  %v1695 = vadd.f32 %v1497, %v1651
  %v1696 = vadd.f32 %v1498, %v1654
  %v1697 = vadd.f32 %v1499, %v1659
  %v1698 = vadd.f32 %v1500, %v1662
  %v1699 = vadd.f32 %v1501, %v1667
  %v1700 = vadd.f32 %v1502, %v1670
  %v1701 = vadd.f32 %v1503, %v1675
  %v1702 = vadd.f32 %v1504, %v1678
  %v1703 = vadd.f32 %v1505, %v1683
  %v1704 = vadd.f32 %v1506, %v1686
  %v1705 = vld [vmem:[%s551] sm:$0xf]
  %v1706 = vld [vmem:[%s551 + $0x4] sm:$0x1]
  %v1707 = vld [vmem:[%s551 + $0x8] sm:$0xf]
  %v1708 = vld [vmem:[%s551 + $0xc] sm:$0x1]
  %v1709 = vld [vmem:[%s551 + $0x10] sm:$0xf]
  %v1710 = vld [vmem:[%s551 + $0x14] sm:$0x1]
  %v1711 = vld [vmem:[%s551 + $0x18] sm:$0xf]
  %v1712 = vld [vmem:[%s551 + $0x1c] sm:$0x1]
  %v1713 = vld [vmem:[%s551 + $0x20] sm:$0xf]
  %v1714 = vld [vmem:[%s551 + $0x24] sm:$0x1]
  %v1715 = vld [vmem:[%s551 + $0x28] sm:$0xf]
  %v1716 = vld [vmem:[%s551 + $0x2c] sm:$0x1]
  %v1717 = vld [vmem:[%s551 + $0x30] sm:$0xf]
  %v1718 = vld [vmem:[%s551 + $0x34] sm:$0x1]
  %v1719 = vld [vmem:[%s551 + $0x38] sm:$0xf]
  %v1720 = vld [vmem:[%s551 + $0x3c] sm:$0x1]
  %v1721 = vld [vmem:[%s551 + $0x50] sm:$0xf]
  %v1722 = vld [vmem:[%s551 + $0x54] sm:$0x1]
  %v1723 = vld [vmem:[%s551 + $0x58] sm:$0xf]
  %v1724 = vld [vmem:[%s551 + $0x5c] sm:$0x1]
  %v1725 = vld [vmem:[%s551 + $0x60] sm:$0xf]
  %v1726 = vld [vmem:[%s551 + $0x64] sm:$0x1]
  %v1727 = vld [vmem:[%s551 + $0x68] sm:$0xf]
  %v1728 = vld [vmem:[%s551 + $0x6c] sm:$0x1]
  %v1729 = vld [vmem:[%s551 + $0x70] sm:$0xf]
  %v1730 = vld [vmem:[%s551 + $0x74] sm:$0x1]
  %v1731 = vld [vmem:[%s551 + $0x78] sm:$0xf]
  %v1732 = vld [vmem:[%s551 + $0x7c] sm:$0x1]
  %v1733 = vld [vmem:[%s551 + $0x80] sm:$0xf]
  %v1734 = vld [vmem:[%s551 + $0x84] sm:$0x1]
  %v1735 = vld [vmem:[%s551 + $0x88] sm:$0xf]
  %v1736 = vld [vmem:[%s551 + $0x8c] sm:$0x1]
  %v1738 = vshrl.u32 %v1705, 16
  %v1740 = vrot.slane %v1738, 4
  %v1741 = vshll.u32 %v1705, 16
  %v1743 = vrot.slane %v1741, 5
  %v1744 = vor.u32 %v1740, %v1743
  %v1745 = vrot.slane %v1744, 4
  %v1747 = vshll.u32 %v1706, 16
  %v1749 = vrot.slane %v1747, 5
  %v1750 = vsel %vm685, %v1745, %v1749
  %v1752 = vshrl.u32 %v1707, 16
  %v1754 = vrot.slane %v1752, 4
  %v1755 = vshll.u32 %v1707, 16
  %v1757 = vrot.slane %v1755, 5
  %v1758 = vor.u32 %v1754, %v1757
  %v1759 = vrot.slane %v1758, 4
  %v1761 = vshll.u32 %v1708, 16
  %v1763 = vrot.slane %v1761, 5
  %v1764 = vsel %vm685, %v1759, %v1763
  %v1766 = vshrl.u32 %v1709, 16
  %v1768 = vrot.slane %v1766, 4
  %v1769 = vshll.u32 %v1709, 16
  %v1771 = vrot.slane %v1769, 5
  %v1772 = vor.u32 %v1768, %v1771
  %v1773 = vrot.slane %v1772, 4
  %v1775 = vshll.u32 %v1710, 16
  %v1777 = vrot.slane %v1775, 5
  %v1778 = vsel %vm685, %v1773, %v1777
  %v1780 = vshrl.u32 %v1711, 16
  %v1782 = vrot.slane %v1780, 4
  %v1783 = vshll.u32 %v1711, 16
  %v1785 = vrot.slane %v1783, 5
  %v1786 = vor.u32 %v1782, %v1785
  %v1787 = vrot.slane %v1786, 4
  %v1789 = vshll.u32 %v1712, 16
  %v1791 = vrot.slane %v1789, 5
  %v1792 = vsel %vm685, %v1787, %v1791
  %v1794 = vshrl.u32 %v1713, 16
  %v1796 = vrot.slane %v1794, 4
  %v1797 = vshll.u32 %v1713, 16
  %v1799 = vrot.slane %v1797, 5
  %v1800 = vor.u32 %v1796, %v1799
  %v1801 = vrot.slane %v1800, 4
  %v1803 = vshll.u32 %v1714, 16
  %v1805 = vrot.slane %v1803, 5
  %v1806 = vsel %vm685, %v1801, %v1805
  %v1808 = vshrl.u32 %v1715, 16
  %v1810 = vrot.slane %v1808, 4
  %v1811 = vshll.u32 %v1715, 16
  %v1813 = vrot.slane %v1811, 5
  %v1814 = vor.u32 %v1810, %v1813
  %v1815 = vrot.slane %v1814, 4
  %v1817 = vshll.u32 %v1716, 16
  %v1819 = vrot.slane %v1817, 5
  %v1820 = vsel %vm685, %v1815, %v1819
  %v1822 = vshrl.u32 %v1717, 16
  %v1824 = vrot.slane %v1822, 4
  %v1825 = vshll.u32 %v1717, 16
  %v1827 = vrot.slane %v1825, 5
  %v1828 = vor.u32 %v1824, %v1827
  %v1829 = vrot.slane %v1828, 4
  %v1831 = vshll.u32 %v1718, 16
  %v1833 = vrot.slane %v1831, 5
  %v1834 = vsel %vm685, %v1829, %v1833
  %v1836 = vshrl.u32 %v1719, 16
  %v1838 = vrot.slane %v1836, 4
  %v1839 = vshll.u32 %v1719, 16
  %v1841 = vrot.slane %v1839, 5
  %v1842 = vor.u32 %v1838, %v1841
  %v1843 = vrot.slane %v1842, 4
  %v1845 = vshll.u32 %v1720, 16
  %v1847 = vrot.slane %v1845, 5
  %v1848 = vsel %vm685, %v1843, %v1847
  %v1850 = vshrl.u32 %v1721, 16
  %v1852 = vrot.slane %v1850, 4
  %v1853 = vshll.u32 %v1721, 16
  %v1855 = vrot.slane %v1853, 5
  %v1856 = vor.u32 %v1852, %v1855
  %v1857 = vrot.slane %v1856, 4
  %v1859 = vshll.u32 %v1722, 16
  %v1861 = vrot.slane %v1859, 5
  %v1862 = vsel %vm685, %v1857, %v1861
  %v1864 = vshrl.u32 %v1723, 16
  %v1866 = vrot.slane %v1864, 4
  %v1867 = vshll.u32 %v1723, 16
  %v1869 = vrot.slane %v1867, 5
  %v1870 = vor.u32 %v1866, %v1869
  %v1871 = vrot.slane %v1870, 4
  %v1873 = vshll.u32 %v1724, 16
  %v1875 = vrot.slane %v1873, 5
  %v1876 = vsel %vm685, %v1871, %v1875
  %v1878 = vshrl.u32 %v1725, 16
  %v1880 = vrot.slane %v1878, 4
  %v1881 = vshll.u32 %v1725, 16
  %v1883 = vrot.slane %v1881, 5
  %v1884 = vor.u32 %v1880, %v1883
  %v1885 = vrot.slane %v1884, 4
  %v1887 = vshll.u32 %v1726, 16
  %v1889 = vrot.slane %v1887, 5
  %v1890 = vsel %vm685, %v1885, %v1889
  %v1892 = vshrl.u32 %v1727, 16
  %v1894 = vrot.slane %v1892, 4
  %v1895 = vshll.u32 %v1727, 16
  %v1897 = vrot.slane %v1895, 5
  %v1898 = vor.u32 %v1894, %v1897
  %v1899 = vrot.slane %v1898, 4
  %v1901 = vshll.u32 %v1728, 16
  %v1903 = vrot.slane %v1901, 5
  %v1904 = vsel %vm685, %v1899, %v1903
  %v1906 = vshrl.u32 %v1729, 16
  %v1908 = vrot.slane %v1906, 4
  %v1909 = vshll.u32 %v1729, 16
  %v1911 = vrot.slane %v1909, 5
  %v1912 = vor.u32 %v1908, %v1911
  %v1913 = vrot.slane %v1912, 4
  %v1915 = vshll.u32 %v1730, 16
  %v1917 = vrot.slane %v1915, 5
  %v1918 = vsel %vm685, %v1913, %v1917
  %v1920 = vshrl.u32 %v1731, 16
  %v1922 = vrot.slane %v1920, 4
  %v1923 = vshll.u32 %v1731, 16
  %v1925 = vrot.slane %v1923, 5
  %v1926 = vor.u32 %v1922, %v1925
  %v1927 = vrot.slane %v1926, 4
  %v1929 = vshll.u32 %v1732, 16
  %v1931 = vrot.slane %v1929, 5
  %v1932 = vsel %vm685, %v1927, %v1931
  %v1934 = vshrl.u32 %v1733, 16
  %v1936 = vrot.slane %v1934, 4
  %v1937 = vshll.u32 %v1733, 16
  %v1939 = vrot.slane %v1937, 5
  %v1940 = vor.u32 %v1936, %v1939
  %v1941 = vrot.slane %v1940, 4
  %v1943 = vshll.u32 %v1734, 16
  %v1945 = vrot.slane %v1943, 5
  %v1946 = vsel %vm685, %v1941, %v1945
  %v1948 = vshrl.u32 %v1735, 16
  %v1950 = vrot.slane %v1948, 4
  %v1951 = vshll.u32 %v1735, 16
  %v1953 = vrot.slane %v1951, 5
  %v1954 = vor.u32 %v1950, %v1953
  %v1955 = vrot.slane %v1954, 4
  %v1957 = vshll.u32 %v1736, 16
  %v1959 = vrot.slane %v1957, 5
  %v1960 = vsel %vm685, %v1955, %v1959
  %s1961 = scalar_lea.vmem %s1, 8
  %v1962 = vld [vmem:[%s1961] sm:$0x3]
  %v1963 = vunpack.c.l.b16 %v1750
  %v1964 = vunpack.c.l.b16 %v1764
  %v1965 = vunpack.c.l.b16 %v1778
  %v1966 = vunpack.c.l.b16 %v1792
  %v1967 = vunpack.c.l.b16 %v1806
  %v1968 = vunpack.c.l.b16 %v1820
  %v1969 = vunpack.c.l.b16 %v1834
  %v1970 = vunpack.c.l.b16 %v1848
  %v1971 = vunpack.c.l.b16 %v1862
  %v1972 = vunpack.c.l.b16 %v1876
  %v1973 = vunpack.c.l.b16 %v1890
  %v1974 = vunpack.c.l.b16 %v1904
  %v1975 = vunpack.c.l.b16 %v1918
  %v1976 = vunpack.c.l.b16 %v1932
  %v1977 = vunpack.c.l.b16 %v1946
  %v1978 = vunpack.c.l.b16 %v1960
  %v1979 = vpack.c.b16 %v1964, %v1963
  %v1980 = vpack.c.b16 %v1966, %v1965
  %v1981 = vpack.c.b16 %v1968, %v1967
  %v1982 = vpack.c.b16 %v1970, %v1969
  %v1983 = vpack.c.b16 %v1972, %v1971
  %v1984 = vpack.c.b16 %v1974, %v1973
  %v1985 = vpack.c.b16 %v1976, %v1975
  %v1986 = vpack.c.b16 %v1978, %v1977
  %v1988 = vsel %vm936, %v1979, 0
  %v1991 = vsel %vm936, %v1980, 0
  %v1994 = vsel %vm936, %v1981, 0
  %v1997 = vsel %vm936, %v1982, 0
  %v2000 = vsel %vm936, %v1983, 0
  %v2003 = vsel %vm936, %v1984, 0
  %v2006 = vsel %vm936, %v1985, 0
  %v2009 = vsel %vm936, %v1986, 0
  %v2012 = vsel %vm961, %v1962, 0
  %2014 = vmatprep.subr.bf16.mxu0 0
  %2015 = vmatpush1.bf16.msra.mxu0 %v2012
  %2016 = vmatprep.subr.bf16.mxu0 0
  %2017 = vmatpush1.bf16.msra.mxu0 0
  %2018 = vmatprep.subr.bf16.mxu0 0
  %2019 = vmatpush1.bf16.msra.mxu0 0
  %2020 = vmatprep.subr.bf16.mxu0 0
  %2021 = vmatpush1.bf16.msra.mxu0 0
  %2022 = vmatprep.subr.bf16.mxu0 0
  %2023 = vmatpush1.bf16.msra.mxu0 0
  %2024 = vmatprep.subr.bf16.mxu0 0
  %2025 = vmatpush1.bf16.msra.mxu0 0
  %2026 = vmatprep.subr.bf16.mxu0 0
  %2027 = vmatpush1.bf16.msra.mxu0 0
  %2028 = vmatprep.subr.bf16.mxu0 0
  %2029 = vmatpush1.bf16.msra.mxu0 0
  %2030 = vmatprep.subr.bf16.mxu0 0
  %2031 = vmatpush1.bf16.msra.mxu0 0
  %2032 = vmatprep.subr.bf16.mxu0 0
  %2033 = vmatpush1.bf16.msra.mxu0 0
  %2034 = vmatprep.subr.bf16.mxu0 0
  %2035 = vmatpush1.bf16.msra.mxu0 0
  %2036 = vmatprep.subr.bf16.mxu0 0
  %2037 = vmatpush1.bf16.msra.mxu0 0
  %2038 = vmatprep.subr.bf16.mxu0 0
  %2039 = vmatpush1.bf16.msra.mxu0 0
  %2040 = vmatprep.subr.bf16.mxu0 0
  %2041 = vmatpush1.bf16.msra.mxu0 0
  %2042 = vmatprep.subr.bf16.mxu0 0
  %2043 = vmatpush1.bf16.msra.mxu0 0
  %2044 = vmatprep.subr.bf16.mxu0 0
  %2045 = vmatpush1.bf16.msra.mxu0 0
  %2046 = vmatprep.mubr.bf16.mxu0 0
  %2047 = vmatmul.mubr.bf16.gmra.mrb[0].mxu0 %v1988
  %v2048 = vpop.f32.mrb[0].mxu0
  %v2049 = vadd.f32 0.0, %v2048
  %v2050 = vpop.f32.mrb[0].mxu0
  %v2051 = vpop.f32.mrb[0].mxu0
  %v2052 = vadd.f32 0.0, %v2051
  %v2053 = vpop.f32.mrb[0].mxu0
  %2054 = vmatprep.mubr.bf16.mxu0 0
  %2055 = vmatmul.mubr.bf16.gmra.mrb[0].mxu0 %v1991
  %v2056 = vpop.f32.mrb[0].mxu0
  %v2057 = vadd.f32 0.0, %v2056
  %v2058 = vpop.f32.mrb[0].mxu0
  %v2059 = vpop.f32.mrb[0].mxu0
  %v2060 = vadd.f32 0.0, %v2059
  %v2061 = vpop.f32.mrb[0].mxu0
  %2062 = vmatprep.mubr.bf16.mxu0 0
  %2063 = vmatmul.mubr.bf16.gmra.mrb[0].mxu0 %v1994
  %v2064 = vpop.f32.mrb[0].mxu0
  %v2065 = vadd.f32 0.0, %v2064
  %v2066 = vpop.f32.mrb[0].mxu0
  %v2067 = vpop.f32.mrb[0].mxu0
  %v2068 = vadd.f32 0.0, %v2067
  %v2069 = vpop.f32.mrb[0].mxu0
  %2070 = vmatprep.mubr.bf16.mxu0 0
  %2071 = vmatmul.mubr.bf16.gmra.mrb[0].mxu0 %v1997
  %v2072 = vpop.f32.mrb[0].mxu0
  %v2073 = vadd.f32 0.0, %v2072
  %v2074 = vpop.f32.mrb[0].mxu0
  %v2075 = vpop.f32.mrb[0].mxu0
  %v2076 = vadd.f32 0.0, %v2075
  %v2077 = vpop.f32.mrb[0].mxu0
  %2078 = vmatprep.mubr.bf16.mxu0 0
  %2079 = vmatmul.mubr.bf16.gmra.mrb[0].mxu0 %v2000
  %v2080 = vpop.f32.mrb[0].mxu0
  %v2081 = vadd.f32 0.0, %v2080
  %v2082 = vpop.f32.mrb[0].mxu0
  %v2083 = vpop.f32.mrb[0].mxu0
  %v2084 = vadd.f32 0.0, %v2083
  %v2085 = vpop.f32.mrb[0].mxu0
  %2086 = vmatprep.mubr.bf16.mxu0 0
  %2087 = vmatmul.mubr.bf16.gmra.mrb[0].mxu0 %v2003
  %v2088 = vpop.f32.mrb[0].mxu0
  %v2089 = vadd.f32 0.0, %v2088
  %v2090 = vpop.f32.mrb[0].mxu0
  %v2091 = vpop.f32.mrb[0].mxu0
  %v2092 = vadd.f32 0.0, %v2091
  %v2093 = vpop.f32.mrb[0].mxu0
  %2094 = vmatprep.mubr.bf16.mxu0 0
  %2095 = vmatmul.mubr.bf16.gmra.mrb[0].mxu0 %v2006
  %v2096 = vpop.f32.mrb[0].mxu0
  %v2097 = vadd.f32 0.0, %v2096
  %v2098 = vpop.f32.mrb[0].mxu0
  %v2099 = vpop.f32.mrb[0].mxu0
  %v2100 = vadd.f32 0.0, %v2099
  %v2101 = vpop.f32.mrb[0].mxu0
  %2102 = vmatprep.mubr.bf16.mxu0 0
  %2103 = vmatmul.mubr.bf16.gmra.mrb[0].mxu0 %v2009
  %v2104 = vpop.f32.mrb[0].mxu0
  %v2105 = vadd.f32 0.0, %v2104
  %v2106 = vpop.f32.mrb[0].mxu0
  %v2107 = vpop.f32.mrb[0].mxu0
  %v2108 = vadd.f32 0.0, %v2107
  %v2109 = vpop.f32.mrb[0].mxu0
  %2110 = vdwg.mxu0
  %v2111 = vadd.f32 %v1689, %v2049
  %v2112 = vadd.f32 %v1690, %v2052
  %v2113 = vadd.f32 %v1691, %v2057
  %v2114 = vadd.f32 %v1692, %v2060
  %v2115 = vadd.f32 %v1693, %v2065
  %v2116 = vadd.f32 %v1694, %v2068
  %v2117 = vadd.f32 %v1695, %v2073
  %v2118 = vadd.f32 %v1696, %v2076
  %v2119 = vadd.f32 %v1697, %v2081
  %v2120 = vadd.f32 %v1698, %v2084
  %v2121 = vadd.f32 %v1699, %v2089
  %v2122 = vadd.f32 %v1700, %v2092
  %v2123 = vadd.f32 %v1701, %v2097
  %v2124 = vadd.f32 %v1702, %v2100
  %v2125 = vadd.f32 %v1703, %v2105
  %v2126 = vadd.f32 %v1704, %v2108
  %v2127 = vld [vmem:[%s551] sm:$0xe]
  %v2128 = vld [vmem:[%s551 + $0x8] sm:$0xe]
  %v2129 = vld [vmem:[%s551 + $0x10] sm:$0xe]
  %v2130 = vld [vmem:[%s551 + $0x18] sm:$0xe]
  %v2131 = vld [vmem:[%s551 + $0x20] sm:$0xe]
  %v2132 = vld [vmem:[%s551 + $0x28] sm:$0xe]
  %v2133 = vld [vmem:[%s551 + $0x30] sm:$0xe]
  %v2134 = vld [vmem:[%s551 + $0x38] sm:$0xe]
  %v2135 = vld [vmem:[%s551 + $0x50] sm:$0xe]
  %v2136 = vld [vmem:[%s551 + $0x58] sm:$0xe]
  %v2137 = vld [vmem:[%s551 + $0x60] sm:$0xe]
  %v2138 = vld [vmem:[%s551 + $0x68] sm:$0xe]
  %v2139 = vld [vmem:[%s551 + $0x70] sm:$0xe]
  %v2140 = vld [vmem:[%s551 + $0x78] sm:$0xe]
  %v2141 = vld [vmem:[%s551 + $0x80] sm:$0xe]
  %v2142 = vld [vmem:[%s551 + $0x88] sm:$0xe]
  %v2175 = vrot.slane %v2127, 5
  %v2176 = vrot.slane %v2175, 4
  %v2177 = vrot.slane %v1706, 5
  %v2178 = vsel %vm1276, %v2176, %v2177
  %v2179 = vrot.slane %v2128, 5
  %v2180 = vrot.slane %v2179, 4
  %v2181 = vrot.slane %v1708, 5
  %v2182 = vsel %vm1276, %v2180, %v2181
  %v2183 = vrot.slane %v2129, 5
  %v2184 = vrot.slane %v2183, 4
  %v2185 = vrot.slane %v1710, 5
  %v2186 = vsel %vm1276, %v2184, %v2185
  %v2187 = vrot.slane %v2130, 5
  %v2188 = vrot.slane %v2187, 4
  %v2189 = vrot.slane %v1712, 5
  %v2190 = vsel %vm1276, %v2188, %v2189
  %v2191 = vrot.slane %v2131, 5
  %v2192 = vrot.slane %v2191, 4
  %v2193 = vrot.slane %v1714, 5
  %v2194 = vsel %vm1276, %v2192, %v2193
  %v2195 = vrot.slane %v2132, 5
  %v2196 = vrot.slane %v2195, 4
  %v2197 = vrot.slane %v1716, 5
  %v2198 = vsel %vm1276, %v2196, %v2197
  %v2199 = vrot.slane %v2133, 5
  %v2200 = vrot.slane %v2199, 4
  %v2201 = vrot.slane %v1718, 5
  %v2202 = vsel %vm1276, %v2200, %v2201
  %v2203 = vrot.slane %v2134, 5
  %v2204 = vrot.slane %v2203, 4
  %v2205 = vrot.slane %v1720, 5
  %v2206 = vsel %vm1276, %v2204, %v2205
  %v2207 = vrot.slane %v2135, 5
  %v2208 = vrot.slane %v2207, 4
  %v2209 = vrot.slane %v1722, 5
  %v2210 = vsel %vm1276, %v2208, %v2209
  %v2211 = vrot.slane %v2136, 5
  %v2212 = vrot.slane %v2211, 4
  %v2213 = vrot.slane %v1724, 5
  %v2214 = vsel %vm1276, %v2212, %v2213
  %v2215 = vrot.slane %v2137, 5
  %v2216 = vrot.slane %v2215, 4
  %v2217 = vrot.slane %v1726, 5
  %v2218 = vsel %vm1276, %v2216, %v2217
  %v2219 = vrot.slane %v2138, 5
  %v2220 = vrot.slane %v2219, 4
  %v2221 = vrot.slane %v1728, 5
  %v2222 = vsel %vm1276, %v2220, %v2221
  %v2223 = vrot.slane %v2139, 5
  %v2224 = vrot.slane %v2223, 4
  %v2225 = vrot.slane %v1730, 5
  %v2226 = vsel %vm1276, %v2224, %v2225
  %v2227 = vrot.slane %v2140, 5
  %v2228 = vrot.slane %v2227, 4
  %v2229 = vrot.slane %v1732, 5
  %v2230 = vsel %vm1276, %v2228, %v2229
  %v2231 = vrot.slane %v2141, 5
  %v2232 = vrot.slane %v2231, 4
  %v2233 = vrot.slane %v1734, 5
  %v2234 = vsel %vm1276, %v2232, %v2233
  %v2235 = vrot.slane %v2142, 5
  %v2236 = vrot.slane %v2235, 4
  %v2237 = vrot.slane %v1736, 5
  %v2238 = vsel %vm1276, %v2236, %v2237
  %s2239 = scalar_lea.vmem %s1, 10
  %v2240 = vld [vmem:[%s2239] sm:$0x3]
  %v2241 = vunpack.c.l.b16 %v2178
  %v2242 = vunpack.c.l.b16 %v2182
  %v2243 = vunpack.c.l.b16 %v2186
  %v2244 = vunpack.c.l.b16 %v2190
  %v2245 = vunpack.c.l.b16 %v2194
  %v2246 = vunpack.c.l.b16 %v2198
  %v2247 = vunpack.c.l.b16 %v2202
  %v2248 = vunpack.c.l.b16 %v2206
  %v2249 = vunpack.c.l.b16 %v2210
  %v2250 = vunpack.c.l.b16 %v2214
  %v2251 = vunpack.c.l.b16 %v2218
  %v2252 = vunpack.c.l.b16 %v2222
  %v2253 = vunpack.c.l.b16 %v2226
  %v2254 = vunpack.c.l.b16 %v2230
  %v2255 = vunpack.c.l.b16 %v2234
  %v2256 = vunpack.c.l.b16 %v2238
  %v2257 = vpack.c.b16 %v2242, %v2241
  %v2258 = vpack.c.b16 %v2244, %v2243
  %v2259 = vpack.c.b16 %v2246, %v2245
  %v2260 = vpack.c.b16 %v2248, %v2247
  %v2261 = vpack.c.b16 %v2250, %v2249
  %v2262 = vpack.c.b16 %v2252, %v2251
  %v2263 = vpack.c.b16 %v2254, %v2253
  %v2264 = vpack.c.b16 %v2256, %v2255
  %v2266 = vsel %vm936, %v2257, 0
  %v2269 = vsel %vm936, %v2258, 0
  %v2272 = vsel %vm936, %v2259, 0
  %v2275 = vsel %vm936, %v2260, 0
  %v2278 = vsel %vm936, %v2261, 0
  %v2281 = vsel %vm936, %v2262, 0
  %v2284 = vsel %vm936, %v2263, 0
  %v2287 = vsel %vm936, %v2264, 0
  %v2290 = vsel %vm961, %v2240, 0
  %2292 = vmatprep.subr.bf16.mxu0 0
  %2293 = vmatpush1.bf16.msra.mxu0 %v2290
  %2294 = vmatprep.subr.bf16.mxu0 0
  %2295 = vmatpush1.bf16.msra.mxu0 0
  %2296 = vmatprep.subr.bf16.mxu0 0
  %2297 = vmatpush1.bf16.msra.mxu0 0
  %2298 = vmatprep.subr.bf16.mxu0 0
  %2299 = vmatpush1.bf16.msra.mxu0 0
  %2300 = vmatprep.subr.bf16.mxu0 0
  %2301 = vmatpush1.bf16.msra.mxu0 0
  %2302 = vmatprep.subr.bf16.mxu0 0
  %2303 = vmatpush1.bf16.msra.mxu0 0
  %2304 = vmatprep.subr.bf16.mxu0 0
  %2305 = vmatpush1.bf16.msra.mxu0 0
  %2306 = vmatprep.subr.bf16.mxu0 0
  %2307 = vmatpush1.bf16.msra.mxu0 0
  %2308 = vmatprep.subr.bf16.mxu0 0
  %2309 = vmatpush1.bf16.msra.mxu0 0
  %2310 = vmatprep.subr.bf16.mxu0 0
  %2311 = vmatpush1.bf16.msra.mxu0 0
  %2312 = vmatprep.subr.bf16.mxu0 0
  %2313 = vmatpush1.bf16.msra.mxu0 0
  %2314 = vmatprep.subr.bf16.mxu0 0
  %2315 = vmatpush1.bf16.msra.mxu0 0
  %2316 = vmatprep.subr.bf16.mxu0 0
  %2317 = vmatpush1.bf16.msra.mxu0 0
  %2318 = vmatprep.subr.bf16.mxu0 0
  %2319 = vmatpush1.bf16.msra.mxu0 0
  %2320 = vmatprep.subr.bf16.mxu0 0
  %2321 = vmatpush1.bf16.msra.mxu0 0
  %2322 = vmatprep.subr.bf16.mxu0 0
  %2323 = vmatpush1.bf16.msra.mxu0 0
  %2324 = vmatprep.mubr.bf16.mxu0 0
  %2325 = vmatmul.mubr.bf16.gmra.mrb[0].mxu0 %v2266
  %v2326 = vpop.f32.mrb[0].mxu0
  %v2327 = vadd.f32 0.0, %v2326
  %v2328 = vpop.f32.mrb[0].mxu0
  %v2329 = vpop.f32.mrb[0].mxu0
  %v2330 = vadd.f32 0.0, %v2329
  %v2331 = vpop.f32.mrb[0].mxu0
  %2332 = vmatprep.mubr.bf16.mxu0 0
  %2333 = vmatmul.mubr.bf16.gmra.mrb[0].mxu0 %v2269
  %v2334 = vpop.f32.mrb[0].mxu0
  %v2335 = vadd.f32 0.0, %v2334
  %v2336 = vpop.f32.mrb[0].mxu0
  %v2337 = vpop.f32.mrb[0].mxu0
  %v2338 = vadd.f32 0.0, %v2337
  %v2339 = vpop.f32.mrb[0].mxu0
  %2340 = vmatprep.mubr.bf16.mxu0 0
  %2341 = vmatmul.mubr.bf16.gmra.mrb[0].mxu0 %v2272
  %v2342 = vpop.f32.mrb[0].mxu0
  %v2343 = vadd.f32 0.0, %v2342
  %v2344 = vpop.f32.mrb[0].mxu0
  %v2345 = vpop.f32.mrb[0].mxu0
  %v2346 = vadd.f32 0.0, %v2345
  %v2347 = vpop.f32.mrb[0].mxu0
  %2348 = vmatprep.mubr.bf16.mxu0 0
  %2349 = vmatmul.mubr.bf16.gmra.mrb[0].mxu0 %v2275
  %v2350 = vpop.f32.mrb[0].mxu0
  %v2351 = vadd.f32 0.0, %v2350
  %v2352 = vpop.f32.mrb[0].mxu0
  %v2353 = vpop.f32.mrb[0].mxu0
  %v2354 = vadd.f32 0.0, %v2353
  %v2355 = vpop.f32.mrb[0].mxu0
  %2356 = vmatprep.mubr.bf16.mxu0 0
  %2357 = vmatmul.mubr.bf16.gmra.mrb[0].mxu0 %v2278
  %v2358 = vpop.f32.mrb[0].mxu0
  %v2359 = vadd.f32 0.0, %v2358
  %v2360 = vpop.f32.mrb[0].mxu0
  %v2361 = vpop.f32.mrb[0].mxu0
  %v2362 = vadd.f32 0.0, %v2361
  %v2363 = vpop.f32.mrb[0].mxu0
  %2364 = vmatprep.mubr.bf16.mxu0 0
  %2365 = vmatmul.mubr.bf16.gmra.mrb[0].mxu0 %v2281
  %v2366 = vpop.f32.mrb[0].mxu0
  %v2367 = vadd.f32 0.0, %v2366
  %v2368 = vpop.f32.mrb[0].mxu0
  %v2369 = vpop.f32.mrb[0].mxu0
  %v2370 = vadd.f32 0.0, %v2369
  %v2371 = vpop.f32.mrb[0].mxu0
  %2372 = vmatprep.mubr.bf16.mxu0 0
  %2373 = vmatmul.mubr.bf16.gmra.mrb[0].mxu0 %v2284
  %v2374 = vpop.f32.mrb[0].mxu0
  %v2375 = vadd.f32 0.0, %v2374
  %v2376 = vpop.f32.mrb[0].mxu0
  %v2377 = vpop.f32.mrb[0].mxu0
  %v2378 = vadd.f32 0.0, %v2377
  %v2379 = vpop.f32.mrb[0].mxu0
  %2380 = vmatprep.mubr.bf16.mxu0 0
  %2381 = vmatmul.mubr.bf16.gmra.mrb[0].mxu0 %v2287
  %v2382 = vpop.f32.mrb[0].mxu0
  %v2383 = vadd.f32 0.0, %v2382
  %v2384 = vpop.f32.mrb[0].mxu0
  %v2385 = vpop.f32.mrb[0].mxu0
  %v2386 = vadd.f32 0.0, %v2385
  %v2387 = vpop.f32.mrb[0].mxu0
  %2388 = vdwg.mxu0
  %v2389 = vadd.f32 %v2111, %v2327
  %v2390 = vadd.f32 %v2112, %v2330
  %v2391 = vadd.f32 %v2113, %v2335
  %v2392 = vadd.f32 %v2114, %v2338
  %v2393 = vadd.f32 %v2115, %v2343
  %v2394 = vadd.f32 %v2116, %v2346
  %v2395 = vadd.f32 %v2117, %v2351
  %v2396 = vadd.f32 %v2118, %v2354
  %v2397 = vadd.f32 %v2119, %v2359
  %v2398 = vadd.f32 %v2120, %v2362
  %v2399 = vadd.f32 %v2121, %v2367
  %v2400 = vadd.f32 %v2122, %v2370
  %v2401 = vadd.f32 %v2123, %v2375
  %v2402 = vadd.f32 %v2124, %v2378
  %v2403 = vadd.f32 %v2125, %v2383
  %v2404 = vadd.f32 %v2126, %v2386
  %s2405 = scalar_lea.vmem [#allocation2], 16
  %v2406 = vld [vmem:[%s2405] sm:$0xf]
  %v2407 = vld [vmem:[%s2405 + $0x8] sm:$0xf]
  %v2408 = vld [vmem:[%s2405 + $0x10] sm:$0xf]
  %v2409 = vld [vmem:[%s2405 + $0x18] sm:$0xf]
  %v2410 = vld [vmem:[%s2405 + $0x20] sm:$0xf]
  %v2411 = vld [vmem:[%s2405 + $0x28] sm:$0xf]
  %v2412 = vld [vmem:[%s2405 + $0x30] sm:$0xf]
  %v2413 = vld [vmem:[%s2405 + $0x38] sm:$0xf]
  %v2414 = vld [vmem:[%s2405 + $0x50] sm:$0xf]
  %v2415 = vld [vmem:[%s2405 + $0x58] sm:$0xf]
  %v2416 = vld [vmem:[%s2405 + $0x60] sm:$0xf]
  %v2417 = vld [vmem:[%s2405 + $0x68] sm:$0xf]
  %v2418 = vld [vmem:[%s2405 + $0x70] sm:$0xf]
  %v2419 = vld [vmem:[%s2405 + $0x78] sm:$0xf]
  %v2420 = vld [vmem:[%s2405 + $0x80] sm:$0xf]
  %v2421 = vld [vmem:[%s2405 + $0x88] sm:$0xf]
  %s2422 = scalar_lea.vmem %s1, 12
  %v2423 = vld [vmem:[%s2422] sm:$0x3]
  %v2440 = vunpack.c.l.b16 %v2406
  %v2441 = vunpack.c.l.b16 %v2407
  %v2442 = vunpack.c.l.b16 %v2408
  %v2443 = vunpack.c.l.b16 %v2409
  %v2444 = vunpack.c.l.b16 %v2410
  %v2445 = vunpack.c.l.b16 %v2411
  %v2446 = vunpack.c.l.b16 %v2412
  %v2447 = vunpack.c.l.b16 %v2413
  %v2448 = vunpack.c.l.b16 %v2414
  %v2449 = vunpack.c.l.b16 %v2415
  %v2450 = vunpack.c.l.b16 %v2416
  %v2451 = vunpack.c.l.b16 %v2417
  %v2452 = vunpack.c.l.b16 %v2418
  %v2453 = vunpack.c.l.b16 %v2419
  %v2454 = vunpack.c.l.b16 %v2420
  %v2455 = vunpack.c.l.b16 %v2421
  %v2456 = vpack.c.b16 %v2441, %v2440
  %v2457 = vpack.c.b16 %v2443, %v2442
  %v2458 = vpack.c.b16 %v2445, %v2444
  %v2459 = vpack.c.b16 %v2447, %v2446
  %v2460 = vpack.c.b16 %v2449, %v2448
  %v2461 = vpack.c.b16 %v2451, %v2450
  %v2462 = vpack.c.b16 %v2453, %v2452
  %v2463 = vpack.c.b16 %v2455, %v2454
  %v2465 = vsel %vm936, %v2456, 0
  %v2468 = vsel %vm936, %v2457, 0
  %v2471 = vsel %vm936, %v2458, 0
  %v2474 = vsel %vm936, %v2459, 0
  %v2477 = vsel %vm936, %v2460, 0
  %v2480 = vsel %vm936, %v2461, 0
  %v2483 = vsel %vm936, %v2462, 0
  %v2486 = vsel %vm936, %v2463, 0
  %v2489 = vsel %vm961, %v2423, 0
  %2491 = vmatprep.subr.bf16.mxu0 0
  %2492 = vmatpush1.bf16.msra.mxu0 %v2489
  %2493 = vmatprep.subr.bf16.mxu0 0
  %2494 = vmatpush1.bf16.msra.mxu0 0
  %2495 = vmatprep.subr.bf16.mxu0 0
  %2496 = vmatpush1.bf16.msra.mxu0 0
  %2497 = vmatprep.subr.bf16.mxu0 0
  %2498 = vmatpush1.bf16.msra.mxu0 0
  %2499 = vmatprep.subr.bf16.mxu0 0
  %2500 = vmatpush1.bf16.msra.mxu0 0
  %2501 = vmatprep.subr.bf16.mxu0 0
  %2502 = vmatpush1.bf16.msra.mxu0 0
  %2503 = vmatprep.subr.bf16.mxu0 0
  %2504 = vmatpush1.bf16.msra.mxu0 0
  %2505 = vmatprep.subr.bf16.mxu0 0
  %2506 = vmatpush1.bf16.msra.mxu0 0
  %2507 = vmatprep.subr.bf16.mxu0 0
  %2508 = vmatpush1.bf16.msra.mxu0 0
  %2509 = vmatprep.subr.bf16.mxu0 0
  %2510 = vmatpush1.bf16.msra.mxu0 0
  %2511 = vmatprep.subr.bf16.mxu0 0
  %2512 = vmatpush1.bf16.msra.mxu0 0
  %2513 = vmatprep.subr.bf16.mxu0 0
  %2514 = vmatpush1.bf16.msra.mxu0 0
  %2515 = vmatprep.subr.bf16.mxu0 0
  %2516 = vmatpush1.bf16.msra.mxu0 0
  %2517 = vmatprep.subr.bf16.mxu0 0
  %2518 = vmatpush1.bf16.msra.mxu0 0
  %2519 = vmatprep.subr.bf16.mxu0 0
  %2520 = vmatpush1.bf16.msra.mxu0 0
  %2521 = vmatprep.subr.bf16.mxu0 0
  %2522 = vmatpush1.bf16.msra.mxu0 0
  %2523 = vmatprep.mubr.bf16.mxu0 0
  %2524 = vmatmul.mubr.bf16.gmra.mrb[0].mxu0 %v2465
  %v2525 = vpop.f32.mrb[0].mxu0
  %v2526 = vadd.f32 0.0, %v2525
  %v2527 = vpop.f32.mrb[0].mxu0
  %v2528 = vpop.f32.mrb[0].mxu0
  %v2529 = vadd.f32 0.0, %v2528
  %v2530 = vpop.f32.mrb[0].mxu0
  %2531 = vmatprep.mubr.bf16.mxu0 0
  %2532 = vmatmul.mubr.bf16.gmra.mrb[0].mxu0 %v2468
  %v2533 = vpop.f32.mrb[0].mxu0
  %v2534 = vadd.f32 0.0, %v2533
  %v2535 = vpop.f32.mrb[0].mxu0
  %v2536 = vpop.f32.mrb[0].mxu0
  %v2537 = vadd.f32 0.0, %v2536
  %v2538 = vpop.f32.mrb[0].mxu0
  %2539 = vmatprep.mubr.bf16.mxu0 0
  %2540 = vmatmul.mubr.bf16.gmra.mrb[0].mxu0 %v2471
  %v2541 = vpop.f32.mrb[0].mxu0
  %v2542 = vadd.f32 0.0, %v2541
  %v2543 = vpop.f32.mrb[0].mxu0
  %v2544 = vpop.f32.mrb[0].mxu0
  %v2545 = vadd.f32 0.0, %v2544
  %v2546 = vpop.f32.mrb[0].mxu0
  %2547 = vmatprep.mubr.bf16.mxu0 0
  %2548 = vmatmul.mubr.bf16.gmra.mrb[0].mxu0 %v2474
  %v2549 = vpop.f32.mrb[0].mxu0
  %v2550 = vadd.f32 0.0, %v2549
  %v2551 = vpop.f32.mrb[0].mxu0
  %v2552 = vpop.f32.mrb[0].mxu0
  %v2553 = vadd.f32 0.0, %v2552
  %v2554 = vpop.f32.mrb[0].mxu0
  %2555 = vmatprep.mubr.bf16.mxu0 0
  %2556 = vmatmul.mubr.bf16.gmra.mrb[0].mxu0 %v2477
  %v2557 = vpop.f32.mrb[0].mxu0
  %v2558 = vadd.f32 0.0, %v2557
  %v2559 = vpop.f32.mrb[0].mxu0
  %v2560 = vpop.f32.mrb[0].mxu0
  %v2561 = vadd.f32 0.0, %v2560
  %v2562 = vpop.f32.mrb[0].mxu0
  %2563 = vmatprep.mubr.bf16.mxu0 0
  %2564 = vmatmul.mubr.bf16.gmra.mrb[0].mxu0 %v2480
  %v2565 = vpop.f32.mrb[0].mxu0
  %v2566 = vadd.f32 0.0, %v2565
  %v2567 = vpop.f32.mrb[0].mxu0
  %v2568 = vpop.f32.mrb[0].mxu0
  %v2569 = vadd.f32 0.0, %v2568
  %v2570 = vpop.f32.mrb[0].mxu0
  %2571 = vmatprep.mubr.bf16.mxu0 0
  %2572 = vmatmul.mubr.bf16.gmra.mrb[0].mxu0 %v2483
  %v2573 = vpop.f32.mrb[0].mxu0
  %v2574 = vadd.f32 0.0, %v2573
  %v2575 = vpop.f32.mrb[0].mxu0
  %v2576 = vpop.f32.mrb[0].mxu0
  %v2577 = vadd.f32 0.0, %v2576
  %v2578 = vpop.f32.mrb[0].mxu0
  %2579 = vmatprep.mubr.bf16.mxu0 0
  %2580 = vmatmul.mubr.bf16.gmra.mrb[0].mxu0 %v2486
  %v2581 = vpop.f32.mrb[0].mxu0
  %v2582 = vadd.f32 0.0, %v2581
  %v2583 = vpop.f32.mrb[0].mxu0
  %v2584 = vpop.f32.mrb[0].mxu0
  %v2585 = vadd.f32 0.0, %v2584
  %v2586 = vpop.f32.mrb[0].mxu0
  %2587 = vdwg.mxu0
  %v2588 = vadd.f32 %v2389, %v2526
  %v2589 = vadd.f32 %v2390, %v2529
  %v2590 = vadd.f32 %v2391, %v2534
  %v2591 = vadd.f32 %v2392, %v2537
  %v2592 = vadd.f32 %v2393, %v2542
  %v2593 = vadd.f32 %v2394, %v2545
  %v2594 = vadd.f32 %v2395, %v2550
  %v2595 = vadd.f32 %v2396, %v2553
  %v2596 = vadd.f32 %v2397, %v2558
  %v2597 = vadd.f32 %v2398, %v2561
  %v2598 = vadd.f32 %v2399, %v2566
  %v2599 = vadd.f32 %v2400, %v2569
  %v2600 = vadd.f32 %v2401, %v2574
  %v2601 = vadd.f32 %v2402, %v2577
  %v2602 = vadd.f32 %v2403, %v2582
  %v2603 = vadd.f32 %v2404, %v2585
  %v2604 = vld [vmem:[%s2405] sm:$0xf]
  %v2605 = vld [vmem:[%s2405 + $0x4] sm:$0x1]
  %v2606 = vld [vmem:[%s2405 + $0x8] sm:$0xf]
  %v2607 = vld [vmem:[%s2405 + $0xc] sm:$0x1]
  %v2608 = vld [vmem:[%s2405 + $0x10] sm:$0xf]
  %v2609 = vld [vmem:[%s2405 + $0x14] sm:$0x1]
  %v2610 = vld [vmem:[%s2405 + $0x18] sm:$0xf]
  %v2611 = vld [vmem:[%s2405 + $0x1c] sm:$0x1]
  %v2612 = vld [vmem:[%s2405 + $0x20] sm:$0xf]
  %v2613 = vld [vmem:[%s2405 + $0x24] sm:$0x1]
  %v2614 = vld [vmem:[%s2405 + $0x28] sm:$0xf]
  %v2615 = vld [vmem:[%s2405 + $0x2c] sm:$0x1]
  %v2616 = vld [vmem:[%s2405 + $0x30] sm:$0xf]
  %v2617 = vld [vmem:[%s2405 + $0x34] sm:$0x1]
  %v2618 = vld [vmem:[%s2405 + $0x38] sm:$0xf]
  %v2619 = vld [vmem:[%s2405 + $0x3c] sm:$0x1]
  %v2620 = vld [vmem:[%s2405 + $0x50] sm:$0xf]
  %v2621 = vld [vmem:[%s2405 + $0x54] sm:$0x1]
  %v2622 = vld [vmem:[%s2405 + $0x58] sm:$0xf]
  %v2623 = vld [vmem:[%s2405 + $0x5c] sm:$0x1]
  %v2624 = vld [vmem:[%s2405 + $0x60] sm:$0xf]
  %v2625 = vld [vmem:[%s2405 + $0x64] sm:$0x1]
  %v2626 = vld [vmem:[%s2405 + $0x68] sm:$0xf]
  %v2627 = vld [vmem:[%s2405 + $0x6c] sm:$0x1]
  %v2628 = vld [vmem:[%s2405 + $0x70] sm:$0xf]
  %v2629 = vld [vmem:[%s2405 + $0x74] sm:$0x1]
  %v2630 = vld [vmem:[%s2405 + $0x78] sm:$0xf]
  %v2631 = vld [vmem:[%s2405 + $0x7c] sm:$0x1]
  %v2632 = vld [vmem:[%s2405 + $0x80] sm:$0xf]
  %v2633 = vld [vmem:[%s2405 + $0x84] sm:$0x1]
  %v2634 = vld [vmem:[%s2405 + $0x88] sm:$0xf]
  %v2635 = vld [vmem:[%s2405 + $0x8c] sm:$0x1]
  %v2637 = vshrl.u32 %v2604, 16
  %v2639 = vrot.slane %v2637, 4
  %v2640 = vshll.u32 %v2604, 16
  %v2642 = vrot.slane %v2640, 5
  %v2643 = vor.u32 %v2639, %v2642
  %v2644 = vrot.slane %v2643, 4
  %v2646 = vshll.u32 %v2605, 16
  %v2648 = vrot.slane %v2646, 5
  %v2649 = vsel %vm685, %v2644, %v2648
  %v2651 = vshrl.u32 %v2606, 16
  %v2653 = vrot.slane %v2651, 4
  %v2654 = vshll.u32 %v2606, 16
  %v2656 = vrot.slane %v2654, 5
  %v2657 = vor.u32 %v2653, %v2656
  %v2658 = vrot.slane %v2657, 4
  %v2660 = vshll.u32 %v2607, 16
  %v2662 = vrot.slane %v2660, 5
  %v2663 = vsel %vm685, %v2658, %v2662
  %v2665 = vshrl.u32 %v2608, 16
  %v2667 = vrot.slane %v2665, 4
  %v2668 = vshll.u32 %v2608, 16
  %v2670 = vrot.slane %v2668, 5
  %v2671 = vor.u32 %v2667, %v2670
  %v2672 = vrot.slane %v2671, 4
  %v2674 = vshll.u32 %v2609, 16
  %v2676 = vrot.slane %v2674, 5
  %v2677 = vsel %vm685, %v2672, %v2676
  %v2679 = vshrl.u32 %v2610, 16
  %v2681 = vrot.slane %v2679, 4
  %v2682 = vshll.u32 %v2610, 16
  %v2684 = vrot.slane %v2682, 5
  %v2685 = vor.u32 %v2681, %v2684
  %v2686 = vrot.slane %v2685, 4
  %v2688 = vshll.u32 %v2611, 16
  %v2690 = vrot.slane %v2688, 5
  %v2691 = vsel %vm685, %v2686, %v2690
  %v2693 = vshrl.u32 %v2612, 16
  %v2695 = vrot.slane %v2693, 4
  %v2696 = vshll.u32 %v2612, 16
  %v2698 = vrot.slane %v2696, 5
  %v2699 = vor.u32 %v2695, %v2698
  %v2700 = vrot.slane %v2699, 4
  %v2702 = vshll.u32 %v2613, 16
  %v2704 = vrot.slane %v2702, 5
  %v2705 = vsel %vm685, %v2700, %v2704
  %v2707 = vshrl.u32 %v2614, 16
  %v2709 = vrot.slane %v2707, 4
  %v2710 = vshll.u32 %v2614, 16
  %v2712 = vrot.slane %v2710, 5
  %v2713 = vor.u32 %v2709, %v2712
  %v2714 = vrot.slane %v2713, 4
  %v2716 = vshll.u32 %v2615, 16
  %v2718 = vrot.slane %v2716, 5
  %v2719 = vsel %vm685, %v2714, %v2718
  %v2721 = vshrl.u32 %v2616, 16
  %v2723 = vrot.slane %v2721, 4
  %v2724 = vshll.u32 %v2616, 16
  %v2726 = vrot.slane %v2724, 5
  %v2727 = vor.u32 %v2723, %v2726
  %v2728 = vrot.slane %v2727, 4
  %v2730 = vshll.u32 %v2617, 16
  %v2732 = vrot.slane %v2730, 5
  %v2733 = vsel %vm685, %v2728, %v2732
  %v2735 = vshrl.u32 %v2618, 16
  %v2737 = vrot.slane %v2735, 4
  %v2738 = vshll.u32 %v2618, 16
  %v2740 = vrot.slane %v2738, 5
  %v2741 = vor.u32 %v2737, %v2740
  %v2742 = vrot.slane %v2741, 4
  %v2744 = vshll.u32 %v2619, 16
  %v2746 = vrot.slane %v2744, 5
  %v2747 = vsel %vm685, %v2742, %v2746
  %v2749 = vshrl.u32 %v2620, 16
  %v2751 = vrot.slane %v2749, 4
  %v2752 = vshll.u32 %v2620, 16
  %v2754 = vrot.slane %v2752, 5
  %v2755 = vor.u32 %v2751, %v2754
  %v2756 = vrot.slane %v2755, 4
  %v2758 = vshll.u32 %v2621, 16
  %v2760 = vrot.slane %v2758, 5
  %v2761 = vsel %vm685, %v2756, %v2760
  %v2763 = vshrl.u32 %v2622, 16
  %v2765 = vrot.slane %v2763, 4
  %v2766 = vshll.u32 %v2622, 16
  %v2768 = vrot.slane %v2766, 5
  %v2769 = vor.u32 %v2765, %v2768
  %v2770 = vrot.slane %v2769, 4
  %v2772 = vshll.u32 %v2623, 16
  %v2774 = vrot.slane %v2772, 5
  %v2775 = vsel %vm685, %v2770, %v2774
  %v2777 = vshrl.u32 %v2624, 16
  %v2779 = vrot.slane %v2777, 4
  %v2780 = vshll.u32 %v2624, 16
  %v2782 = vrot.slane %v2780, 5
  %v2783 = vor.u32 %v2779, %v2782
  %v2784 = vrot.slane %v2783, 4
  %v2786 = vshll.u32 %v2625, 16
  %v2788 = vrot.slane %v2786, 5
  %v2789 = vsel %vm685, %v2784, %v2788
  %v2791 = vshrl.u32 %v2626, 16
  %v2793 = vrot.slane %v2791, 4
  %v2794 = vshll.u32 %v2626, 16
  %v2796 = vrot.slane %v2794, 5
  %v2797 = vor.u32 %v2793, %v2796
  %v2798 = vrot.slane %v2797, 4
  %v2800 = vshll.u32 %v2627, 16
  %v2802 = vrot.slane %v2800, 5
  %v2803 = vsel %vm685, %v2798, %v2802
  %v2805 = vshrl.u32 %v2628, 16
  %v2807 = vrot.slane %v2805, 4
  %v2808 = vshll.u32 %v2628, 16
  %v2810 = vrot.slane %v2808, 5
  %v2811 = vor.u32 %v2807, %v2810
  %v2812 = vrot.slane %v2811, 4
  %v2814 = vshll.u32 %v2629, 16
  %v2816 = vrot.slane %v2814, 5
  %v2817 = vsel %vm685, %v2812, %v2816
  %v2819 = vshrl.u32 %v2630, 16
  %v2821 = vrot.slane %v2819, 4
  %v2822 = vshll.u32 %v2630, 16
  %v2824 = vrot.slane %v2822, 5
  %v2825 = vor.u32 %v2821, %v2824
  %v2826 = vrot.slane %v2825, 4
  %v2828 = vshll.u32 %v2631, 16
  %v2830 = vrot.slane %v2828, 5
  %v2831 = vsel %vm685, %v2826, %v2830
  %v2833 = vshrl.u32 %v2632, 16
  %v2835 = vrot.slane %v2833, 4
  %v2836 = vshll.u32 %v2632, 16
  %v2838 = vrot.slane %v2836, 5
  %v2839 = vor.u32 %v2835, %v2838
  %v2840 = vrot.slane %v2839, 4
  %v2842 = vshll.u32 %v2633, 16
  %v2844 = vrot.slane %v2842, 5
  %v2845 = vsel %vm685, %v2840, %v2844
  %v2847 = vshrl.u32 %v2634, 16
  %v2849 = vrot.slane %v2847, 4
  %v2850 = vshll.u32 %v2634, 16
  %v2852 = vrot.slane %v2850, 5
  %v2853 = vor.u32 %v2849, %v2852
  %v2854 = vrot.slane %v2853, 4
  %v2856 = vshll.u32 %v2635, 16
  %v2858 = vrot.slane %v2856, 5
  %v2859 = vsel %vm685, %v2854, %v2858
  %s2860 = scalar_lea.vmem %s1, 14
  %v2861 = vld [vmem:[%s2860] sm:$0x3]
  %v2862 = vunpack.c.l.b16 %v2649
  %v2863 = vunpack.c.l.b16 %v2663
  %v2864 = vunpack.c.l.b16 %v2677
  %v2865 = vunpack.c.l.b16 %v2691
  %v2866 = vunpack.c.l.b16 %v2705
  %v2867 = vunpack.c.l.b16 %v2719
  %v2868 = vunpack.c.l.b16 %v2733
  %v2869 = vunpack.c.l.b16 %v2747
  %v2870 = vunpack.c.l.b16 %v2761
  %v2871 = vunpack.c.l.b16 %v2775
  %v2872 = vunpack.c.l.b16 %v2789
  %v2873 = vunpack.c.l.b16 %v2803
  %v2874 = vunpack.c.l.b16 %v2817
  %v2875 = vunpack.c.l.b16 %v2831
  %v2876 = vunpack.c.l.b16 %v2845
  %v2877 = vunpack.c.l.b16 %v2859
  %v2878 = vpack.c.b16 %v2863, %v2862
  %v2879 = vpack.c.b16 %v2865, %v2864
  %v2880 = vpack.c.b16 %v2867, %v2866
  %v2881 = vpack.c.b16 %v2869, %v2868
  %v2882 = vpack.c.b16 %v2871, %v2870
  %v2883 = vpack.c.b16 %v2873, %v2872
  %v2884 = vpack.c.b16 %v2875, %v2874
  %v2885 = vpack.c.b16 %v2877, %v2876
  %v2887 = vsel %vm936, %v2878, 0
  %v2890 = vsel %vm936, %v2879, 0
  %v2893 = vsel %vm936, %v2880, 0
  %v2896 = vsel %vm936, %v2881, 0
  %v2899 = vsel %vm936, %v2882, 0
  %v2902 = vsel %vm936, %v2883, 0
  %v2905 = vsel %vm936, %v2884, 0
  %v2908 = vsel %vm936, %v2885, 0
  %v2911 = vsel %vm961, %v2861, 0
  %2913 = vmatprep.subr.bf16.mxu0 0
  %2914 = vmatpush1.bf16.msra.mxu0 %v2911
  %2915 = vmatprep.subr.bf16.mxu0 0
  %2916 = vmatpush1.bf16.msra.mxu0 0
  %2917 = vmatprep.subr.bf16.mxu0 0
  %2918 = vmatpush1.bf16.msra.mxu0 0
  %2919 = vmatprep.subr.bf16.mxu0 0
  %2920 = vmatpush1.bf16.msra.mxu0 0
  %2921 = vmatprep.subr.bf16.mxu0 0
  %2922 = vmatpush1.bf16.msra.mxu0 0
  %2923 = vmatprep.subr.bf16.mxu0 0
  %2924 = vmatpush1.bf16.msra.mxu0 0
  %2925 = vmatprep.subr.bf16.mxu0 0
  %2926 = vmatpush1.bf16.msra.mxu0 0
  %2927 = vmatprep.subr.bf16.mxu0 0
  %2928 = vmatpush1.bf16.msra.mxu0 0
  %2929 = vmatprep.subr.bf16.mxu0 0
  %2930 = vmatpush1.bf16.msra.mxu0 0
  %2931 = vmatprep.subr.bf16.mxu0 0
  %2932 = vmatpush1.bf16.msra.mxu0 0
  %2933 = vmatprep.subr.bf16.mxu0 0
  %2934 = vmatpush1.bf16.msra.mxu0 0
  %2935 = vmatprep.subr.bf16.mxu0 0
  %2936 = vmatpush1.bf16.msra.mxu0 0
  %2937 = vmatprep.subr.bf16.mxu0 0
  %2938 = vmatpush1.bf16.msra.mxu0 0
  %2939 = vmatprep.subr.bf16.mxu0 0
  %2940 = vmatpush1.bf16.msra.mxu0 0
  %2941 = vmatprep.subr.bf16.mxu0 0
  %2942 = vmatpush1.bf16.msra.mxu0 0
  %2943 = vmatprep.subr.bf16.mxu0 0
  %2944 = vmatpush1.bf16.msra.mxu0 0
  %2945 = vmatprep.mubr.bf16.mxu0 0
  %2946 = vmatmul.mubr.bf16.gmra.mrb[0].mxu0 %v2887
  %v2947 = vpop.f32.mrb[0].mxu0
  %v2948 = vadd.f32 0.0, %v2947
  %v2949 = vpop.f32.mrb[0].mxu0
  %v2950 = vpop.f32.mrb[0].mxu0
  %v2951 = vadd.f32 0.0, %v2950
  %v2952 = vpop.f32.mrb[0].mxu0
  %2953 = vmatprep.mubr.bf16.mxu0 0
  %2954 = vmatmul.mubr.bf16.gmra.mrb[0].mxu0 %v2890
  %v2955 = vpop.f32.mrb[0].mxu0
  %v2956 = vadd.f32 0.0, %v2955
  %v2957 = vpop.f32.mrb[0].mxu0
  %v2958 = vpop.f32.mrb[0].mxu0
  %v2959 = vadd.f32 0.0, %v2958
  %v2960 = vpop.f32.mrb[0].mxu0
  %2961 = vmatprep.mubr.bf16.mxu0 0
  %2962 = vmatmul.mubr.bf16.gmra.mrb[0].mxu0 %v2893
  %v2963 = vpop.f32.mrb[0].mxu0
  %v2964 = vadd.f32 0.0, %v2963
  %v2965 = vpop.f32.mrb[0].mxu0
  %v2966 = vpop.f32.mrb[0].mxu0
  %v2967 = vadd.f32 0.0, %v2966
  %v2968 = vpop.f32.mrb[0].mxu0
  %2969 = vmatprep.mubr.bf16.mxu0 0
  %2970 = vmatmul.mubr.bf16.gmra.mrb[0].mxu0 %v2896
  %v2971 = vpop.f32.mrb[0].mxu0
  %v2972 = vadd.f32 0.0, %v2971
  %v2973 = vpop.f32.mrb[0].mxu0
  %v2974 = vpop.f32.mrb[0].mxu0
  %v2975 = vadd.f32 0.0, %v2974
  %v2976 = vpop.f32.mrb[0].mxu0
  %2977 = vmatprep.mubr.bf16.mxu0 0
  %2978 = vmatmul.mubr.bf16.gmra.mrb[0].mxu0 %v2899
  %v2979 = vpop.f32.mrb[0].mxu0
  %v2980 = vadd.f32 0.0, %v2979
  %v2981 = vpop.f32.mrb[0].mxu0
  %v2982 = vpop.f32.mrb[0].mxu0
  %v2983 = vadd.f32 0.0, %v2982
  %v2984 = vpop.f32.mrb[0].mxu0
  %2985 = vmatprep.mubr.bf16.mxu0 0
  %2986 = vmatmul.mubr.bf16.gmra.mrb[0].mxu0 %v2902
  %v2987 = vpop.f32.mrb[0].mxu0
  %v2988 = vadd.f32 0.0, %v2987
  %v2989 = vpop.f32.mrb[0].mxu0
  %v2990 = vpop.f32.mrb[0].mxu0
  %v2991 = vadd.f32 0.0, %v2990
  %v2992 = vpop.f32.mrb[0].mxu0
  %2993 = vmatprep.mubr.bf16.mxu0 0
  %2994 = vmatmul.mubr.bf16.gmra.mrb[0].mxu0 %v2905
  %v2995 = vpop.f32.mrb[0].mxu0
  %v2996 = vadd.f32 0.0, %v2995
  %v2997 = vpop.f32.mrb[0].mxu0
  %v2998 = vpop.f32.mrb[0].mxu0
  %v2999 = vadd.f32 0.0, %v2998
  %v3000 = vpop.f32.mrb[0].mxu0
  %3001 = vmatprep.mubr.bf16.mxu0 0
  %3002 = vmatmul.mubr.bf16.gmra.mrb[0].mxu0 %v2908
  %v3003 = vpop.f32.mrb[0].mxu0
  %v3004 = vadd.f32 0.0, %v3003
  %v3005 = vpop.f32.mrb[0].mxu0
  %v3006 = vpop.f32.mrb[0].mxu0
  %v3007 = vadd.f32 0.0, %v3006
  %v3008 = vpop.f32.mrb[0].mxu0
  %3009 = vdwg.mxu0
  %v3010 = vadd.f32 %v2588, %v2948
  %v3011 = vadd.f32 %v2589, %v2951
  %v3012 = vadd.f32 %v2590, %v2956
  %v3013 = vadd.f32 %v2591, %v2959
  %v3014 = vadd.f32 %v2592, %v2964
  %v3015 = vadd.f32 %v2593, %v2967
  %v3016 = vadd.f32 %v2594, %v2972
  %v3017 = vadd.f32 %v2595, %v2975
  %v3018 = vadd.f32 %v2596, %v2980
  %v3019 = vadd.f32 %v2597, %v2983
  %v3020 = vadd.f32 %v2598, %v2988
  %v3021 = vadd.f32 %v2599, %v2991
  %v3022 = vadd.f32 %v2600, %v2996
  %v3023 = vadd.f32 %v2601, %v2999
  %v3024 = vadd.f32 %v2602, %v3004
  %v3025 = vadd.f32 %v2603, %v3007
  %v3026 = vld [vmem:[%s2405] sm:$0xe]
  %v3027 = vld [vmem:[%s2405 + $0x8] sm:$0xe]
  %v3028 = vld [vmem:[%s2405 + $0x10] sm:$0xe]
  %v3029 = vld [vmem:[%s2405 + $0x18] sm:$0xe]
  %v3030 = vld [vmem:[%s2405 + $0x20] sm:$0xe]
  %v3031 = vld [vmem:[%s2405 + $0x28] sm:$0xe]
  %v3032 = vld [vmem:[%s2405 + $0x30] sm:$0xe]
  %v3033 = vld [vmem:[%s2405 + $0x38] sm:$0xe]
  %v3034 = vld [vmem:[%s2405 + $0x50] sm:$0xe]
  %v3035 = vld [vmem:[%s2405 + $0x58] sm:$0xe]
  %v3036 = vld [vmem:[%s2405 + $0x60] sm:$0xe]
  %v3037 = vld [vmem:[%s2405 + $0x68] sm:$0xe]
  %v3038 = vld [vmem:[%s2405 + $0x70] sm:$0xe]
  %v3039 = vld [vmem:[%s2405 + $0x78] sm:$0xe]
  %v3040 = vld [vmem:[%s2405 + $0x80] sm:$0xe]
  %v3041 = vld [vmem:[%s2405 + $0x88] sm:$0xe]
  %v3074 = vrot.slane %v3026, 5
  %v3075 = vrot.slane %v3074, 4
  %v3076 = vrot.slane %v2605, 5
  %v3077 = vsel %vm1276, %v3075, %v3076
  %v3078 = vrot.slane %v3027, 5
  %v3079 = vrot.slane %v3078, 4
  %v3080 = vrot.slane %v2607, 5
  %v3081 = vsel %vm1276, %v3079, %v3080
  %v3082 = vrot.slane %v3028, 5
  %v3083 = vrot.slane %v3082, 4
  %v3084 = vrot.slane %v2609, 5
  %v3085 = vsel %vm1276, %v3083, %v3084
  %v3086 = vrot.slane %v3029, 5
  %v3087 = vrot.slane %v3086, 4
  %v3088 = vrot.slane %v2611, 5
  %v3089 = vsel %vm1276, %v3087, %v3088
  %v3090 = vrot.slane %v3030, 5
  %v3091 = vrot.slane %v3090, 4
  %v3092 = vrot.slane %v2613, 5
  %v3093 = vsel %vm1276, %v3091, %v3092
  %v3094 = vrot.slane %v3031, 5
  %v3095 = vrot.slane %v3094, 4
  %v3096 = vrot.slane %v2615, 5
  %v3097 = vsel %vm1276, %v3095, %v3096
  %v3098 = vrot.slane %v3032, 5
  %v3099 = vrot.slane %v3098, 4
  %v3100 = vrot.slane %v2617, 5
  %v3101 = vsel %vm1276, %v3099, %v3100
  %v3102 = vrot.slane %v3033, 5
  %v3103 = vrot.slane %v3102, 4
  %v3104 = vrot.slane %v2619, 5
  %v3105 = vsel %vm1276, %v3103, %v3104
  %v3106 = vrot.slane %v3034, 5
  %v3107 = vrot.slane %v3106, 4
  %v3108 = vrot.slane %v2621, 5
  %v3109 = vsel %vm1276, %v3107, %v3108
  %v3110 = vrot.slane %v3035, 5
  %v3111 = vrot.slane %v3110, 4
  %v3112 = vrot.slane %v2623, 5
  %v3113 = vsel %vm1276, %v3111, %v3112
  %v3114 = vrot.slane %v3036, 5
  %v3115 = vrot.slane %v3114, 4
  %v3116 = vrot.slane %v2625, 5
  %v3117 = vsel %vm1276, %v3115, %v3116
  %v3118 = vrot.slane %v3037, 5
  %v3119 = vrot.slane %v3118, 4
  %v3120 = vrot.slane %v2627, 5
  %v3121 = vsel %vm1276, %v3119, %v3120
  %v3122 = vrot.slane %v3038, 5
  %v3123 = vrot.slane %v3122, 4
  %v3124 = vrot.slane %v2629, 5
  %v3125 = vsel %vm1276, %v3123, %v3124
  %v3126 = vrot.slane %v3039, 5
  %v3127 = vrot.slane %v3126, 4
  %v3128 = vrot.slane %v2631, 5
  %v3129 = vsel %vm1276, %v3127, %v3128
  %v3130 = vrot.slane %v3040, 5
  %v3131 = vrot.slane %v3130, 4
  %v3132 = vrot.slane %v2633, 5
  %v3133 = vsel %vm1276, %v3131, %v3132
  %v3134 = vrot.slane %v3041, 5
  %v3135 = vrot.slane %v3134, 4
  %v3136 = vrot.slane %v2635, 5
  %v3137 = vsel %vm1276, %v3135, %v3136
  %s3138 = scalar_lea.vmem %s1, 16
  %v3139 = vld [vmem:[%s3138] sm:$0x3]
  %v3140 = vunpack.c.l.b16 %v3077
  %v3141 = vunpack.c.l.b16 %v3081
  %v3142 = vunpack.c.l.b16 %v3085
  %v3143 = vunpack.c.l.b16 %v3089
  %v3144 = vunpack.c.l.b16 %v3093
  %v3145 = vunpack.c.l.b16 %v3097
  %v3146 = vunpack.c.l.b16 %v3101
  %v3147 = vunpack.c.l.b16 %v3105
  %v3148 = vunpack.c.l.b16 %v3109
  %v3149 = vunpack.c.l.b16 %v3113
  %v3150 = vunpack.c.l.b16 %v3117
  %v3151 = vunpack.c.l.b16 %v3121
  %v3152 = vunpack.c.l.b16 %v3125
  %v3153 = vunpack.c.l.b16 %v3129
  %v3154 = vunpack.c.l.b16 %v3133
  %v3155 = vunpack.c.l.b16 %v3137
  %v3156 = vpack.c.b16 %v3141, %v3140
  %v3157 = vpack.c.b16 %v3143, %v3142
  %v3158 = vpack.c.b16 %v3145, %v3144
  %v3159 = vpack.c.b16 %v3147, %v3146
  %v3160 = vpack.c.b16 %v3149, %v3148
  %v3161 = vpack.c.b16 %v3151, %v3150
  %v3162 = vpack.c.b16 %v3153, %v3152
  %v3163 = vpack.c.b16 %v3155, %v3154
  %v3165 = vsel %vm936, %v3156, 0
  %v3168 = vsel %vm936, %v3157, 0
  %v3171 = vsel %vm936, %v3158, 0
  %v3174 = vsel %vm936, %v3159, 0
  %v3177 = vsel %vm936, %v3160, 0
  %v3180 = vsel %vm936, %v3161, 0
  %v3183 = vsel %vm936, %v3162, 0
  %v3186 = vsel %vm936, %v3163, 0
  %v3189 = vsel %vm961, %v3139, 0
  %3191 = vmatprep.subr.bf16.mxu0 0
  %3192 = vmatpush1.bf16.msra.mxu0 %v3189
  %3193 = vmatprep.subr.bf16.mxu0 0
  %3194 = vmatpush1.bf16.msra.mxu0 0
  %3195 = vmatprep.subr.bf16.mxu0 0
  %3196 = vmatpush1.bf16.msra.mxu0 0
  %3197 = vmatprep.subr.bf16.mxu0 0
  %3198 = vmatpush1.bf16.msra.mxu0 0
  %3199 = vmatprep.subr.bf16.mxu0 0
  %3200 = vmatpush1.bf16.msra.mxu0 0
  %3201 = vmatprep.subr.bf16.mxu0 0
  %3202 = vmatpush1.bf16.msra.mxu0 0
  %3203 = vmatprep.subr.bf16.mxu0 0
  %3204 = vmatpush1.bf16.msra.mxu0 0
  %3205 = vmatprep.subr.bf16.mxu0 0
  %3206 = vmatpush1.bf16.msra.mxu0 0
  %3207 = vmatprep.subr.bf16.mxu0 0
  %3208 = vmatpush1.bf16.msra.mxu0 0
  %3209 = vmatprep.subr.bf16.mxu0 0
  %3210 = vmatpush1.bf16.msra.mxu0 0
  %3211 = vmatprep.subr.bf16.mxu0 0
  %3212 = vmatpush1.bf16.msra.mxu0 0
  %3213 = vmatprep.subr.bf16.mxu0 0
  %3214 = vmatpush1.bf16.msra.mxu0 0
  %3215 = vmatprep.subr.bf16.mxu0 0
  %3216 = vmatpush1.bf16.msra.mxu0 0
  %3217 = vmatprep.subr.bf16.mxu0 0
  %3218 = vmatpush1.bf16.msra.mxu0 0
  %3219 = vmatprep.subr.bf16.mxu0 0
  %3220 = vmatpush1.bf16.msra.mxu0 0
  %3221 = vmatprep.subr.bf16.mxu0 0
  %3222 = vmatpush1.bf16.msra.mxu0 0
  %3223 = vmatprep.mubr.bf16.mxu0 0
  %3224 = vmatmul.mubr.bf16.gmra.mrb[0].mxu0 %v3165
  %v3225 = vpop.f32.mrb[0].mxu0
  %v3226 = vadd.f32 0.0, %v3225
  %v3227 = vpop.f32.mrb[0].mxu0
  %v3228 = vpop.f32.mrb[0].mxu0
  %v3229 = vadd.f32 0.0, %v3228
  %v3230 = vpop.f32.mrb[0].mxu0
  %3231 = vmatprep.mubr.bf16.mxu0 0
  %3232 = vmatmul.mubr.bf16.gmra.mrb[0].mxu0 %v3168
  %v3233 = vpop.f32.mrb[0].mxu0
  %v3234 = vadd.f32 0.0, %v3233
  %v3235 = vpop.f32.mrb[0].mxu0
  %v3236 = vpop.f32.mrb[0].mxu0
  %v3237 = vadd.f32 0.0, %v3236
  %v3238 = vpop.f32.mrb[0].mxu0
  %3239 = vmatprep.mubr.bf16.mxu0 0
  %3240 = vmatmul.mubr.bf16.gmra.mrb[0].mxu0 %v3171
  %v3241 = vpop.f32.mrb[0].mxu0
  %v3242 = vadd.f32 0.0, %v3241
  %v3243 = vpop.f32.mrb[0].mxu0
  %v3244 = vpop.f32.mrb[0].mxu0
  %v3245 = vadd.f32 0.0, %v3244
  %v3246 = vpop.f32.mrb[0].mxu0
  %3247 = vmatprep.mubr.bf16.mxu0 0
  %3248 = vmatmul.mubr.bf16.gmra.mrb[0].mxu0 %v3174
  %v3249 = vpop.f32.mrb[0].mxu0
  %v3250 = vadd.f32 0.0, %v3249
  %v3251 = vpop.f32.mrb[0].mxu0
  %v3252 = vpop.f32.mrb[0].mxu0
  %v3253 = vadd.f32 0.0, %v3252
  %v3254 = vpop.f32.mrb[0].mxu0
  %3255 = vmatprep.mubr.bf16.mxu0 0
  %3256 = vmatmul.mubr.bf16.gmra.mrb[0].mxu0 %v3177
  %v3257 = vpop.f32.mrb[0].mxu0
  %v3258 = vadd.f32 0.0, %v3257
  %v3259 = vpop.f32.mrb[0].mxu0
  %v3260 = vpop.f32.mrb[0].mxu0
  %v3261 = vadd.f32 0.0, %v3260
  %v3262 = vpop.f32.mrb[0].mxu0
  %3263 = vmatprep.mubr.bf16.mxu0 0
  %3264 = vmatmul.mubr.bf16.gmra.mrb[0].mxu0 %v3180
  %v3265 = vpop.f32.mrb[0].mxu0
  %v3266 = vadd.f32 0.0, %v3265
  %v3267 = vpop.f32.mrb[0].mxu0
  %v3268 = vpop.f32.mrb[0].mxu0
  %v3269 = vadd.f32 0.0, %v3268
  %v3270 = vpop.f32.mrb[0].mxu0
  %3271 = vmatprep.mubr.bf16.mxu0 0
  %3272 = vmatmul.mubr.bf16.gmra.mrb[0].mxu0 %v3183
  %v3273 = vpop.f32.mrb[0].mxu0
  %v3274 = vadd.f32 0.0, %v3273
  %v3275 = vpop.f32.mrb[0].mxu0
  %v3276 = vpop.f32.mrb[0].mxu0
  %v3277 = vadd.f32 0.0, %v3276
  %v3278 = vpop.f32.mrb[0].mxu0
  %3279 = vmatprep.mubr.bf16.mxu0 0
  %3280 = vmatmul.mubr.bf16.gmra.mrb[0].mxu0 %v3186
  %v3281 = vpop.f32.mrb[0].mxu0
  %v3282 = vadd.f32 0.0, %v3281
  %v3283 = vpop.f32.mrb[0].mxu0
  %v3284 = vpop.f32.mrb[0].mxu0
  %v3285 = vadd.f32 0.0, %v3284
  %v3286 = vpop.f32.mrb[0].mxu0
  %3287 = vdwg.mxu0
  %v3288 = vadd.f32 %v3010, %v3226
  %v3289 = vadd.f32 %v3011, %v3229
  %v3290 = vadd.f32 %v3012, %v3234
  %v3291 = vadd.f32 %v3013, %v3237
  %v3292 = vadd.f32 %v3014, %v3242
  %v3293 = vadd.f32 %v3015, %v3245
  %v3294 = vadd.f32 %v3016, %v3250
  %v3295 = vadd.f32 %v3017, %v3253
  %v3296 = vadd.f32 %v3018, %v3258
  %v3297 = vadd.f32 %v3019, %v3261
  %v3298 = vadd.f32 %v3020, %v3266
  %v3299 = vadd.f32 %v3021, %v3269
  %v3300 = vadd.f32 %v3022, %v3274
  %v3301 = vadd.f32 %v3023, %v3277
  %v3302 = vadd.f32 %v3024, %v3282
  %v3303 = vadd.f32 %v3025, %v3285
  %vm3304 = vcmask 64512
  %3305 = vst.msk [vmem:[%s2] sm:$0xff] %vm3304, %v3288
  %3306 = vst.msk [vmem:[%s2 + $0x8] sm:$0xff] %vm3304, %v3289
  %3307 = vst.msk [vmem:[%s2 + $0x10] sm:$0xff] %vm3304, %v3290
  %3308 = vst.msk [vmem:[%s2 + $0x18] sm:$0xff] %vm3304, %v3291
  %3309 = vst.msk [vmem:[%s2 + $0x20] sm:$0xff] %vm3304, %v3292
  %3310 = vst.msk [vmem:[%s2 + $0x28] sm:$0xff] %vm3304, %v3293
  %3311 = vst.msk [vmem:[%s2 + $0x30] sm:$0xff] %vm3304, %v3294
  %3312 = vst.msk [vmem:[%s2 + $0x38] sm:$0xff] %vm3304, %v3295
  %3313 = vst.msk [vmem:[%s2 + $0x40] sm:$0xff] %vm3304, %v3296
  %3314 = vst.msk [vmem:[%s2 + $0x48] sm:$0xff] %vm3304, %v3297
  %3315 = vst.msk [vmem:[%s2 + $0x50] sm:$0xff] %vm3304, %v3298
  %3316 = vst.msk [vmem:[%s2 + $0x58] sm:$0xff] %vm3304, %v3299
  %3317 = vst.msk [vmem:[%s2 + $0x60] sm:$0xff] %vm3304, %v3300
  %3318 = vst.msk [vmem:[%s2 + $0x68] sm:$0xff] %vm3304, %v3301
  %3319 = vst.msk [vmem:[%s2 + $0x70] sm:$0xff] %vm3304, %v3302
  %3320 = vst.msk [vmem:[%s2 + $0x78] sm:$0xff] %vm3304, %v3303
  %v3321 = vsel %vm3304, %v3288, 0.0
  %v3322 = vsel %vm3304, %v3289, 0.0
  %v3323 = vadd.f32 %v3321, %v3322
  %v3324 = vsel %vm3304, %v3290, 0.0
  %v3325 = vadd.f32 %v3323, %v3324
  %v3326 = vsel %vm3304, %v3291, 0.0
  %v3327 = vadd.f32 %v3325, %v3326
  %v3328 = vsel %vm3304, %v3292, 0.0
  %v3329 = vadd.f32 %v3327, %v3328
  %v3330 = vsel %vm3304, %v3293, 0.0
  %v3331 = vadd.f32 %v3329, %v3330
  %v3332 = vsel %vm3304, %v3294, 0.0
  %v3333 = vadd.f32 %v3331, %v3332
  %v3334 = vsel %vm3304, %v3295, 0.0
  %v3335 = vadd.f32 %v3333, %v3334
  %v3336 = vsel %vm3304, %v3296, 0.0
  %v3337 = vadd.f32 %v3335, %v3336
  %v3338 = vsel %vm3304, %v3297, 0.0
  %v3339 = vadd.f32 %v3337, %v3338
  %v3340 = vsel %vm3304, %v3298, 0.0
  %v3341 = vadd.f32 %v3339, %v3340
  %v3342 = vsel %vm3304, %v3299, 0.0
  %v3343 = vadd.f32 %v3341, %v3342
  %v3344 = vsel %vm3304, %v3300, 0.0
  %v3345 = vadd.f32 %v3343, %v3344
  %v3346 = vsel %vm3304, %v3301, 0.0
  %v3347 = vadd.f32 %v3345, %v3346
  %v3348 = vsel %vm3304, %v3302, 0.0
  %v3349 = vadd.f32 %v3347, %v3348
  %v3350 = vsel %vm3304, %v3303, 0.0
  %v3351 = vadd.f32 %v3349, %v3350
  %v3352 = vrot.slane %v3351, 4
  %v3353 = vadd.f32 %v3351, %v3352
  %v3354 = vrot.slane %v3353, 2
  %v3355 = vadd.f32 %v3353, %v3354
  %v3356 = vrot.slane %v3355, 1
  %v3357 = vadd.f32 %v3355, %v3356
  %vm3358 = vcmask 57344
  %3359 = vst.msk [vmem:[%s3] sm:$0x1] %vm3358, %v3357
  %v3360 = vmul.f32 %v3288, %v3288
  %v3361 = vmul.f32 %v3289, %v3289
  %v3362 = vmul.f32 %v3290, %v3290
  %v3363 = vmul.f32 %v3291, %v3291
  %v3364 = vmul.f32 %v3292, %v3292
  %v3365 = vmul.f32 %v3293, %v3293
  %v3366 = vmul.f32 %v3294, %v3294
  %v3367 = vmul.f32 %v3295, %v3295
  %v3368 = vmul.f32 %v3296, %v3296
  %v3369 = vmul.f32 %v3297, %v3297
  %v3370 = vmul.f32 %v3298, %v3298
  %v3371 = vmul.f32 %v3299, %v3299
  %v3372 = vmul.f32 %v3300, %v3300
  %v3373 = vmul.f32 %v3301, %v3301
  %v3374 = vmul.f32 %v3302, %v3302
  %v3375 = vmul.f32 %v3303, %v3303
  %v3376 = vsel %vm3304, %v3360, 0.0
  %v3377 = vsel %vm3304, %v3361, 0.0
  %v3378 = vadd.f32 %v3376, %v3377
  %v3379 = vsel %vm3304, %v3362, 0.0
  %v3380 = vadd.f32 %v3378, %v3379
  %v3381 = vsel %vm3304, %v3363, 0.0
  %v3382 = vadd.f32 %v3380, %v3381
  %v3383 = vsel %vm3304, %v3364, 0.0
  %v3384 = vadd.f32 %v3382, %v3383
  %v3385 = vsel %vm3304, %v3365, 0.0
  %v3386 = vadd.f32 %v3384, %v3385
  %v3387 = vsel %vm3304, %v3366, 0.0
  %v3388 = vadd.f32 %v3386, %v3387
  %v3389 = vsel %vm3304, %v3367, 0.0
  %v3390 = vadd.f32 %v3388, %v3389
  %v3391 = vsel %vm3304, %v3368, 0.0
  %v3392 = vadd.f32 %v3390, %v3391
  %v3393 = vsel %vm3304, %v3369, 0.0
  %v3394 = vadd.f32 %v3392, %v3393
  %v3395 = vsel %vm3304, %v3370, 0.0
  %v3396 = vadd.f32 %v3394, %v3395
  %v3397 = vsel %vm3304, %v3371, 0.0
  %v3398 = vadd.f32 %v3396, %v3397
  %v3399 = vsel %vm3304, %v3372, 0.0
  %v3400 = vadd.f32 %v3398, %v3399
  %v3401 = vsel %vm3304, %v3373, 0.0
  %v3402 = vadd.f32 %v3400, %v3401
  %v3403 = vsel %vm3304, %v3374, 0.0
  %v3404 = vadd.f32 %v3402, %v3403
  %v3405 = vsel %vm3304, %v3375, 0.0
  %v3406 = vadd.f32 %v3404, %v3405
  %v3407 = vrot.slane %v3406, 4
  %v3408 = vadd.f32 %v3406, %v3407
  %v3409 = vrot.slane %v3408, 2
  %v3410 = vadd.f32 %v3408, %v3409
  %v3411 = vrot.slane %v3410, 1
  %v3412 = vadd.f32 %v3410, %v3411
  %3413 = vst.msk [vmem:[%s3 + $0x1] sm:$0x1] %vm3358, %v3412
  // Predicated region
  $region10: #{down_pallas.2} parent=0 // pred_check
    _
  $region11: #{down_pallas.2} parent=0 // pred_check_branch
    %3415 = sbr.rel (0) target = $region13
  $region12: #{down_pallas.2} parent=0 // pred_region
    _
  $region13: #{down_pallas.2} parent=0 // pred_fallthru
    _
  // Predicated region
  $region14: #{down_pallas.2} parent=0 // pred_check
    _
  $region15: #{down_pallas.2} parent=0 // pred_check_branch
    %3417 = sbr.rel (0) target = $region17
  $region16: #{down_pallas.2} parent=0 // pred_region
    _
  $region17: #{down_pallas.2} parent=0 // pred_fallthru
    _
  // Predicated region
  $region18: #{down_pallas.2} parent=0 // pred_check
    _
  $region19: #{down_pallas.2} parent=0 // pred_check_branch
    %3419 = sbr.rel (0) target = $region21
  $region20: #{down_pallas.2} parent=0 // pred_region
    _
  $region21: #{down_pallas.2} parent=0 // pred_fallthru
    _
  // Predicated region
  $region22: #{down_pallas.2} parent=0 // pred_check
    _
  $region23: #{down_pallas.2} parent=0 // pred_check_branch
    %3421 = sbr.rel (0) target = $region25
  $region24: #{down_pallas.2} parent=0 // pred_region
    _
  $region25: #{down_pallas.2} parent=0 // pred_fallthru
    _

</llo_original>
